<compile_context>
chip_gen: v6e
topology: v6e:2x2x1
jax: 0.10.0
libtpu: 0.0.40
codegen_flags: <defaults>
</compile_context>

<pallas_src>
import math

import jax
import jax.numpy as jnp
import numpy as np
from jax.experimental import pallas as pl
from jax.experimental.pallas import tpu as pltpu

# Make the out-of-kernel folding and the pure-JAX reference use true f32 matmuls.
jax.config.update("jax_default_matmul_precision", "highest")

OBS_PAD = 128  # lane-dense width for the 2-wide observation classifier output


def _round_up(n, m):
    return ((n + m - 1) // m) * m


def _pad_cols(a, n_cols):
    pad = n_cols - a.shape[1]
    if pad == 0:
        return a
    return jnp.pad(a, ((0, 0), (0, pad)))


# ----------------------------- kernel ---------------------------------------
def clinical_kernel(x_ref,
                    w_eff, b_eff,      # folded upsample            (K,1024), (1,1024)
                    wobs, bobs,        # folded obs classifier      (K,128),  (1,128)   (lane-padded)
                    wa, ba,            # folded bottleneck Linear1  (K,512),  (1,512)
                    wb, bb,            # bottleneck Linear2         (512,256),(1,256)
                    wrep, brep,        # rep classifier (padded)    (256,Np), (1,Np)
                    out_obs_ref, out_rep_ref, obs_ref, rep_ref):
    x = x_ref[...]                     # (TB, K), K == len_clinical (tiny, e.g. 2)
    K = x.shape[1]

    def vpu_affine(w_r, b_r):
        # K is tiny: broadcast FMAs on the VPU instead of a K-padded MXU matmul.
        acc = x[:, 0:1] * w_r[0:1, :]
        for k in range(1, K):
            acc = acc + x[:, k:k + 1] * w_r[k:k + 1, :]
        return acc + b_r[...]

    observation = vpu_affine(w_eff, b_eff)                     # (TB, 1024)
    obs_ref[...] = observation

    # classifier_observation folded onto x (cols >= 2 are zero padding)
    out_obs_ref[...] = vpu_affine(wobs, bobs)                  # (TB, 128)

    # bottleneck: (folded Linear 1024->512) -> ReLU -> Linear(512,256)
    t = jnp.maximum(vpu_affine(wa, ba), 0.0)                   # (TB, 512)
    representation = (jnp.dot(t, wb[...],
                              preferred_element_type=jnp.float32) + bb[...])
    rep_ref[...] = representation                              # (TB, 256)

    # classifier_representation (num_classes padded to a multiple of 128)
    out_rep_ref[...] = (jnp.dot(representation, wrep[...],
                                preferred_element_type=jnp.float32) + brep[...])


# ----------------------------- wrapper ---------------------------------------
def fold_params(params):
    """Collapse the activation-free upsample stack and fold the two 1024-wide
    consumers (obs classifier, bottleneck Linear1) onto the raw input."""
    hp = jax.lax.Precision.HIGHEST
    w_eff = params["w1"]
    b_eff = params["b1"]
    for wk, bk in (("w2", "b2"), ("w3", "b3"), ("w4", "b4")):
        b_eff = jnp.dot(b_eff, params[wk], precision=hp) + params[bk]
        w_eff = jnp.dot(w_eff, params[wk], precision=hp)
    return {
        "w_eff": w_eff,
        "b_eff": b_eff,
        "wobs": jnp.dot(w_eff, params["wobs"], precision=hp),
        "bobs": jnp.dot(b_eff, params["wobs"], precision=hp) + params["bobs"],
        "wa": jnp.dot(w_eff, params["wa"], precision=hp),
        "ba": jnp.dot(b_eff, params["wa"], precision=hp) + params["ba"],
        "wb": params["wb"],
        "bb": params["bb"],
        "wrep": params["wrep"],
        "brep": params["brep"],
    }


def clinical_forward(x, params, num_classes):
    """x: (B, len_clinical) float32. params: dict of pre-transposed weights/biases."""
    B, K = x.shape
    folded = fold_params(params)

    # lane-dense padding for the two classifier outputs
    n_pad = _round_up(max(num_classes, 1), 128)
    wobs_p = _pad_cols(folded["wobs"], OBS_PAD)
    bobs_p = _pad_cols(folded["bobs"], OBS_PAD)
    wrep_p = _pad_cols(folded["wrep"], n_pad)
    brep_p = _pad_cols(folded["brep"], n_pad)

    # batch tiling: TB rows per grid step, weights stay resident across steps
    TB = min(128, _round_up(B, 8))
    B_pad = _round_up(B, TB)
    x_p = jnp.pad(x, ((0, B_pad - B), (0, 0))) if B_pad != B else x
    grid = (B_pad // TB,)

    weights = (folded["w_eff"], folded["b_eff"], wobs_p, bobs_p,
               folded["wa"], folded["ba"], folded["wb"], folded["bb"],
               wrep_p, brep_p)

    def full_spec(a):
        return pl.BlockSpec(a.shape, lambda i: (0,) * a.ndim)

    def batch_spec(ncols):
        return pl.BlockSpec((TB, ncols), lambda i: (i, 0))

    in_specs = [batch_spec(K)] + [full_spec(w) for w in weights]
    out_specs = (batch_spec(OBS_PAD), batch_spec(n_pad),
                 batch_spec(1024), batch_spec(256))
    out_shape = (
        jax.ShapeDtypeStruct((B_pad, OBS_PAD), jnp.float32),   # output_observation (padded)
        jax.ShapeDtypeStruct((B_pad, n_pad), jnp.float32),     # output_representation (padded)
        jax.ShapeDtypeStruct((B_pad, 1024), jnp.float32),      # observation
        jax.ShapeDtypeStruct((B_pad, 256), jnp.float32),       # representation
    )

    out_obs_p, out_rep_p, obs_p, rep_p = pl.pallas_call(
        clinical_kernel,
        grid=grid,
        in_specs=in_specs,
        out_specs=out_specs,
        out_shape=out_shape,
        compiler_params=pltpu.CompilerParams(
            dimension_semantics=("parallel",)),
    )(x_p, *weights)

    return (out_obs_p[:B, :2],
            out_rep_p[:B, :num_classes],
            obs_p[:B],
            rep_p[:B])


# ----------------------------- init (matches PyTorch) ------------------------
def _kaiming_linear(key, in_f, out_f):
    """kaiming_normal_(a=0, mode='fan_out') on a PyTorch (out,in) weight, bias=0.
    Returned pre-transposed as (in, out)."""
    std = math.sqrt(2.0 / out_f)
    w = jax.random.normal(key, (out_f, in_f), jnp.float32) * std
    return w.T, jnp.zeros((1, out_f), jnp.float32)


def _default_linear(key, in_f, out_f):
    """PyTorch default nn.Linear init (uniform +-1/sqrt(in)), pre-transposed."""
    kw, kb = jax.random.split(key)
    bound = 1.0 / math.sqrt(in_f)
    w = jax.random.uniform(kw, (out_f, in_f), jnp.float32, -bound, bound)
    b = jax.random.uniform(kb, (1, out_f), jnp.float32, -bound, bound)
    return w.T, b


def _classifier_linear(key, in_f, out_f):
    """weights_init_classifier: normal(std=0.001), bias=0; pre-transposed."""
    w = jax.random.normal(key, (out_f, in_f), jnp.float32) * 0.001
    return w.T, jnp.zeros((1, out_f), jnp.float32)


def make_params(key, len_clinical, num_classes):
    keys = jax.random.split(key, 8)
    p = {}
    p["w1"], p["b1"] = _kaiming_linear(keys[0], len_clinical, 128)
    p["w2"], p["b2"] = _kaiming_linear(keys[1], 128, 256)
    p["w3"], p["b3"] = _kaiming_linear(keys[2], 256, 512)
    p["w4"], p["b4"] = _kaiming_linear(keys[3], 512, 1024)
    p["wobs"], p["bobs"] = _classifier_linear(keys[4], 1024, 2)
    p["wa"], p["ba"] = _default_linear(keys[5], 1024, 512)
    p["wb"], p["bb"] = _default_linear(keys[6], 512, 256)
    p["wrep"], p["brep"] = _default_linear(keys[7], 256, num_classes)
    return p


def reference_forward(x, p):
    """Pure-JAX reference reproducing the PyTorch forward (un-fused f32 chain)."""
    obs = x @ p["w1"] + p["b1"]
    obs = obs @ p["w2"] + p["b2"]
    obs = obs @ p["w3"] + p["b3"]
    obs = obs @ p["w4"] + p["b4"]
    out_obs = obs @ p["wobs"] + p["bobs"]
    t = jnp.maximum(obs @ p["wa"] + p["ba"], 0.0)
    rep = t @ p["wb"] + p["bb"]
    out_rep = rep @ p["wrep"] + p["brep"]
    return out_obs, out_rep, obs, rep


if __name__ == "__main__":
    B = 8
    LEN_CLINICAL = 2
    NUM_CLASSES = 16  # small, stands in for the default 1000

    key = jax.random.PRNGKey(0)
    k_x, k_p = jax.random.split(key)
    x = jax.random.normal(k_x, (B, LEN_CLINICAL), jnp.float32)
    params = make_params(k_p, LEN_CLINICAL, NUM_CLASSES)

    outs = clinical_forward(x, params, NUM_CLASSES)
    outs = jax.block_until_ready(outs)

    refs = reference_forward(x, params)
    for o, r in zip(outs, refs):
        np.testing.assert_allclose(np.asarray(o), np.asarray(r), rtol=1e-4, atol=1e-4)

    print("KERNEL_OK")
</pallas_src>

<mosaic_0001>
module attributes {stable_mosaic.version = 11 : i64} {
  func.func @clinical_kernel(%arg0: i32, %arg1: memref<8x2xf32, #tpu.memory_space<vmem>>, %arg2: memref<2x1024xf32, #tpu.memory_space<vmem>>, %arg3: memref<1x1024xf32, #tpu.memory_space<vmem>>, %arg4: memref<2x128xf32, #tpu.memory_space<vmem>>, %arg5: memref<1x128xf32, #tpu.memory_space<vmem>>, %arg6: memref<2x512xf32, #tpu.memory_space<vmem>>, %arg7: memref<1x512xf32, #tpu.memory_space<vmem>>, %arg8: memref<512x256xf32, #tpu.memory_space<vmem>>, %arg9: memref<1x256xf32, #tpu.memory_space<vmem>>, %arg10: memref<256x128xf32, #tpu.memory_space<vmem>>, %arg11: memref<1x128xf32, #tpu.memory_space<vmem>>, %arg12: memref<8x128xf32, #tpu.memory_space<vmem>>, %arg13: memref<8x128xf32, #tpu.memory_space<vmem>>, %arg14: memref<8x1024xf32, #tpu.memory_space<vmem>>, %arg15: memref<8x256xf32, #tpu.memory_space<vmem>>) attributes {dimension_semantics = [#tpu.dimension_semantics<parallel>], iteration_bounds = array<i64: 1>, scalar_prefetch = 0 : i64, scratch_operands = 0 : i64, tpu.core_type = #tpu.core_type<tc>, window_params = [{transform_indices = @transform_0, window_bounds = array<i64: 8, 2>}, {pipeline_mode = #tpu.pipeline_mode<synchronous>, transform_indices = @transform_1, window_bounds = array<i64: 2, 1024>}, {pipeline_mode = #tpu.pipeline_mode<synchronous>, transform_indices = @transform_2, window_bounds = array<i64: 1, 1024>}, {pipeline_mode = #tpu.pipeline_mode<synchronous>, transform_indices = @transform_3, window_bounds = array<i64: 2, 128>}, {pipeline_mode = #tpu.pipeline_mode<synchronous>, transform_indices = @transform_4, window_bounds = array<i64: 1, 128>}, {pipeline_mode = #tpu.pipeline_mode<synchronous>, transform_indices = @transform_5, window_bounds = array<i64: 2, 512>}, {pipeline_mode = #tpu.pipeline_mode<synchronous>, transform_indices = @transform_6, window_bounds = array<i64: 1, 512>}, {pipeline_mode = #tpu.pipeline_mode<synchronous>, transform_indices = @transform_7, window_bounds = array<i64: 512, 256>}, {pipeline_mode = #tpu.pipeline_mode<synchronous>, transform_indices = @transform_8, window_bounds = array<i64: 1, 256>}, {pipeline_mode = #tpu.pipeline_mode<synchronous>, transform_indices = @transform_9, window_bounds = array<i64: 256, 128>}, {pipeline_mode = #tpu.pipeline_mode<synchronous>, transform_indices = @transform_10, window_bounds = array<i64: 1, 128>}, {transform_indices = @transform_11, window_bounds = array<i64: 8, 128>}, {transform_indices = @transform_12, window_bounds = array<i64: 8, 128>}, {transform_indices = @transform_13, window_bounds = array<i64: 8, 1024>}, {transform_indices = @transform_14, window_bounds = array<i64: 8, 256>}]} {
    %c0 = arith.constant 0 : index
    %c0_0 = arith.constant 0 : index
    %0 = vector.load %arg1[%c0, %c0_0] : memref<8x2xf32, #tpu.memory_space<vmem>>, vector<8x2xf32>
    %1 = vector.extract_strided_slice %0 {offsets = [0, 0], sizes = [8, 1], strides = [1, 1]} : vector<8x2xf32> to vector<8x1xf32>
    %c0_1 = arith.constant 0 : index
    %c0_2 = arith.constant 0 : index
    %2 = vector.load %arg2[%c0_1, %c0_2] : memref<2x1024xf32, #tpu.memory_space<vmem>>, vector<1x1024xf32>
    %3 = vector.broadcast %1 : vector<8x1xf32> to vector<8x1024xf32>
    %4 = vector.broadcast %2 : vector<1x1024xf32> to vector<8x1024xf32>
    %5 = arith.mulf %3, %4 : vector<8x1024xf32>
    %6 = vector.extract_strided_slice %0 {offsets = [0, 1], sizes = [8, 1], strides = [1, 1]} : vector<8x2xf32> to vector<8x1xf32>
    %c1 = arith.constant 1 : index
    %c0_3 = arith.constant 0 : index
    %7 = vector.load %arg2[%c1, %c0_3] : memref<2x1024xf32, #tpu.memory_space<vmem>>, vector<1x1024xf32>
    %8 = vector.broadcast %6 : vector<8x1xf32> to vector<8x1024xf32>
    %9 = vector.broadcast %7 : vector<1x1024xf32> to vector<8x1024xf32>
    %10 = arith.mulf %8, %9 : vector<8x1024xf32>
    %11 = arith.addf %5, %10 : vector<8x1024xf32>
    %c0_4 = arith.constant 0 : index
    %c0_5 = arith.constant 0 : index
    %12 = vector.load %arg3[%c0_4, %c0_5] : memref<1x1024xf32, #tpu.memory_space<vmem>>, vector<1x1024xf32>
    %13 = vector.broadcast %12 : vector<1x1024xf32> to vector<8x1024xf32>
    %14 = arith.addf %11, %13 : vector<8x1024xf32>
    %c0_6 = arith.constant 0 : index
    %c0_7 = arith.constant 0 : index
    %15 = vector.load %arg14[%c0_6, %c0_7] : memref<8x1024xf32, #tpu.memory_space<vmem>>, vector<8x1024xf32>
    tpu.vector_store %arg14[%c0_6, %c0_7], %14 {strides = array<i32>} : memref<8x1024xf32, #tpu.memory_space<vmem>>, vector<8x1024xf32>,
    %16 = vector.extract_strided_slice %0 {offsets = [0, 0], sizes = [8, 1], strides = [1, 1]} : vector<8x2xf32> to vector<8x1xf32>
    %c0_8 = arith.constant 0 : index
    %c0_9 = arith.constant 0 : index
    %17 = vector.load %arg4[%c0_8, %c0_9] : memref<2x128xf32, #tpu.memory_space<vmem>>, vector<1x128xf32>
    %18 = vector.broadcast %16 : vector<8x1xf32> to vector<8x128xf32>
    %19 = vector.broadcast %17 : vector<1x128xf32> to vector<8x128xf32>
    %20 = arith.mulf %18, %19 : vector<8x128xf32>
    %21 = vector.extract_strided_slice %0 {offsets = [0, 1], sizes = [8, 1], strides = [1, 1]} : vector<8x2xf32> to vector<8x1xf32>
    %c1_10 = arith.constant 1 : index
    %c0_11 = arith.constant 0 : index
    %22 = vector.load %arg4[%c1_10, %c0_11] : memref<2x128xf32, #tpu.memory_space<vmem>>, vector<1x128xf32>
    %23 = vector.broadcast %21 : vector<8x1xf32> to vector<8x128xf32>
    %24 = vector.broadcast %22 : vector<1x128xf32> to vector<8x128xf32>
    %25 = arith.mulf %23, %24 : vector<8x128xf32>
    %26 = arith.addf %20, %25 : vector<8x128xf32>
    %c0_12 = arith.constant 0 : index
    %c0_13 = arith.constant 0 : index
    %27 = vector.load %arg5[%c0_12, %c0_13] : memref<1x128xf32, #tpu.memory_space<vmem>>, vector<1x128xf32>
    %28 = vector.broadcast %27 : vector<1x128xf32> to vector<8x128xf32>
    %29 = arith.addf %26, %28 : vector<8x128xf32>
    %c0_14 = arith.constant 0 : index
    %c0_15 = arith.constant 0 : index
    %30 = vector.load %arg12[%c0_14, %c0_15] : memref<8x128xf32, #tpu.memory_space<vmem>>, vector<8x128xf32>
    tpu.vector_store %arg12[%c0_14, %c0_15], %29 {strides = array<i32>} : memref<8x128xf32, #tpu.memory_space<vmem>>, vector<8x128xf32>,
    %31 = vector.extract_strided_slice %0 {offsets = [0, 0], sizes = [8, 1], strides = [1, 1]} : vector<8x2xf32> to vector<8x1xf32>
    %c0_16 = arith.constant 0 : index
    %c0_17 = arith.constant 0 : index
    %32 = vector.load %arg6[%c0_16, %c0_17] : memref<2x512xf32, #tpu.memory_space<vmem>>, vector<1x512xf32>
    %33 = vector.broadcast %31 : vector<8x1xf32> to vector<8x512xf32>
    %34 = vector.broadcast %32 : vector<1x512xf32> to vector<8x512xf32>
    %35 = arith.mulf %33, %34 : vector<8x512xf32>
    %36 = vector.extract_strided_slice %0 {offsets = [0, 1], sizes = [8, 1], strides = [1, 1]} : vector<8x2xf32> to vector<8x1xf32>
    %c1_18 = arith.constant 1 : index
    %c0_19 = arith.constant 0 : index
    %37 = vector.load %arg6[%c1_18, %c0_19] : memref<2x512xf32, #tpu.memory_space<vmem>>, vector<1x512xf32>
    %38 = vector.broadcast %36 : vector<8x1xf32> to vector<8x512xf32>
    %39 = vector.broadcast %37 : vector<1x512xf32> to vector<8x512xf32>
    %40 = arith.mulf %38, %39 : vector<8x512xf32>
    %41 = arith.addf %35, %40 : vector<8x512xf32>
    %c0_20 = arith.constant 0 : index
    %c0_21 = arith.constant 0 : index
    %42 = vector.load %arg7[%c0_20, %c0_21] : memref<1x512xf32, #tpu.memory_space<vmem>>, vector<1x512xf32>
    %43 = vector.broadcast %42 : vector<1x512xf32> to vector<8x512xf32>
    %44 = arith.addf %41, %43 : vector<8x512xf32>
    %cst = arith.constant 0.000000e+00 : f32
    %45 = vector.broadcast %cst : f32 to vector<8x512xf32>
    %46 = arith.maximumf %44, %45 : vector<8x512xf32>
    %c0_22 = arith.constant 0 : index
    %c0_23 = arith.constant 0 : index
    %47 = vector.load %arg8[%c0_22, %c0_23] : memref<512x256xf32, #tpu.memory_space<vmem>>, vector<512x256xf32>
    %cst_24 = arith.constant dense<0.000000e+00> : vector<8x256xf32>
    %48 = tpu.matmul %46, %47, %cst_24 {dimension_numbers = #tpu.dot_dimension_numbers<[1], [0], [0], [1], [0, 0, 1, 1], [], []>, precision = #tpu.contract_precision<fp32>} : vector<8x512xf32>, vector<512x256xf32>, vector<8x256xf32> -> vector<8x256xf32>
    %c0_25 = arith.constant 0 : index
    %c0_26 = arith.constant 0 : index
    %49 = vector.load %arg9[%c0_25, %c0_26] : memref<1x256xf32, #tpu.memory_space<vmem>>, vector<1x256xf32>
    %50 = vector.broadcast %49 : vector<1x256xf32> to vector<8x256xf32>
    %51 = arith.addf %48, %50 : vector<8x256xf32>
    %c0_27 = arith.constant 0 : index
    %c0_28 = arith.constant 0 : index
    %52 = vector.load %arg15[%c0_27, %c0_28] : memref<8x256xf32, #tpu.memory_space<vmem>>, vector<8x256xf32>
    tpu.vector_store %arg15[%c0_27, %c0_28], %51 {strides = array<i32>} : memref<8x256xf32, #tpu.memory_space<vmem>>, vector<8x256xf32>,
    %c0_29 = arith.constant 0 : index
    %c0_30 = arith.constant 0 : index
    %53 = vector.load %arg10[%c0_29, %c0_30] : memref<256x128xf32, #tpu.memory_space<vmem>>, vector<256x128xf32>
    %cst_31 = arith.constant dense<0.000000e+00> : vector<8x128xf32>
    %54 = tpu.matmul %51, %53, %cst_31 {dimension_numbers = #tpu.dot_dimension_numbers<[1], [0], [0], [1], [0, 0, 1, 1], [], []>, precision = #tpu.contract_precision<fp32>} : vector<8x256xf32>, vector<256x128xf32>, vector<8x128xf32> -> vector<8x128xf32>
    %c0_32 = arith.constant 0 : index
    %c0_33 = arith.constant 0 : index
    %55 = vector.load %arg11[%c0_32, %c0_33] : memref<1x128xf32, #tpu.memory_space<vmem>>, vector<1x128xf32>
    %56 = vector.broadcast %55 : vector<1x128xf32> to vector<8x128xf32>
    %57 = arith.addf %54, %56 : vector<8x128xf32>
    %c0_34 = arith.constant 0 : index
    %c0_35 = arith.constant 0 : index
    %58 = vector.load %arg13[%c0_34, %c0_35] : memref<8x128xf32, #tpu.memory_space<vmem>>, vector<8x128xf32>
    tpu.vector_store %arg13[%c0_34, %c0_35], %57 {strides = array<i32>} : memref<8x128xf32, #tpu.memory_space<vmem>>, vector<8x128xf32>,
    return
  }
  func.func @transform_0(%arg0: i32) -> (i32, i32) {
    %c0_i32 = arith.constant 0 : i32
    %c0_i32_0 = arith.constant 0 : i32
    return %arg0, %c0_i32 : i32, i32
  }
  func.func @transform_1(%arg0: i32) -> (i32, i32) {
    %c0_i32 = arith.constant 0 : i32
    %c0_i32_0 = arith.constant 0 : i32
    %c0_i32_1 = arith.constant 0 : i32
    return %c0_i32, %c0_i32_0 : i32, i32
  }
  func.func @transform_2(%arg0: i32) -> (i32, i32) {
    %c0_i32 = arith.constant 0 : i32
    %c0_i32_0 = arith.constant 0 : i32
    %c0_i32_1 = arith.constant 0 : i32
    return %c0_i32, %c0_i32_0 : i32, i32
  }
  func.func @transform_3(%arg0: i32) -> (i32, i32) {
    %c0_i32 = arith.constant 0 : i32
    %c0_i32_0 = arith.constant 0 : i32
    %c0_i32_1 = arith.constant 0 : i32
    return %c0_i32, %c0_i32_0 : i32, i32
  }
  func.func @transform_4(%arg0: i32) -> (i32, i32) {
    %c0_i32 = arith.constant 0 : i32
    %c0_i32_0 = arith.constant 0 : i32
    %c0_i32_1 = arith.constant 0 : i32
    return %c0_i32, %c0_i32_0 : i32, i32
  }
  func.func @transform_5(%arg0: i32) -> (i32, i32) {
    %c0_i32 = arith.constant 0 : i32
    %c0_i32_0 = arith.constant 0 : i32
    %c0_i32_1 = arith.constant 0 : i32
    return %c0_i32, %c0_i32_0 : i32, i32
  }
  func.func @transform_6(%arg0: i32) -> (i32, i32) {
    %c0_i32 = arith.constant 0 : i32
    %c0_i32_0 = arith.constant 0 : i32
    %c0_i32_1 = arith.constant 0 : i32
    return %c0_i32, %c0_i32_0 : i32, i32
  }
  func.func @transform_7(%arg0: i32) -> (i32, i32) {
    %c0_i32 = arith.constant 0 : i32
    %c0_i32_0 = arith.constant 0 : i32
    %c0_i32_1 = arith.constant 0 : i32
    return %c0_i32, %c0_i32_0 : i32, i32
  }
  func.func @transform_8(%arg0: i32) -> (i32, i32) {
    %c0_i32 = arith.constant 0 : i32
    %c0_i32_0 = arith.constant 0 : i32
    %c0_i32_1 = arith.constant 0 : i32
    return %c0_i32, %c0_i32_0 : i32, i32
  }
  func.func @transform_9(%arg0: i32) -> (i32, i32) {
    %c0_i32 = arith.constant 0 : i32
    %c0_i32_0 = arith.constant 0 : i32
    %c0_i32_1 = arith.constant 0 : i32
    return %c0_i32, %c0_i32_0 : i32, i32
  }
  func.func @transform_10(%arg0: i32) -> (i32, i32) {
    %c0_i32 = arith.constant 0 : i32
    %c0_i32_0 = arith.constant 0 : i32
    %c0_i32_1 = arith.constant 0 : i32
    return %c0_i32, %c0_i32_0 : i32, i32
  }
  func.func @transform_11(%arg0: i32) -> (i32, i32) {
    %c0_i32 = arith.constant 0 : i32
    %c0_i32_0 = arith.constant 0 : i32
    return %arg0, %c0_i32 : i32, i32
  }
  func.func @transform_12(%arg0: i32) -> (i32, i32) {
    %c0_i32 = arith.constant 0 : i32
    %c0_i32_0 = arith.constant 0 : i32
    return %arg0, %c0_i32 : i32, i32
  }
  func.func @transform_13(%arg0: i32) -> (i32, i32) {
    %c0_i32 = arith.constant 0 : i32
    %c0_i32_0 = arith.constant 0 : i32
    return %arg0, %c0_i32 : i32, i32
  }
  func.func @transform_14(%arg0: i32) -> (i32, i32) {
    %c0_i32 = arith.constant 0 : i32
    %c0_i32_0 = arith.constant 0 : i32
    return %arg0, %c0_i32 : i32, i32
  }
}

</mosaic_0001>

<llo_original>
// kernel: tpu_custom_call.1
$region0: #{tpu_custom_call.1}
  #allocation0 [shape = 'u32[]', space=smem, size = 0x4, offset = 0x4, fixed_abs, tag = 'smem constant byte address 0x4 - core index']
  #allocation1 [shape = 'u32[144,128]{1,0:T(1,128)}', space=vmem, size = 0x12000, scoped, tag = 'internal scratch']
  %s0 = inlined_call_operand.vmem [shape: f32[8,2], index: 0, kind: input, shape index: {}]
  %s1 = inlined_call_operand.hbm [shape: f32[2,1024], index: 1, kind: input, shape index: {}]
  %s2 = inlined_call_operand.vmem [shape: f32[1,1024], index: 2, kind: input, shape index: {}]
  %s3 = inlined_call_operand.hbm [shape: f32[2,128], index: 3, kind: input, shape index: {}]
  %s4 = inlined_call_operand.hbm [shape: f32[1,128], index: 4, kind: input, shape index: {}]
  %s5 = inlined_call_operand.vmem [shape: f32[2,512], index: 5, kind: input, shape index: {}]
  %s6 = inlined_call_operand.vmem [shape: f32[1,512], index: 6, kind: input, shape index: {}]
  %s7 = inlined_call_operand.hbm [shape: f32[512,256], index: 7, kind: input, shape index: {}]
  %s8 = inlined_call_operand.vmem [shape: f32[1,256], index: 8, kind: input, shape index: {}]
  %s9 = inlined_call_operand.hbm [shape: f32[256,128], index: 9, kind: input, shape index: {}]
  %s10 = inlined_call_operand.vmem [shape: f32[1,128], index: 10, kind: input, shape index: {}]
  %s11 = inlined_call_operand.hbm [shape: f32[8,128], index: 11, kind: output, shape index: {0}]
  %s12 = inlined_call_operand.hbm [shape: f32[8,128], index: 12, kind: output, shape index: {1}]
  %s13 = inlined_call_operand.hbm [shape: f32[8,1024], index: 13, kind: output, shape index: {2}]
  %s14 = inlined_call_operand.hbm [shape: f32[8,256], index: 14, kind: output, shape index: {3}]
  %15 = xla_tuple %s11, %s12, %s13, %s14
  %s16 = sld [smem:[#allocation0]]
  $region98: #{tpu_custom_call.1} parent=0
    _
  %s18 = ssub.s32 1, %s16
  %s19 = scalar_select 0, %s18, %s16
  $region1: #{tpu_custom_call.1} parent=0
    #allocation2 [shape = 'u8[8192]{0}', space=vmem, size = 0x2000, scoped, tag = 'input window, operand 1, single buffered']
    #allocation3 [shape = 's32[1]{0}', space=sflag, size = 0x4, scoped, tag = 'scoped memory for tpu_custom_call.1']
    #allocation4 [shape = 's32[1]{0}', space=sflag, size = 0x4, scoped, tag = 'scoped memory for tpu_custom_call.1']
    #allocation5 [shape = 'u8[1024]{0}', space=vmem, size = 0x400, scoped, tag = 'input window, operand 3, single buffered']
    #allocation6 [shape = 's32[1]{0}', space=sflag, size = 0x4, scoped, tag = 'scoped memory for tpu_custom_call.1']
    #allocation7 [shape = 'u8[512]{0}', space=vmem, size = 0x400, scoped, tag = 'input window, operand 4, single buffered']
    #allocation8 [shape = 'u8[524288]{0}', space=vmem, size = 0x80000, scoped, tag = 'input window, operand 7, single buffered']
    #allocation9 [shape = 's32[1]{0}', space=sflag, size = 0x4, scoped, tag = 'scoped memory for tpu_custom_call.1']
    #allocation10 [shape = 'u8[131072]{0}', space=vmem, size = 0x20000, scoped, tag = 'input window, operand 9, single buffered']
    #allocation11 [shape = 'u8[4096]{0}', space=vmem, size = 0x1000, scoped, tag = 'output window, operand 0, single buffered']
    #allocation12 [shape = 'u8[4096]{0}', space=vmem, size = 0x1000, scoped, tag = 'output window, operand 1, single buffered']
    #allocation13 [shape = 's32[1]{0}', space=sflag, size = 0x4, scoped, tag = 'scoped memory for tpu_custom_call.1']
    #allocation14 [shape = 'u8[32768]{0}', space=vmem, size = 0x8000, scoped, tag = 'output window, operand 2, single buffered']
    #allocation15 [shape = 'u8[8192]{0}', space=vmem, size = 0x2000, scoped, tag = 'output window, operand 3, single buffered']
    #allocation16 [shape = 's32[1]{0}', space=sflag, size = 0x4, scoped, tag = 'scoped memory for tpu_custom_call.1']
    %20 = vsyncpa [#allocation3], 0
    %21 = vsyncpa [#allocation6], 0
    %22 = vsyncpa [#allocation9], 0
    %23 = vsyncpa [#allocation4], 0
    %24 = vsyncpa [#allocation13], 0
    %25 = vsyncpa [#allocation16], 0
    // Predicated region
    $region2: #{tpu_custom_call.1} parent=1 // pred_check
      _
    $region3: #{tpu_custom_call.1} parent=1 // pred_check_branch
      %27 = sbr.rel (0) target = $region5
    $region4: #{tpu_custom_call.1} parent=1 // pred_region
      _
    $region5: #{tpu_custom_call.1} parent=1 // pred_fallthru
      _
    // Predicated region
    $region6: #{tpu_custom_call.1} parent=1 // pred_check
      _
    $region7: #{tpu_custom_call.1} parent=1 // pred_check_branch
      %29 = sbr.rel (0) target = $region9
    $region8: #{tpu_custom_call.1} parent=1 // pred_region
      %s31 = ssub.s32 256, 256
      %32 = vsyncadd [#allocation3], %s31
      %s34 = sshll.u32 [#allocation2], 4
      %s35 = int_to_ptr.vmem [resolvable:$true] %s34
      %37 = dma.hbm_to_vmem [thread:$0]  %s1, 256, %s35, [#allocation3]
    $region9: #{tpu_custom_call.1} parent=1 // pred_fallthru
      _
    // Predicated region
    $region10: #{tpu_custom_call.1} parent=1 // pred_check
      _
    $region11: #{tpu_custom_call.1} parent=1 // pred_check_branch
      %39 = sbr.rel (0) target = $region13
    $region12: #{tpu_custom_call.1} parent=1 // pred_region
      _
    $region13: #{tpu_custom_call.1} parent=1 // pred_fallthru
      _
    // Predicated region
    $region14: #{tpu_custom_call.1} parent=1 // pred_check
      _
    $region15: #{tpu_custom_call.1} parent=1 // pred_check_branch
      %41 = sbr.rel (0) target = $region17
    $region16: #{tpu_custom_call.1} parent=1 // pred_region
      %s43 = ssub.s32 32, 32
      %44 = vsyncadd [#allocation6], %s43
      %s46 = sshll.u32 [#allocation5], 4
      %s47 = int_to_ptr.vmem [resolvable:$true] %s46
      %49 = dma.hbm_to_vmem [thread:$0]  %s3, 32, %s47, [#allocation6]
    $region17: #{tpu_custom_call.1} parent=1 // pred_fallthru
      _
    // Predicated region
    $region18: #{tpu_custom_call.1} parent=1 // pred_check
      _
    $region19: #{tpu_custom_call.1} parent=1 // pred_check_branch
      %51 = sbr.rel (0) target = $region21
    $region20: #{tpu_custom_call.1} parent=1 // pred_region
      %s53 = ssub.s32 16, 16
      %54 = vsyncadd [#allocation6], %s53
      %s56 = sshll.u32 [#allocation7], 4
      %s57 = int_to_ptr.vmem [resolvable:$true] %s56
      %59 = dma.hbm_to_vmem [thread:$0]  %s4, 16, %s57, [#allocation6]
    $region21: #{tpu_custom_call.1} parent=1 // pred_fallthru
      _
    // Predicated region
    $region22: #{tpu_custom_call.1} parent=1 // pred_check
      _
    $region23: #{tpu_custom_call.1} parent=1 // pred_check_branch
      %61 = sbr.rel (0) target = $region25
    $region24: #{tpu_custom_call.1} parent=1 // pred_region
      _
    $region25: #{tpu_custom_call.1} parent=1 // pred_fallthru
      _
    // Predicated region
    $region26: #{tpu_custom_call.1} parent=1 // pred_check
      _
    $region27: #{tpu_custom_call.1} parent=1 // pred_check_branch
      %63 = sbr.rel (0) target = $region29
    $region28: #{tpu_custom_call.1} parent=1 // pred_region
      _
    $region29: #{tpu_custom_call.1} parent=1 // pred_fallthru
      _
    // Predicated region
    $region30: #{tpu_custom_call.1} parent=1 // pred_check
      _
    $region31: #{tpu_custom_call.1} parent=1 // pred_check_branch
      %65 = sbr.rel (0) target = $region33
    $region32: #{tpu_custom_call.1} parent=1 // pred_region
      %s67 = ssub.s32 16384, 16384
      %68 = vsyncadd [#allocation9], %s67
      %s69 = sshll.u32 [#allocation8], 4
      %s70 = int_to_ptr.vmem [resolvable:$true] %s69
      %75 = dma.hbm_to_vmem [thread:$0]  %s7, 16384, %s70, [#allocation9], 256, 256, 16
    $region33: #{tpu_custom_call.1} parent=1 // pred_fallthru
      _
    // Predicated region
    $region34: #{tpu_custom_call.1} parent=1 // pred_check
      _
    $region35: #{tpu_custom_call.1} parent=1 // pred_check_branch
      %77 = sbr.rel (0) target = $region37
    $region36: #{tpu_custom_call.1} parent=1 // pred_region
      _
    $region37: #{tpu_custom_call.1} parent=1 // pred_fallthru
      _
    // Predicated region
    $region38: #{tpu_custom_call.1} parent=1 // pred_check
      _
    $region39: #{tpu_custom_call.1} parent=1 // pred_check_branch
      %79 = sbr.rel (0) target = $region41
    $region40: #{tpu_custom_call.1} parent=1 // pred_region
      %s81 = ssub.s32 4096, 4096
      %82 = vsyncadd [#allocation9], %s81
      %s83 = sshll.u32 [#allocation10], 4
      %s84 = int_to_ptr.vmem [resolvable:$true] %s83
      %89 = dma.hbm_to_vmem [thread:$0]  %s9, 4096, %s84, [#allocation9], 128, 128, 8
    $region41: #{tpu_custom_call.1} parent=1 // pred_fallthru
      _
    // Predicated region
    $region42: #{tpu_custom_call.1} parent=1 // pred_check
      _
    $region43: #{tpu_custom_call.1} parent=1 // pred_check_branch
      %91 = sbr.rel (0) target = $region45
    $region44: #{tpu_custom_call.1} parent=1 // pred_region
      _
    $region45: #{tpu_custom_call.1} parent=1 // pred_fallthru
      _
    // Predicated region
    $region46: #{tpu_custom_call.1} parent=1 // pred_check
      _
    $region47: #{tpu_custom_call.1} parent=1 // pred_check_branch
      %93 = sbr.rel (0) target = $region49
    $region48: #{tpu_custom_call.1} parent=1 // pred_region
      %94 = dma.done [#allocation3], 256
    $region49: #{tpu_custom_call.1} parent=1 // pred_fallthru
      _
    // Predicated region
    $region50: #{tpu_custom_call.1} parent=1 // pred_check
      _
    $region51: #{tpu_custom_call.1} parent=1 // pred_check_branch
      %96 = sbr.rel (0) target = $region53
    $region52: #{tpu_custom_call.1} parent=1 // pred_region
      %97 = dma.done [#allocation6], 32
    $region53: #{tpu_custom_call.1} parent=1 // pred_fallthru
      _
    // Predicated region
    $region54: #{tpu_custom_call.1} parent=1 // pred_check
      _
    $region55: #{tpu_custom_call.1} parent=1 // pred_check_branch
      %99 = sbr.rel (0) target = $region57
    $region56: #{tpu_custom_call.1} parent=1 // pred_region
      %100 = dma.done [#allocation6], 16
    $region57: #{tpu_custom_call.1} parent=1 // pred_fallthru
      _
    // Predicated region
    $region58: #{tpu_custom_call.1} parent=1 // pred_check
      _
    $region59: #{tpu_custom_call.1} parent=1 // pred_check_branch
      %102 = sbr.rel (0) target = $region61
    $region60: #{tpu_custom_call.1} parent=1 // pred_region
      %103 = dma.done [#allocation9], 16384
    $region61: #{tpu_custom_call.1} parent=1 // pred_fallthru
      _
    // Predicated region
    $region62: #{tpu_custom_call.1} parent=1 // pred_check
      _
    $region63: #{tpu_custom_call.1} parent=1 // pred_check_branch
      %105 = sbr.rel (0) target = $region65
    $region64: #{tpu_custom_call.1} parent=1 // pred_region
      %106 = dma.done [#allocation9], 4096
    $region65: #{tpu_custom_call.1} parent=1 // pred_fallthru
      _
    %v107 = vld [vmem:[%s0] sm:$0xff]
    %v108 = vld [vmem:[#allocation2] ss:$2 sm:$0xff]
    %110 = vset.pattern.permute.xlu0 0
    %111 = vperm.xlu0 %110, %v107
    %v112 = vpop.permute.xlu0 %111
    %v115 = vlaneseq
    %v116 = vshrl.u32 %v115, 7
    %v117 = vsub.s32 0, %v116
    %v118 = vrot.slane %v108, %v117
    %v119 = vlaneseq
    %v120 = vshrl.u32 %v119, 7
    %v121 = vsub.s32 1, %v120
    %v122 = vrot.slane %v108, %v121
    %v123 = vlaneseq
    %v124 = vshrl.u32 %v123, 7
    %v125 = vsub.s32 2, %v124
    %v126 = vrot.slane %v108, %v125
    %v127 = vlaneseq
    %v128 = vshrl.u32 %v127, 7
    %v129 = vsub.s32 3, %v128
    %v130 = vrot.slane %v108, %v129
    %v131 = vlaneseq
    %v132 = vshrl.u32 %v131, 7
    %v133 = vsub.s32 4, %v132
    %v134 = vrot.slane %v108, %v133
    %v135 = vlaneseq
    %v136 = vshrl.u32 %v135, 7
    %v137 = vsub.s32 5, %v136
    %v138 = vrot.slane %v108, %v137
    %v139 = vlaneseq
    %v140 = vshrl.u32 %v139, 7
    %v141 = vsub.s32 6, %v140
    %v142 = vrot.slane %v108, %v141
    %v143 = vlaneseq
    %v144 = vshrl.u32 %v143, 7
    %v145 = vsub.s32 7, %v144
    %v146 = vrot.slane %v108, %v145
    %v155 = vmul.f32 %v112, %v118
    %v156 = vmul.f32 %v112, %v122
    %v157 = vmul.f32 %v112, %v126
    %v158 = vmul.f32 %v112, %v130
    %v159 = vmul.f32 %v112, %v134
    %v160 = vmul.f32 %v112, %v138
    %v161 = vmul.f32 %v112, %v142
    %v162 = vmul.f32 %v112, %v146
    %s163 = scalar_lea.vmem [#allocation2], 1
    %v164 = vld [vmem:[%s163] ss:$2 sm:$0xff]
    %165 = vset.pattern.permute.xlu0 1
    %166 = vperm.xlu0 %165, %v107
    %v167 = vpop.permute.xlu0 %166
    %v170 = vlaneseq
    %v171 = vshrl.u32 %v170, 7
    %v172 = vsub.s32 0, %v171
    %v173 = vrot.slane %v164, %v172
    %v174 = vlaneseq
    %v175 = vshrl.u32 %v174, 7
    %v176 = vsub.s32 1, %v175
    %v177 = vrot.slane %v164, %v176
    %v178 = vlaneseq
    %v179 = vshrl.u32 %v178, 7
    %v180 = vsub.s32 2, %v179
    %v181 = vrot.slane %v164, %v180
    %v182 = vlaneseq
    %v183 = vshrl.u32 %v182, 7
    %v184 = vsub.s32 3, %v183
    %v185 = vrot.slane %v164, %v184
    %v186 = vlaneseq
    %v187 = vshrl.u32 %v186, 7
    %v188 = vsub.s32 4, %v187
    %v189 = vrot.slane %v164, %v188
    %v190 = vlaneseq
    %v191 = vshrl.u32 %v190, 7
    %v192 = vsub.s32 5, %v191
    %v193 = vrot.slane %v164, %v192
    %v194 = vlaneseq
    %v195 = vshrl.u32 %v194, 7
    %v196 = vsub.s32 6, %v195
    %v197 = vrot.slane %v164, %v196
    %v198 = vlaneseq
    %v199 = vshrl.u32 %v198, 7
    %v200 = vsub.s32 7, %v199
    %v201 = vrot.slane %v164, %v200
    %v210 = vmul.f32 %v167, %v173
    %v211 = vmul.f32 %v167, %v177
    %v212 = vmul.f32 %v167, %v181
    %v213 = vmul.f32 %v167, %v185
    %v214 = vmul.f32 %v167, %v189
    %v215 = vmul.f32 %v167, %v193
    %v216 = vmul.f32 %v167, %v197
    %v217 = vmul.f32 %v167, %v201
    %v218 = vadd.f32 %v155, %v210
    %v219 = vadd.f32 %v156, %v211
    %v220 = vadd.f32 %v157, %v212
    %v221 = vadd.f32 %v158, %v213
    %v222 = vadd.f32 %v159, %v214
    %v223 = vadd.f32 %v160, %v215
    %v224 = vadd.f32 %v161, %v216
    %v225 = vadd.f32 %v162, %v217
    %v226 = vld [vmem:[%s2] sm:$0xff]
    %v228 = vlaneseq
    %v229 = vshrl.u32 %v228, 7
    %v230 = vsub.s32 0, %v229
    %v231 = vrot.slane %v226, %v230
    %v232 = vlaneseq
    %v233 = vshrl.u32 %v232, 7
    %v234 = vsub.s32 1, %v233
    %v235 = vrot.slane %v226, %v234
    %v236 = vlaneseq
    %v237 = vshrl.u32 %v236, 7
    %v238 = vsub.s32 2, %v237
    %v239 = vrot.slane %v226, %v238
    %v240 = vlaneseq
    %v241 = vshrl.u32 %v240, 7
    %v242 = vsub.s32 3, %v241
    %v243 = vrot.slane %v226, %v242
    %v244 = vlaneseq
    %v245 = vshrl.u32 %v244, 7
    %v246 = vsub.s32 4, %v245
    %v247 = vrot.slane %v226, %v246
    %v248 = vlaneseq
    %v249 = vshrl.u32 %v248, 7
    %v250 = vsub.s32 5, %v249
    %v251 = vrot.slane %v226, %v250
    %v252 = vlaneseq
    %v253 = vshrl.u32 %v252, 7
    %v254 = vsub.s32 6, %v253
    %v255 = vrot.slane %v226, %v254
    %v256 = vlaneseq
    %v257 = vshrl.u32 %v256, 7
    %v258 = vsub.s32 7, %v257
    %v259 = vrot.slane %v226, %v258
    %v268 = vadd.f32 %v218, %v231
    %v269 = vadd.f32 %v219, %v235
    %v270 = vadd.f32 %v220, %v239
    %v271 = vadd.f32 %v221, %v243
    %v272 = vadd.f32 %v222, %v247
    %v273 = vadd.f32 %v223, %v251
    %v274 = vadd.f32 %v224, %v255
    %v275 = vadd.f32 %v225, %v259
    %276 = vst [vmem:[#allocation14] sm:$0xff] %v268
    %277 = vst [vmem:[#allocation14 + $0x8] sm:$0xff] %v269
    %278 = vst [vmem:[#allocation14 + $0x10] sm:$0xff] %v270
    %279 = vst [vmem:[#allocation14 + $0x18] sm:$0xff] %v271
    %280 = vst [vmem:[#allocation14 + $0x20] sm:$0xff] %v272
    %281 = vst [vmem:[#allocation14 + $0x28] sm:$0xff] %v273
    %282 = vst [vmem:[#allocation14 + $0x30] sm:$0xff] %v274
    %283 = vst [vmem:[#allocation14 + $0x38] sm:$0xff] %v275
    %v284 = vld [vmem:[#allocation5] sm:$0x1]
    %v285 = vlaneseq
    %v286 = vshrl.u32 %v285, 7
    %v287 = vsub.s32 0, %v286
    %v288 = vrot.slane %v284, %v287
    %v289 = vmul.f32 %v112, %v288
    %v290 = vld [vmem:[#allocation5 + $0x1] sm:$0x1]
    %v291 = vlaneseq
    %v292 = vshrl.u32 %v291, 7
    %v293 = vsub.s32 0, %v292
    %v294 = vrot.slane %v290, %v293
    %v295 = vmul.f32 %v167, %v294
    %v296 = vadd.f32 %v289, %v295
    %v297 = vld [vmem:[#allocation7] sm:$0x1]
    %v299 = vlaneseq
    %v300 = vshrl.u32 %v299, 7
    %v301 = vsub.s32 0, %v300
    %v302 = vrot.slane %v297, %v301
    %v304 = vadd.f32 %v296, %v302
    %305 = vst [vmem:[#allocation11] sm:$0xff] %v304
    %v306 = vld [vmem:[%s5] ss:$2 sm:$0xf]
    %v308 = vlaneseq
    %v309 = vshrl.u32 %v308, 7
    %v310 = vsub.s32 0, %v309
    %v311 = vrot.slane %v306, %v310
    %v312 = vlaneseq
    %v313 = vshrl.u32 %v312, 7
    %v314 = vsub.s32 1, %v313
    %v315 = vrot.slane %v306, %v314
    %v316 = vlaneseq
    %v317 = vshrl.u32 %v316, 7
    %v318 = vsub.s32 2, %v317
    %v319 = vrot.slane %v306, %v318
    %v320 = vlaneseq
    %v321 = vshrl.u32 %v320, 7
    %v322 = vsub.s32 3, %v321
    %v323 = vrot.slane %v306, %v322
    %v328 = vmul.f32 %v112, %v311
    %v329 = vmul.f32 %v112, %v315
    %v330 = vmul.f32 %v112, %v319
    %v331 = vmul.f32 %v112, %v323
    %s332 = scalar_lea.vmem %s5, 1
    %v333 = vld [vmem:[%s332] ss:$2 sm:$0xf]
    %v335 = vlaneseq
    %v336 = vshrl.u32 %v335, 7
    %v337 = vsub.s32 0, %v336
    %v338 = vrot.slane %v333, %v337
    %v339 = vlaneseq
    %v340 = vshrl.u32 %v339, 7
    %v341 = vsub.s32 1, %v340
    %v342 = vrot.slane %v333, %v341
    %v343 = vlaneseq
    %v344 = vshrl.u32 %v343, 7
    %v345 = vsub.s32 2, %v344
    %v346 = vrot.slane %v333, %v345
    %v347 = vlaneseq
    %v348 = vshrl.u32 %v347, 7
    %v349 = vsub.s32 3, %v348
    %v350 = vrot.slane %v333, %v349
    %v355 = vmul.f32 %v167, %v338
    %v356 = vmul.f32 %v167, %v342
    %v357 = vmul.f32 %v167, %v346
    %v358 = vmul.f32 %v167, %v350
    %v359 = vadd.f32 %v328, %v355
    %v360 = vadd.f32 %v329, %v356
    %v361 = vadd.f32 %v330, %v357
    %v362 = vadd.f32 %v331, %v358
    %v363 = vld [vmem:[%s6] sm:$0xf]
    %v365 = vlaneseq
    %v366 = vshrl.u32 %v365, 7
    %v367 = vsub.s32 0, %v366
    %v368 = vrot.slane %v363, %v367
    %v369 = vlaneseq
    %v370 = vshrl.u32 %v369, 7
    %v371 = vsub.s32 1, %v370
    %v372 = vrot.slane %v363, %v371
    %v373 = vlaneseq
    %v374 = vshrl.u32 %v373, 7
    %v375 = vsub.s32 2, %v374
    %v376 = vrot.slane %v363, %v375
    %v377 = vlaneseq
    %v378 = vshrl.u32 %v377, 7
    %v379 = vsub.s32 3, %v378
    %v380 = vrot.slane %v363, %v379
    %v385 = vadd.f32 %v359, %v368
    %v386 = vadd.f32 %v360, %v372
    %v387 = vadd.f32 %v361, %v376
    %v388 = vadd.f32 %v362, %v380
    %v389 = vmax.f32 %v385, 0.0
    %v390 = vmax.f32 %v386, 0.0
    %v391 = vmax.f32 %v387, 0.0
    %v392 = vmax.f32 %v388, 0.0
    %v393 = vld [vmem:[#allocation8] sm:$0xff]
    %v394 = vld [vmem:[#allocation8 + $0x8] sm:$0xff]
    %v395 = vld [vmem:[#allocation8 + $0x10] sm:$0xff]
    %v396 = vld [vmem:[#allocation8 + $0x18] sm:$0xff]
    %v397 = vld [vmem:[#allocation8 + $0x20] sm:$0xff]
    %v398 = vld [vmem:[#allocation8 + $0x28] sm:$0xff]
    %v399 = vld [vmem:[#allocation8 + $0x30] sm:$0xff]
    %v400 = vld [vmem:[#allocation8 + $0x38] sm:$0xff]
    %v401 = vld [vmem:[#allocation8 + $0x40] sm:$0xff]
    %v402 = vld [vmem:[#allocation8 + $0x48] sm:$0xff]
    %v403 = vld [vmem:[#allocation8 + $0x50] sm:$0xff]
    %v404 = vld [vmem:[#allocation8 + $0x58] sm:$0xff]
    %v405 = vld [vmem:[#allocation8 + $0x60] sm:$0xff]
    %v406 = vld [vmem:[#allocation8 + $0x68] sm:$0xff]
    %v407 = vld [vmem:[#allocation8 + $0x70] sm:$0xff]
    %v408 = vld [vmem:[#allocation8 + $0x78] sm:$0xff]
    %v409 = vld [vmem:[#allocation8 + $0x80] sm:$0xff]
    %v410 = vld [vmem:[#allocation8 + $0x88] sm:$0xff]
    %v411 = vld [vmem:[#allocation8 + $0x90] sm:$0xff]
    %v412 = vld [vmem:[#allocation8 + $0x98] sm:$0xff]
    %v413 = vld [vmem:[#allocation8 + $0xa0] sm:$0xff]
    %v414 = vld [vmem:[#allocation8 + $0xa8] sm:$0xff]
    %v415 = vld [vmem:[#allocation8 + $0xb0] sm:$0xff]
    %v416 = vld [vmem:[#allocation8 + $0xb8] sm:$0xff]
    %v417 = vld [vmem:[#allocation8 + $0xc0] sm:$0xff]
    %v418 = vld [vmem:[#allocation8 + $0xc8] sm:$0xff]
    %v419 = vld [vmem:[#allocation8 + $0xd0] sm:$0xff]
    %v420 = vld [vmem:[#allocation8 + $0xd8] sm:$0xff]
    %v421 = vld [vmem:[#allocation8 + $0xe0] sm:$0xff]
    %v422 = vld [vmem:[#allocation8 + $0xe8] sm:$0xff]
    %v423 = vld [vmem:[#allocation8 + $0xf0] sm:$0xff]
    %v424 = vld [vmem:[#allocation8 + $0xf8] sm:$0xff]
    %v425 = vld [vmem:[#allocation8 + $0x100] sm:$0xff]
    %v426 = vld [vmem:[#allocation8 + $0x108] sm:$0xff]
    %v427 = vld [vmem:[#allocation8 + $0x110] sm:$0xff]
    %v428 = vld [vmem:[#allocation8 + $0x118] sm:$0xff]
    %v429 = vld [vmem:[#allocation8 + $0x120] sm:$0xff]
    %v430 = vld [vmem:[#allocation8 + $0x128] sm:$0xff]
    %v431 = vld [vmem:[#allocation8 + $0x130] sm:$0xff]
    %v432 = vld [vmem:[#allocation8 + $0x138] sm:$0xff]
    %v433 = vld [vmem:[#allocation8 + $0x140] sm:$0xff]
    %v434 = vld [vmem:[#allocation8 + $0x148] sm:$0xff]
    %v435 = vld [vmem:[#allocation8 + $0x150] sm:$0xff]
    %v436 = vld [vmem:[#allocation8 + $0x158] sm:$0xff]
    %v437 = vld [vmem:[#allocation8 + $0x160] sm:$0xff]
    %v438 = vld [vmem:[#allocation8 + $0x168] sm:$0xff]
    %v439 = vld [vmem:[#allocation8 + $0x170] sm:$0xff]
    %v440 = vld [vmem:[#allocation8 + $0x178] sm:$0xff]
    %v441 = vld [vmem:[#allocation8 + $0x180] sm:$0xff]
    %v442 = vld [vmem:[#allocation8 + $0x188] sm:$0xff]
    %v443 = vld [vmem:[#allocation8 + $0x190] sm:$0xff]
    %v444 = vld [vmem:[#allocation8 + $0x198] sm:$0xff]
    %v445 = vld [vmem:[#allocation8 + $0x1a0] sm:$0xff]
    %v446 = vld [vmem:[#allocation8 + $0x1a8] sm:$0xff]
    %v447 = vld [vmem:[#allocation8 + $0x1b0] sm:$0xff]
    %v448 = vld [vmem:[#allocation8 + $0x1b8] sm:$0xff]
    %v449 = vld [vmem:[#allocation8 + $0x1c0] sm:$0xff]
    %v450 = vld [vmem:[#allocation8 + $0x1c8] sm:$0xff]
    %v451 = vld [vmem:[#allocation8 + $0x1d0] sm:$0xff]
    %v452 = vld [vmem:[#allocation8 + $0x1d8] sm:$0xff]
    %v453 = vld [vmem:[#allocation8 + $0x1e0] sm:$0xff]
    %v454 = vld [vmem:[#allocation8 + $0x1e8] sm:$0xff]
    %v455 = vld [vmem:[#allocation8 + $0x1f0] sm:$0xff]
    %v456 = vld [vmem:[#allocation8 + $0x1f8] sm:$0xff]
    %v457 = vld [vmem:[#allocation8 + $0x200] sm:$0xff]
    %v458 = vld [vmem:[#allocation8 + $0x208] sm:$0xff]
    %v459 = vld [vmem:[#allocation8 + $0x210] sm:$0xff]
    %v460 = vld [vmem:[#allocation8 + $0x218] sm:$0xff]
    %v461 = vld [vmem:[#allocation8 + $0x220] sm:$0xff]
    %v462 = vld [vmem:[#allocation8 + $0x228] sm:$0xff]
    %v463 = vld [vmem:[#allocation8 + $0x230] sm:$0xff]
    %v464 = vld [vmem:[#allocation8 + $0x238] sm:$0xff]
    %v465 = vld [vmem:[#allocation8 + $0x240] sm:$0xff]
    %v466 = vld [vmem:[#allocation8 + $0x248] sm:$0xff]
    %v467 = vld [vmem:[#allocation8 + $0x250] sm:$0xff]
    %v468 = vld [vmem:[#allocation8 + $0x258] sm:$0xff]
    %v469 = vld [vmem:[#allocation8 + $0x260] sm:$0xff]
    %v470 = vld [vmem:[#allocation8 + $0x268] sm:$0xff]
    %v471 = vld [vmem:[#allocation8 + $0x270] sm:$0xff]
    %v472 = vld [vmem:[#allocation8 + $0x278] sm:$0xff]
    %v473 = vld [vmem:[#allocation8 + $0x280] sm:$0xff]
    %v474 = vld [vmem:[#allocation8 + $0x288] sm:$0xff]
    %v475 = vld [vmem:[#allocation8 + $0x290] sm:$0xff]
    %v476 = vld [vmem:[#allocation8 + $0x298] sm:$0xff]
    %v477 = vld [vmem:[#allocation8 + $0x2a0] sm:$0xff]
    %v478 = vld [vmem:[#allocation8 + $0x2a8] sm:$0xff]
    %v479 = vld [vmem:[#allocation8 + $0x2b0] sm:$0xff]
    %v480 = vld [vmem:[#allocation8 + $0x2b8] sm:$0xff]
    %v481 = vld [vmem:[#allocation8 + $0x2c0] sm:$0xff]
    %v482 = vld [vmem:[#allocation8 + $0x2c8] sm:$0xff]
    %v483 = vld [vmem:[#allocation8 + $0x2d0] sm:$0xff]
    %v484 = vld [vmem:[#allocation8 + $0x2d8] sm:$0xff]
    %v485 = vld [vmem:[#allocation8 + $0x2e0] sm:$0xff]
    %v486 = vld [vmem:[#allocation8 + $0x2e8] sm:$0xff]
    %v487 = vld [vmem:[#allocation8 + $0x2f0] sm:$0xff]
    %v488 = vld [vmem:[#allocation8 + $0x2f8] sm:$0xff]
    %v489 = vld [vmem:[#allocation8 + $0x300] sm:$0xff]
    %v490 = vld [vmem:[#allocation8 + $0x308] sm:$0xff]
    %v491 = vld [vmem:[#allocation8 + $0x310] sm:$0xff]
    %v492 = vld [vmem:[#allocation8 + $0x318] sm:$0xff]
    %v493 = vld [vmem:[#allocation8 + $0x320] sm:$0xff]
    %v494 = vld [vmem:[#allocation8 + $0x328] sm:$0xff]
    %v495 = vld [vmem:[#allocation8 + $0x330] sm:$0xff]
    %v496 = vld [vmem:[#allocation8 + $0x338] sm:$0xff]
    %v497 = vld [vmem:[#allocation8 + $0x340] sm:$0xff]
    %v498 = vld [vmem:[#allocation8 + $0x348] sm:$0xff]
    %v499 = vld [vmem:[#allocation8 + $0x350] sm:$0xff]
    %v500 = vld [vmem:[#allocation8 + $0x358] sm:$0xff]
    %v501 = vld [vmem:[#allocation8 + $0x360] sm:$0xff]
    %v502 = vld [vmem:[#allocation8 + $0x368] sm:$0xff]
    %v503 = vld [vmem:[#allocation8 + $0x370] sm:$0xff]
    %v504 = vld [vmem:[#allocation8 + $0x378] sm:$0xff]
    %v505 = vld [vmem:[#allocation8 + $0x380] sm:$0xff]
    %v506 = vld [vmem:[#allocation8 + $0x388] sm:$0xff]
    %v507 = vld [vmem:[#allocation8 + $0x390] sm:$0xff]
    %v508 = vld [vmem:[#allocation8 + $0x398] sm:$0xff]
    %v509 = vld [vmem:[#allocation8 + $0x3a0] sm:$0xff]
    %v510 = vld [vmem:[#allocation8 + $0x3a8] sm:$0xff]
    %v511 = vld [vmem:[#allocation8 + $0x3b0] sm:$0xff]
    %v512 = vld [vmem:[#allocation8 + $0x3b8] sm:$0xff]
    %v513 = vld [vmem:[#allocation8 + $0x3c0] sm:$0xff]
    %v514 = vld [vmem:[#allocation8 + $0x3c8] sm:$0xff]
    %v515 = vld [vmem:[#allocation8 + $0x3d0] sm:$0xff]
    %v516 = vld [vmem:[#allocation8 + $0x3d8] sm:$0xff]
    %v517 = vld [vmem:[#allocation8 + $0x3e0] sm:$0xff]
    %v518 = vld [vmem:[#allocation8 + $0x3e8] sm:$0xff]
    %v519 = vld [vmem:[#allocation8 + $0x3f0] sm:$0xff]
    %v520 = vld [vmem:[#allocation8 + $0x3f8] sm:$0xff]
    %v521 = vld [vmem:[%s8] sm:$0x3]
    %v523 = vlaneseq
    %v524 = vshrl.u32 %v523, 7
    %v525 = vsub.s32 0, %v524
    %v526 = vrot.slane %v521, %v525
    %v527 = vlaneseq
    %v528 = vshrl.u32 %v527, 7
    %v529 = vsub.s32 1, %v528
    %v530 = vrot.slane %v521, %v529
    %v533 = vand.u32 %v424, 4294901760
    %534 = vmatprep.subr.mxu0 %v533
    %v535 = vand.u32 %v423, 4294901760
    %536 = vmatpush1.msra.mxu0 %v535
    %v537 = vand.u32 %v422, 4294901760
    %538 = vmatprep.subr.mxu0 %v537
    %v539 = vand.u32 %v421, 4294901760
    %540 = vmatpush1.msra.mxu0 %v539
    %v541 = vand.u32 %v420, 4294901760
    %542 = vmatprep.subr.mxu0 %v541
    %v543 = vand.u32 %v419, 4294901760
    %544 = vmatpush1.msra.mxu0 %v543
    %v545 = vand.u32 %v418, 4294901760
    %546 = vmatprep.subr.mxu0 %v545
    %v547 = vand.u32 %v417, 4294901760
    %548 = vmatpush1.msra.mxu0 %v547
    %v549 = vand.u32 %v416, 4294901760
    %550 = vmatprep.subr.mxu0 %v549
    %v551 = vand.u32 %v415, 4294901760
    %552 = vmatpush1.msra.mxu0 %v551
    %v553 = vand.u32 %v414, 4294901760
    %554 = vmatprep.subr.mxu0 %v553
    %v555 = vand.u32 %v413, 4294901760
    %556 = vmatpush1.msra.mxu0 %v555
    %v557 = vand.u32 %v412, 4294901760
    %558 = vmatprep.subr.mxu0 %v557
    %v559 = vand.u32 %v411, 4294901760
    %560 = vmatpush1.msra.mxu0 %v559
    %v561 = vand.u32 %v410, 4294901760
    %562 = vmatprep.subr.mxu0 %v561
    %v563 = vand.u32 %v409, 4294901760
    %564 = vmatpush1.msra.mxu0 %v563
    %v565 = vand.u32 %v408, 4294901760
    %566 = vmatprep.subr.mxu0 %v565
    %v567 = vand.u32 %v407, 4294901760
    %568 = vmatpush1.msra.mxu0 %v567
    %v569 = vand.u32 %v406, 4294901760
    %570 = vmatprep.subr.mxu0 %v569
    %v571 = vand.u32 %v405, 4294901760
    %572 = vmatpush1.msra.mxu0 %v571
    %v573 = vand.u32 %v404, 4294901760
    %574 = vmatprep.subr.mxu0 %v573
    %v575 = vand.u32 %v403, 4294901760
    %576 = vmatpush1.msra.mxu0 %v575
    %v577 = vand.u32 %v402, 4294901760
    %578 = vmatprep.subr.mxu0 %v577
    %v579 = vand.u32 %v401, 4294901760
    %580 = vmatpush1.msra.mxu0 %v579
    %v581 = vand.u32 %v400, 4294901760
    %582 = vmatprep.subr.mxu0 %v581
    %v583 = vand.u32 %v399, 4294901760
    %584 = vmatpush1.msra.mxu0 %v583
    %v585 = vand.u32 %v398, 4294901760
    %586 = vmatprep.subr.mxu0 %v585
    %v587 = vand.u32 %v397, 4294901760
    %588 = vmatpush1.msra.mxu0 %v587
    %v589 = vand.u32 %v396, 4294901760
    %590 = vmatprep.subr.mxu0 %v589
    %v591 = vand.u32 %v395, 4294901760
    %592 = vmatpush1.msra.mxu0 %v591
    %v593 = vand.u32 %v394, 4294901760
    %594 = vmatprep.subr.mxu0 %v593
    %v595 = vand.u32 %v393, 4294901760
    %596 = vmatpush1.msra.mxu0 %v595
    %v597 = vand.u32 %v456, 4294901760
    %598 = vmatprep.subr.mxu0 %v597
    %v599 = vand.u32 %v455, 4294901760
    %600 = vmatpush2.msra.mxu0 %v599
    %v601 = vand.u32 %v454, 4294901760
    %602 = vmatprep.subr.mxu0 %v601
    %v603 = vand.u32 %v453, 4294901760
    %604 = vmatpush2.msra.mxu0 %v603
    %v605 = vand.u32 %v452, 4294901760
    %606 = vmatprep.subr.mxu0 %v605
    %v607 = vand.u32 %v451, 4294901760
    %608 = vmatpush2.msra.mxu0 %v607
    %v609 = vand.u32 %v450, 4294901760
    %610 = vmatprep.subr.mxu0 %v609
    %v611 = vand.u32 %v449, 4294901760
    %612 = vmatpush2.msra.mxu0 %v611
    %v613 = vand.u32 %v448, 4294901760
    %614 = vmatprep.subr.mxu0 %v613
    %v615 = vand.u32 %v447, 4294901760
    %616 = vmatpush2.msra.mxu0 %v615
    %v617 = vand.u32 %v446, 4294901760
    %618 = vmatprep.subr.mxu0 %v617
    %v619 = vand.u32 %v445, 4294901760
    %620 = vmatpush2.msra.mxu0 %v619
    %v621 = vand.u32 %v444, 4294901760
    %622 = vmatprep.subr.mxu0 %v621
    %v623 = vand.u32 %v443, 4294901760
    %624 = vmatpush2.msra.mxu0 %v623
    %v625 = vand.u32 %v442, 4294901760
    %626 = vmatprep.subr.mxu0 %v625
    %v627 = vand.u32 %v441, 4294901760
    %628 = vmatpush2.msra.mxu0 %v627
    %v629 = vand.u32 %v440, 4294901760
    %630 = vmatprep.subr.mxu0 %v629
    %v631 = vand.u32 %v439, 4294901760
    %632 = vmatpush2.msra.mxu0 %v631
    %v633 = vand.u32 %v438, 4294901760
    %634 = vmatprep.subr.mxu0 %v633
    %v635 = vand.u32 %v437, 4294901760
    %636 = vmatpush2.msra.mxu0 %v635
    %v637 = vand.u32 %v436, 4294901760
    %638 = vmatprep.subr.mxu0 %v637
    %v639 = vand.u32 %v435, 4294901760
    %640 = vmatpush2.msra.mxu0 %v639
    %v641 = vand.u32 %v434, 4294901760
    %642 = vmatprep.subr.mxu0 %v641
    %v643 = vand.u32 %v433, 4294901760
    %644 = vmatpush2.msra.mxu0 %v643
    %v645 = vand.u32 %v432, 4294901760
    %646 = vmatprep.subr.mxu0 %v645
    %v647 = vand.u32 %v431, 4294901760
    %648 = vmatpush2.msra.mxu0 %v647
    %v649 = vand.u32 %v430, 4294901760
    %650 = vmatprep.subr.mxu0 %v649
    %v651 = vand.u32 %v429, 4294901760
    %652 = vmatpush2.msra.mxu0 %v651
    %v653 = vand.u32 %v428, 4294901760
    %654 = vmatprep.subr.mxu0 %v653
    %v655 = vand.u32 %v427, 4294901760
    %656 = vmatpush2.msra.mxu0 %v655
    %v657 = vand.u32 %v426, 4294901760
    %658 = vmatprep.subr.mxu0 %v657
    %v659 = vand.u32 %v425, 4294901760
    %660 = vmatpush2.msra.mxu0 %v659
    %v661 = vand.u32 %v390, 4294901760
    %v662 = vsub.f32 %v390, %v661
    %v663 = vand.u32 %v662, 4294901760
    %v664 = vsub.f32 %v662, %v663
    %v665 = vand.u32 %v664, 4294901760
    %666 = vmatprep.mubr.f32.mxu0 %v665
    %v667 = vand.u32 %v389, 4294901760
    %v668 = vsub.f32 %v389, %v667
    %v669 = vand.u32 %v668, 4294901760
    %v670 = vsub.f32 %v668, %v669
    %v671 = vand.u32 %v670, 4294901760
    %672 = vmatmul.mubr.f32.gmra.mxu0 %v671
    %v673 = vpop.f32.mrf.mxu0
    %v674 = vadd.f32 %v526, %v673
    %v675 = vpop.f32.mrf.mxu0
    %v676 = vadd.f32 %v530, %v675
    %677 = vdwg.mxu0
    %v678 = vand.u32 %v424, 4294901760
    %v679 = vsub.f32 %v424, %v678
    %v680 = vand.u32 %v679, 4294901760
    %v681 = vsub.f32 %v679, %v680
    %v682 = vand.u32 %v681, 4294901760
    %683 = vmatprep.subr.mxu0 %v682
    %v684 = vand.u32 %v423, 4294901760
    %v685 = vsub.f32 %v423, %v684
    %v686 = vand.u32 %v685, 4294901760
    %v687 = vsub.f32 %v685, %v686
    %v688 = vand.u32 %v687, 4294901760
    %689 = vmatpush1.msra.mxu0 %v688
    %v690 = vand.u32 %v422, 4294901760
    %v691 = vsub.f32 %v422, %v690
    %v692 = vand.u32 %v691, 4294901760
    %v693 = vsub.f32 %v691, %v692
    %v694 = vand.u32 %v693, 4294901760
    %695 = vmatprep.subr.mxu0 %v694
    %v696 = vand.u32 %v421, 4294901760
    %v697 = vsub.f32 %v421, %v696
    %v698 = vand.u32 %v697, 4294901760
    %v699 = vsub.f32 %v697, %v698
    %v700 = vand.u32 %v699, 4294901760
    %701 = vmatpush1.msra.mxu0 %v700
    %v702 = vand.u32 %v420, 4294901760
    %v703 = vsub.f32 %v420, %v702
    %v704 = vand.u32 %v703, 4294901760
    %v705 = vsub.f32 %v703, %v704
    %v706 = vand.u32 %v705, 4294901760
    %707 = vmatprep.subr.mxu0 %v706
    %v708 = vand.u32 %v419, 4294901760
    %v709 = vsub.f32 %v419, %v708
    %v710 = vand.u32 %v709, 4294901760
    %v711 = vsub.f32 %v709, %v710
    %v712 = vand.u32 %v711, 4294901760
    %713 = vmatpush1.msra.mxu0 %v712
    %v714 = vand.u32 %v418, 4294901760
    %v715 = vsub.f32 %v418, %v714
    %v716 = vand.u32 %v715, 4294901760
    %v717 = vsub.f32 %v715, %v716
    %v718 = vand.u32 %v717, 4294901760
    %719 = vmatprep.subr.mxu0 %v718
    %v720 = vand.u32 %v417, 4294901760
    %v721 = vsub.f32 %v417, %v720
    %v722 = vand.u32 %v721, 4294901760
    %v723 = vsub.f32 %v721, %v722
    %v724 = vand.u32 %v723, 4294901760
    %725 = vmatpush1.msra.mxu0 %v724
    %v726 = vand.u32 %v416, 4294901760
    %v727 = vsub.f32 %v416, %v726
    %v728 = vand.u32 %v727, 4294901760
    %v729 = vsub.f32 %v727, %v728
    %v730 = vand.u32 %v729, 4294901760
    %731 = vmatprep.subr.mxu0 %v730
    %v732 = vand.u32 %v415, 4294901760
    %v733 = vsub.f32 %v415, %v732
    %v734 = vand.u32 %v733, 4294901760
    %v735 = vsub.f32 %v733, %v734
    %v736 = vand.u32 %v735, 4294901760
    %737 = vmatpush1.msra.mxu0 %v736
    %v738 = vand.u32 %v414, 4294901760
    %v739 = vsub.f32 %v414, %v738
    %v740 = vand.u32 %v739, 4294901760
    %v741 = vsub.f32 %v739, %v740
    %v742 = vand.u32 %v741, 4294901760
    %743 = vmatprep.subr.mxu0 %v742
    %v744 = vand.u32 %v413, 4294901760
    %v745 = vsub.f32 %v413, %v744
    %v746 = vand.u32 %v745, 4294901760
    %v747 = vsub.f32 %v745, %v746
    %v748 = vand.u32 %v747, 4294901760
    %749 = vmatpush1.msra.mxu0 %v748
    %v750 = vand.u32 %v412, 4294901760
    %v751 = vsub.f32 %v412, %v750
    %v752 = vand.u32 %v751, 4294901760
    %v753 = vsub.f32 %v751, %v752
    %v754 = vand.u32 %v753, 4294901760
    %755 = vmatprep.subr.mxu0 %v754
    %v756 = vand.u32 %v411, 4294901760
    %v757 = vsub.f32 %v411, %v756
    %v758 = vand.u32 %v757, 4294901760
    %v759 = vsub.f32 %v757, %v758
    %v760 = vand.u32 %v759, 4294901760
    %761 = vmatpush1.msra.mxu0 %v760
    %v762 = vand.u32 %v410, 4294901760
    %v763 = vsub.f32 %v410, %v762
    %v764 = vand.u32 %v763, 4294901760
    %v765 = vsub.f32 %v763, %v764
    %v766 = vand.u32 %v765, 4294901760
    %767 = vmatprep.subr.mxu0 %v766
    %v768 = vand.u32 %v409, 4294901760
    %v769 = vsub.f32 %v409, %v768
    %v770 = vand.u32 %v769, 4294901760
    %v771 = vsub.f32 %v769, %v770
    %v772 = vand.u32 %v771, 4294901760
    %773 = vmatpush1.msra.mxu0 %v772
    %v774 = vand.u32 %v408, 4294901760
    %v775 = vsub.f32 %v408, %v774
    %v776 = vand.u32 %v775, 4294901760
    %v777 = vsub.f32 %v775, %v776
    %v778 = vand.u32 %v777, 4294901760
    %779 = vmatprep.subr.mxu0 %v778
    %v780 = vand.u32 %v407, 4294901760
    %v781 = vsub.f32 %v407, %v780
    %v782 = vand.u32 %v781, 4294901760
    %v783 = vsub.f32 %v781, %v782
    %v784 = vand.u32 %v783, 4294901760
    %785 = vmatpush1.msra.mxu0 %v784
    %v786 = vand.u32 %v406, 4294901760
    %v787 = vsub.f32 %v406, %v786
    %v788 = vand.u32 %v787, 4294901760
    %v789 = vsub.f32 %v787, %v788
    %v790 = vand.u32 %v789, 4294901760
    %791 = vmatprep.subr.mxu0 %v790
    %v792 = vand.u32 %v405, 4294901760
    %v793 = vsub.f32 %v405, %v792
    %v794 = vand.u32 %v793, 4294901760
    %v795 = vsub.f32 %v793, %v794
    %v796 = vand.u32 %v795, 4294901760
    %797 = vmatpush1.msra.mxu0 %v796
    %v798 = vand.u32 %v404, 4294901760
    %v799 = vsub.f32 %v404, %v798
    %v800 = vand.u32 %v799, 4294901760
    %v801 = vsub.f32 %v799, %v800
    %v802 = vand.u32 %v801, 4294901760
    %803 = vmatprep.subr.mxu0 %v802
    %v804 = vand.u32 %v403, 4294901760
    %v805 = vsub.f32 %v403, %v804
    %v806 = vand.u32 %v805, 4294901760
    %v807 = vsub.f32 %v805, %v806
    %v808 = vand.u32 %v807, 4294901760
    %809 = vmatpush1.msra.mxu0 %v808
    %v810 = vand.u32 %v402, 4294901760
    %v811 = vsub.f32 %v402, %v810
    %v812 = vand.u32 %v811, 4294901760
    %v813 = vsub.f32 %v811, %v812
    %v814 = vand.u32 %v813, 4294901760
    %815 = vmatprep.subr.mxu0 %v814
    %v816 = vand.u32 %v401, 4294901760
    %v817 = vsub.f32 %v401, %v816
    %v818 = vand.u32 %v817, 4294901760
    %v819 = vsub.f32 %v817, %v818
    %v820 = vand.u32 %v819, 4294901760
    %821 = vmatpush1.msra.mxu0 %v820
    %v822 = vand.u32 %v400, 4294901760
    %v823 = vsub.f32 %v400, %v822
    %v824 = vand.u32 %v823, 4294901760
    %v825 = vsub.f32 %v823, %v824
    %v826 = vand.u32 %v825, 4294901760
    %827 = vmatprep.subr.mxu0 %v826
    %v828 = vand.u32 %v399, 4294901760
    %v829 = vsub.f32 %v399, %v828
    %v830 = vand.u32 %v829, 4294901760
    %v831 = vsub.f32 %v829, %v830
    %v832 = vand.u32 %v831, 4294901760
    %833 = vmatpush1.msra.mxu0 %v832
    %v834 = vand.u32 %v398, 4294901760
    %v835 = vsub.f32 %v398, %v834
    %v836 = vand.u32 %v835, 4294901760
    %v837 = vsub.f32 %v835, %v836
    %v838 = vand.u32 %v837, 4294901760
    %839 = vmatprep.subr.mxu0 %v838
    %v840 = vand.u32 %v397, 4294901760
    %v841 = vsub.f32 %v397, %v840
    %v842 = vand.u32 %v841, 4294901760
    %v843 = vsub.f32 %v841, %v842
    %v844 = vand.u32 %v843, 4294901760
    %845 = vmatpush1.msra.mxu0 %v844
    %v846 = vand.u32 %v396, 4294901760
    %v847 = vsub.f32 %v396, %v846
    %v848 = vand.u32 %v847, 4294901760
    %v849 = vsub.f32 %v847, %v848
    %v850 = vand.u32 %v849, 4294901760
    %851 = vmatprep.subr.mxu0 %v850
    %v852 = vand.u32 %v395, 4294901760
    %v853 = vsub.f32 %v395, %v852
    %v854 = vand.u32 %v853, 4294901760
    %v855 = vsub.f32 %v853, %v854
    %v856 = vand.u32 %v855, 4294901760
    %857 = vmatpush1.msra.mxu0 %v856
    %v858 = vand.u32 %v394, 4294901760
    %v859 = vsub.f32 %v394, %v858
    %v860 = vand.u32 %v859, 4294901760
    %v861 = vsub.f32 %v859, %v860
    %v862 = vand.u32 %v861, 4294901760
    %863 = vmatprep.subr.mxu0 %v862
    %v864 = vand.u32 %v393, 4294901760
    %v865 = vsub.f32 %v393, %v864
    %v866 = vand.u32 %v865, 4294901760
    %v867 = vsub.f32 %v865, %v866
    %v868 = vand.u32 %v867, 4294901760
    %869 = vmatpush1.msra.mxu0 %v868
    %v870 = vand.u32 %v456, 4294901760
    %v871 = vsub.f32 %v456, %v870
    %v872 = vand.u32 %v871, 4294901760
    %v873 = vsub.f32 %v871, %v872
    %v874 = vand.u32 %v873, 4294901760
    %875 = vmatprep.subr.mxu0 %v874
    %v876 = vand.u32 %v455, 4294901760
    %v877 = vsub.f32 %v455, %v876
    %v878 = vand.u32 %v877, 4294901760
    %v879 = vsub.f32 %v877, %v878
    %v880 = vand.u32 %v879, 4294901760
    %881 = vmatpush2.msra.mxu0 %v880
    %v882 = vand.u32 %v454, 4294901760
    %v883 = vsub.f32 %v454, %v882
    %v884 = vand.u32 %v883, 4294901760
    %v885 = vsub.f32 %v883, %v884
    %v886 = vand.u32 %v885, 4294901760
    %887 = vmatprep.subr.mxu0 %v886
    %v888 = vand.u32 %v453, 4294901760
    %v889 = vsub.f32 %v453, %v888
    %v890 = vand.u32 %v889, 4294901760
    %v891 = vsub.f32 %v889, %v890
    %v892 = vand.u32 %v891, 4294901760
    %893 = vmatpush2.msra.mxu0 %v892
    %v894 = vand.u32 %v452, 4294901760
    %v895 = vsub.f32 %v452, %v894
    %v896 = vand.u32 %v895, 4294901760
    %v897 = vsub.f32 %v895, %v896
    %v898 = vand.u32 %v897, 4294901760
    %899 = vmatprep.subr.mxu0 %v898
    %v900 = vand.u32 %v451, 4294901760
    %v901 = vsub.f32 %v451, %v900
    %v902 = vand.u32 %v901, 4294901760
    %v903 = vsub.f32 %v901, %v902
    %v904 = vand.u32 %v903, 4294901760
    %905 = vmatpush2.msra.mxu0 %v904
    %v906 = vand.u32 %v450, 4294901760
    %v907 = vsub.f32 %v450, %v906
    %v908 = vand.u32 %v907, 4294901760
    %v909 = vsub.f32 %v907, %v908
    %v910 = vand.u32 %v909, 4294901760
    %911 = vmatprep.subr.mxu0 %v910
    %v912 = vand.u32 %v449, 4294901760
    %v913 = vsub.f32 %v449, %v912
    %v914 = vand.u32 %v913, 4294901760
    %v915 = vsub.f32 %v913, %v914
    %v916 = vand.u32 %v915, 4294901760
    %917 = vmatpush2.msra.mxu0 %v916
    %v918 = vand.u32 %v448, 4294901760
    %v919 = vsub.f32 %v448, %v918
    %v920 = vand.u32 %v919, 4294901760
    %v921 = vsub.f32 %v919, %v920
    %v922 = vand.u32 %v921, 4294901760
    %923 = vmatprep.subr.mxu0 %v922
    %v924 = vand.u32 %v447, 4294901760
    %v925 = vsub.f32 %v447, %v924
    %v926 = vand.u32 %v925, 4294901760
    %v927 = vsub.f32 %v925, %v926
    %v928 = vand.u32 %v927, 4294901760
    %929 = vmatpush2.msra.mxu0 %v928
    %v930 = vand.u32 %v446, 4294901760
    %v931 = vsub.f32 %v446, %v930
    %v932 = vand.u32 %v931, 4294901760
    %v933 = vsub.f32 %v931, %v932
    %v934 = vand.u32 %v933, 4294901760
    %935 = vmatprep.subr.mxu0 %v934
    %v936 = vand.u32 %v445, 4294901760
    %v937 = vsub.f32 %v445, %v936
    %v938 = vand.u32 %v937, 4294901760
    %v939 = vsub.f32 %v937, %v938
    %v940 = vand.u32 %v939, 4294901760
    %941 = vmatpush2.msra.mxu0 %v940
    %v942 = vand.u32 %v444, 4294901760
    %v943 = vsub.f32 %v444, %v942
    %v944 = vand.u32 %v943, 4294901760
    %v945 = vsub.f32 %v943, %v944
    %v946 = vand.u32 %v945, 4294901760
    %947 = vmatprep.subr.mxu0 %v946
    %v948 = vand.u32 %v443, 4294901760
    %v949 = vsub.f32 %v443, %v948
    %v950 = vand.u32 %v949, 4294901760
    %v951 = vsub.f32 %v949, %v950
    %v952 = vand.u32 %v951, 4294901760
    %953 = vmatpush2.msra.mxu0 %v952
    %v954 = vand.u32 %v442, 4294901760
    %v955 = vsub.f32 %v442, %v954
    %v956 = vand.u32 %v955, 4294901760
    %v957 = vsub.f32 %v955, %v956
    %v958 = vand.u32 %v957, 4294901760
    %959 = vmatprep.subr.mxu0 %v958
    %v960 = vand.u32 %v441, 4294901760
    %v961 = vsub.f32 %v441, %v960
    %v962 = vand.u32 %v961, 4294901760
    %v963 = vsub.f32 %v961, %v962
    %v964 = vand.u32 %v963, 4294901760
    %965 = vmatpush2.msra.mxu0 %v964
    %v966 = vand.u32 %v440, 4294901760
    %v967 = vsub.f32 %v440, %v966
    %v968 = vand.u32 %v967, 4294901760
    %v969 = vsub.f32 %v967, %v968
    %v970 = vand.u32 %v969, 4294901760
    %971 = vmatprep.subr.mxu0 %v970
    %v972 = vand.u32 %v439, 4294901760
    %v973 = vsub.f32 %v439, %v972
    %v974 = vand.u32 %v973, 4294901760
    %v975 = vsub.f32 %v973, %v974
    %v976 = vand.u32 %v975, 4294901760
    %977 = vmatpush2.msra.mxu0 %v976
    %v978 = vand.u32 %v438, 4294901760
    %v979 = vsub.f32 %v438, %v978
    %v980 = vand.u32 %v979, 4294901760
    %v981 = vsub.f32 %v979, %v980
    %v982 = vand.u32 %v981, 4294901760
    %983 = vmatprep.subr.mxu0 %v982
    %v984 = vand.u32 %v437, 4294901760
    %v985 = vsub.f32 %v437, %v984
    %v986 = vand.u32 %v985, 4294901760
    %v987 = vsub.f32 %v985, %v986
    %v988 = vand.u32 %v987, 4294901760
    %989 = vmatpush2.msra.mxu0 %v988
    %v990 = vand.u32 %v436, 4294901760
    %v991 = vsub.f32 %v436, %v990
    %v992 = vand.u32 %v991, 4294901760
    %v993 = vsub.f32 %v991, %v992
    %v994 = vand.u32 %v993, 4294901760
    %995 = vmatprep.subr.mxu0 %v994
    %v996 = vand.u32 %v435, 4294901760
    %v997 = vsub.f32 %v435, %v996
    %v998 = vand.u32 %v997, 4294901760
    %v999 = vsub.f32 %v997, %v998
    %v1000 = vand.u32 %v999, 4294901760
    %1001 = vmatpush2.msra.mxu0 %v1000
    %v1002 = vand.u32 %v434, 4294901760
    %v1003 = vsub.f32 %v434, %v1002
    %v1004 = vand.u32 %v1003, 4294901760
    %v1005 = vsub.f32 %v1003, %v1004
    %v1006 = vand.u32 %v1005, 4294901760
    %1007 = vmatprep.subr.mxu0 %v1006
    %v1008 = vand.u32 %v433, 4294901760
    %v1009 = vsub.f32 %v433, %v1008
    %v1010 = vand.u32 %v1009, 4294901760
    %v1011 = vsub.f32 %v1009, %v1010
    %v1012 = vand.u32 %v1011, 4294901760
    %1013 = vmatpush2.msra.mxu0 %v1012
    %v1014 = vand.u32 %v432, 4294901760
    %v1015 = vsub.f32 %v432, %v1014
    %v1016 = vand.u32 %v1015, 4294901760
    %v1017 = vsub.f32 %v1015, %v1016
    %v1018 = vand.u32 %v1017, 4294901760
    %1019 = vmatprep.subr.mxu0 %v1018
    %v1020 = vand.u32 %v431, 4294901760
    %v1021 = vsub.f32 %v431, %v1020
    %v1022 = vand.u32 %v1021, 4294901760
    %v1023 = vsub.f32 %v1021, %v1022
    %v1024 = vand.u32 %v1023, 4294901760
    %1025 = vmatpush2.msra.mxu0 %v1024
    %v1026 = vand.u32 %v430, 4294901760
    %v1027 = vsub.f32 %v430, %v1026
    %v1028 = vand.u32 %v1027, 4294901760
    %v1029 = vsub.f32 %v1027, %v1028
    %v1030 = vand.u32 %v1029, 4294901760
    %1031 = vmatprep.subr.mxu0 %v1030
    %v1032 = vand.u32 %v429, 4294901760
    %v1033 = vsub.f32 %v429, %v1032
    %v1034 = vand.u32 %v1033, 4294901760
    %v1035 = vsub.f32 %v1033, %v1034
    %v1036 = vand.u32 %v1035, 4294901760
    %1037 = vmatpush2.msra.mxu0 %v1036
    %v1038 = vand.u32 %v428, 4294901760
    %v1039 = vsub.f32 %v428, %v1038
    %v1040 = vand.u32 %v1039, 4294901760
    %v1041 = vsub.f32 %v1039, %v1040
    %v1042 = vand.u32 %v1041, 4294901760
    %1043 = vmatprep.subr.mxu0 %v1042
    %v1044 = vand.u32 %v427, 4294901760
    %v1045 = vsub.f32 %v427, %v1044
    %v1046 = vand.u32 %v1045, 4294901760
    %v1047 = vsub.f32 %v1045, %v1046
    %v1048 = vand.u32 %v1047, 4294901760
    %1049 = vmatpush2.msra.mxu0 %v1048
    %v1050 = vand.u32 %v426, 4294901760
    %v1051 = vsub.f32 %v426, %v1050
    %v1052 = vand.u32 %v1051, 4294901760
    %v1053 = vsub.f32 %v1051, %v1052
    %v1054 = vand.u32 %v1053, 4294901760
    %1055 = vmatprep.subr.mxu0 %v1054
    %v1056 = vand.u32 %v425, 4294901760
    %v1057 = vsub.f32 %v425, %v1056
    %v1058 = vand.u32 %v1057, 4294901760
    %v1059 = vsub.f32 %v1057, %v1058
    %v1060 = vand.u32 %v1059, 4294901760
    %1061 = vmatpush2.msra.mxu0 %v1060
    %v1062 = vand.u32 %v390, 4294901760
    %1063 = vmatprep.mubr.f32.mxu0 %v1062
    %v1064 = vand.u32 %v389, 4294901760
    %1065 = vmatmul.mubr.f32.gmra.mxu0 %v1064
    %v1066 = vpop.f32.mrf.mxu0
    %v1067 = vadd.f32 %v674, %v1066
    %v1068 = vpop.f32.mrf.mxu0
    %v1069 = vadd.f32 %v676, %v1068
    %1070 = vdwg.mxu0
    %v1071 = vand.u32 %v424, 4294901760
    %v1072 = vsub.f32 %v424, %v1071
    %1073 = vmatprep.subr.mxu0 %v1072
    %v1074 = vand.u32 %v423, 4294901760
    %v1075 = vsub.f32 %v423, %v1074
    %1076 = vmatpush1.msra.mxu0 %v1075
    %v1077 = vand.u32 %v422, 4294901760
    %v1078 = vsub.f32 %v422, %v1077
    %1079 = vmatprep.subr.mxu0 %v1078
    %v1080 = vand.u32 %v421, 4294901760
    %v1081 = vsub.f32 %v421, %v1080
    %1082 = vmatpush1.msra.mxu0 %v1081
    %v1083 = vand.u32 %v420, 4294901760
    %v1084 = vsub.f32 %v420, %v1083
    %1085 = vmatprep.subr.mxu0 %v1084
    %v1086 = vand.u32 %v419, 4294901760
    %v1087 = vsub.f32 %v419, %v1086
    %1088 = vmatpush1.msra.mxu0 %v1087
    %v1089 = vand.u32 %v418, 4294901760
    %v1090 = vsub.f32 %v418, %v1089
    %1091 = vmatprep.subr.mxu0 %v1090
    %v1092 = vand.u32 %v417, 4294901760
    %v1093 = vsub.f32 %v417, %v1092
    %1094 = vmatpush1.msra.mxu0 %v1093
    %v1095 = vand.u32 %v416, 4294901760
    %v1096 = vsub.f32 %v416, %v1095
    %1097 = vmatprep.subr.mxu0 %v1096
    %v1098 = vand.u32 %v415, 4294901760
    %v1099 = vsub.f32 %v415, %v1098
    %1100 = vmatpush1.msra.mxu0 %v1099
    %v1101 = vand.u32 %v414, 4294901760
    %v1102 = vsub.f32 %v414, %v1101
    %1103 = vmatprep.subr.mxu0 %v1102
    %v1104 = vand.u32 %v413, 4294901760
    %v1105 = vsub.f32 %v413, %v1104
    %1106 = vmatpush1.msra.mxu0 %v1105
    %v1107 = vand.u32 %v412, 4294901760
    %v1108 = vsub.f32 %v412, %v1107
    %1109 = vmatprep.subr.mxu0 %v1108
    %v1110 = vand.u32 %v411, 4294901760
    %v1111 = vsub.f32 %v411, %v1110
    %1112 = vmatpush1.msra.mxu0 %v1111
    %v1113 = vand.u32 %v410, 4294901760
    %v1114 = vsub.f32 %v410, %v1113
    %1115 = vmatprep.subr.mxu0 %v1114
    %v1116 = vand.u32 %v409, 4294901760
    %v1117 = vsub.f32 %v409, %v1116
    %1118 = vmatpush1.msra.mxu0 %v1117
    %v1119 = vand.u32 %v408, 4294901760
    %v1120 = vsub.f32 %v408, %v1119
    %1121 = vmatprep.subr.mxu0 %v1120
    %v1122 = vand.u32 %v407, 4294901760
    %v1123 = vsub.f32 %v407, %v1122
    %1124 = vmatpush1.msra.mxu0 %v1123
    %v1125 = vand.u32 %v406, 4294901760
    %v1126 = vsub.f32 %v406, %v1125
    %1127 = vmatprep.subr.mxu0 %v1126
    %v1128 = vand.u32 %v405, 4294901760
    %v1129 = vsub.f32 %v405, %v1128
    %1130 = vmatpush1.msra.mxu0 %v1129
    %v1131 = vand.u32 %v404, 4294901760
    %v1132 = vsub.f32 %v404, %v1131
    %1133 = vmatprep.subr.mxu0 %v1132
    %v1134 = vand.u32 %v403, 4294901760
    %v1135 = vsub.f32 %v403, %v1134
    %1136 = vmatpush1.msra.mxu0 %v1135
    %v1137 = vand.u32 %v402, 4294901760
    %v1138 = vsub.f32 %v402, %v1137
    %1139 = vmatprep.subr.mxu0 %v1138
    %v1140 = vand.u32 %v401, 4294901760
    %v1141 = vsub.f32 %v401, %v1140
    %1142 = vmatpush1.msra.mxu0 %v1141
    %v1143 = vand.u32 %v400, 4294901760
    %v1144 = vsub.f32 %v400, %v1143
    %1145 = vmatprep.subr.mxu0 %v1144
    %v1146 = vand.u32 %v399, 4294901760
    %v1147 = vsub.f32 %v399, %v1146
    %1148 = vmatpush1.msra.mxu0 %v1147
    %v1149 = vand.u32 %v398, 4294901760
    %v1150 = vsub.f32 %v398, %v1149
    %1151 = vmatprep.subr.mxu0 %v1150
    %v1152 = vand.u32 %v397, 4294901760
    %v1153 = vsub.f32 %v397, %v1152
    %1154 = vmatpush1.msra.mxu0 %v1153
    %v1155 = vand.u32 %v396, 4294901760
    %v1156 = vsub.f32 %v396, %v1155
    %1157 = vmatprep.subr.mxu0 %v1156
    %v1158 = vand.u32 %v395, 4294901760
    %v1159 = vsub.f32 %v395, %v1158
    %1160 = vmatpush1.msra.mxu0 %v1159
    %v1161 = vand.u32 %v394, 4294901760
    %v1162 = vsub.f32 %v394, %v1161
    %1163 = vmatprep.subr.mxu0 %v1162
    %v1164 = vand.u32 %v393, 4294901760
    %v1165 = vsub.f32 %v393, %v1164
    %1166 = vmatpush1.msra.mxu0 %v1165
    %v1167 = vand.u32 %v456, 4294901760
    %v1168 = vsub.f32 %v456, %v1167
    %1169 = vmatprep.subr.mxu0 %v1168
    %v1170 = vand.u32 %v455, 4294901760
    %v1171 = vsub.f32 %v455, %v1170
    %1172 = vmatpush2.msra.mxu0 %v1171
    %v1173 = vand.u32 %v454, 4294901760
    %v1174 = vsub.f32 %v454, %v1173
    %1175 = vmatprep.subr.mxu0 %v1174
    %v1176 = vand.u32 %v453, 4294901760
    %v1177 = vsub.f32 %v453, %v1176
    %1178 = vmatpush2.msra.mxu0 %v1177
    %v1179 = vand.u32 %v452, 4294901760
    %v1180 = vsub.f32 %v452, %v1179
    %1181 = vmatprep.subr.mxu0 %v1180
    %v1182 = vand.u32 %v451, 4294901760
    %v1183 = vsub.f32 %v451, %v1182
    %1184 = vmatpush2.msra.mxu0 %v1183
    %v1185 = vand.u32 %v450, 4294901760
    %v1186 = vsub.f32 %v450, %v1185
    %1187 = vmatprep.subr.mxu0 %v1186
    %v1188 = vand.u32 %v449, 4294901760
    %v1189 = vsub.f32 %v449, %v1188
    %1190 = vmatpush2.msra.mxu0 %v1189
    %v1191 = vand.u32 %v448, 4294901760
    %v1192 = vsub.f32 %v448, %v1191
    %1193 = vmatprep.subr.mxu0 %v1192
    %v1194 = vand.u32 %v447, 4294901760
    %v1195 = vsub.f32 %v447, %v1194
    %1196 = vmatpush2.msra.mxu0 %v1195
    %v1197 = vand.u32 %v446, 4294901760
    %v1198 = vsub.f32 %v446, %v1197
    %1199 = vmatprep.subr.mxu0 %v1198
    %v1200 = vand.u32 %v445, 4294901760
    %v1201 = vsub.f32 %v445, %v1200
    %1202 = vmatpush2.msra.mxu0 %v1201
    %v1203 = vand.u32 %v444, 4294901760
    %v1204 = vsub.f32 %v444, %v1203
    %1205 = vmatprep.subr.mxu0 %v1204
    %v1206 = vand.u32 %v443, 4294901760
    %v1207 = vsub.f32 %v443, %v1206
    %1208 = vmatpush2.msra.mxu0 %v1207
    %v1209 = vand.u32 %v442, 4294901760
    %v1210 = vsub.f32 %v442, %v1209
    %1211 = vmatprep.subr.mxu0 %v1210
    %v1212 = vand.u32 %v441, 4294901760
    %v1213 = vsub.f32 %v441, %v1212
    %1214 = vmatpush2.msra.mxu0 %v1213
    %v1215 = vand.u32 %v440, 4294901760
    %v1216 = vsub.f32 %v440, %v1215
    %1217 = vmatprep.subr.mxu0 %v1216
    %v1218 = vand.u32 %v439, 4294901760
    %v1219 = vsub.f32 %v439, %v1218
    %1220 = vmatpush2.msra.mxu0 %v1219
    %v1221 = vand.u32 %v438, 4294901760
    %v1222 = vsub.f32 %v438, %v1221
    %1223 = vmatprep.subr.mxu0 %v1222
    %v1224 = vand.u32 %v437, 4294901760
    %v1225 = vsub.f32 %v437, %v1224
    %1226 = vmatpush2.msra.mxu0 %v1225
    %v1227 = vand.u32 %v436, 4294901760
    %v1228 = vsub.f32 %v436, %v1227
    %1229 = vmatprep.subr.mxu0 %v1228
    %v1230 = vand.u32 %v435, 4294901760
    %v1231 = vsub.f32 %v435, %v1230
    %1232 = vmatpush2.msra.mxu0 %v1231
    %v1233 = vand.u32 %v434, 4294901760
    %v1234 = vsub.f32 %v434, %v1233
    %1235 = vmatprep.subr.mxu0 %v1234
    %v1236 = vand.u32 %v433, 4294901760
    %v1237 = vsub.f32 %v433, %v1236
    %1238 = vmatpush2.msra.mxu0 %v1237
    %v1239 = vand.u32 %v432, 4294901760
    %v1240 = vsub.f32 %v432, %v1239
    %1241 = vmatprep.subr.mxu0 %v1240
    %v1242 = vand.u32 %v431, 4294901760
    %v1243 = vsub.f32 %v431, %v1242
    %1244 = vmatpush2.msra.mxu0 %v1243
    %v1245 = vand.u32 %v430, 4294901760
    %v1246 = vsub.f32 %v430, %v1245
    %1247 = vmatprep.subr.mxu0 %v1246
    %v1248 = vand.u32 %v429, 4294901760
    %v1249 = vsub.f32 %v429, %v1248
    %1250 = vmatpush2.msra.mxu0 %v1249
    %v1251 = vand.u32 %v428, 4294901760
    %v1252 = vsub.f32 %v428, %v1251
    %1253 = vmatprep.subr.mxu0 %v1252
    %v1254 = vand.u32 %v427, 4294901760
    %v1255 = vsub.f32 %v427, %v1254
    %1256 = vmatpush2.msra.mxu0 %v1255
    %v1257 = vand.u32 %v426, 4294901760
    %v1258 = vsub.f32 %v426, %v1257
    %1259 = vmatprep.subr.mxu0 %v1258
    %v1260 = vand.u32 %v425, 4294901760
    %v1261 = vsub.f32 %v425, %v1260
    %1262 = vmatpush2.msra.mxu0 %v1261
    %v1263 = vand.u32 %v390, 4294901760
    %v1264 = vsub.f32 %v390, %v1263
    %1265 = vmatprep.mubr.f32.mxu0 %v1264
    %v1266 = vand.u32 %v389, 4294901760
    %v1267 = vsub.f32 %v389, %v1266
    %1268 = vmatmul.mubr.f32.gmra.mxu0 %v1267
    %v1269 = vpop.f32.mrf.mxu0
    %v1270 = vadd.f32 %v1067, %v1269
    %v1271 = vpop.f32.mrf.mxu0
    %v1272 = vadd.f32 %v1069, %v1271
    %1273 = vdwg.mxu0
    %v1274 = vand.u32 %v424, 4294901760
    %1275 = vmatprep.subr.mxu0 %v1274
    %v1276 = vand.u32 %v423, 4294901760
    %1277 = vmatpush1.msra.mxu0 %v1276
    %v1278 = vand.u32 %v422, 4294901760
    %1279 = vmatprep.subr.mxu0 %v1278
    %v1280 = vand.u32 %v421, 4294901760
    %1281 = vmatpush1.msra.mxu0 %v1280
    %v1282 = vand.u32 %v420, 4294901760
    %1283 = vmatprep.subr.mxu0 %v1282
    %v1284 = vand.u32 %v419, 4294901760
    %1285 = vmatpush1.msra.mxu0 %v1284
    %v1286 = vand.u32 %v418, 4294901760
    %1287 = vmatprep.subr.mxu0 %v1286
    %v1288 = vand.u32 %v417, 4294901760
    %1289 = vmatpush1.msra.mxu0 %v1288
    %v1290 = vand.u32 %v416, 4294901760
    %1291 = vmatprep.subr.mxu0 %v1290
    %v1292 = vand.u32 %v415, 4294901760
    %1293 = vmatpush1.msra.mxu0 %v1292
    %v1294 = vand.u32 %v414, 4294901760
    %1295 = vmatprep.subr.mxu0 %v1294
    %v1296 = vand.u32 %v413, 4294901760
    %1297 = vmatpush1.msra.mxu0 %v1296
    %v1298 = vand.u32 %v412, 4294901760
    %1299 = vmatprep.subr.mxu0 %v1298
    %v1300 = vand.u32 %v411, 4294901760
    %1301 = vmatpush1.msra.mxu0 %v1300
    %v1302 = vand.u32 %v410, 4294901760
    %1303 = vmatprep.subr.mxu0 %v1302
    %v1304 = vand.u32 %v409, 4294901760
    %1305 = vmatpush1.msra.mxu0 %v1304
    %v1306 = vand.u32 %v408, 4294901760
    %1307 = vmatprep.subr.mxu0 %v1306
    %v1308 = vand.u32 %v407, 4294901760
    %1309 = vmatpush1.msra.mxu0 %v1308
    %v1310 = vand.u32 %v406, 4294901760
    %1311 = vmatprep.subr.mxu0 %v1310
    %v1312 = vand.u32 %v405, 4294901760
    %1313 = vmatpush1.msra.mxu0 %v1312
    %v1314 = vand.u32 %v404, 4294901760
    %1315 = vmatprep.subr.mxu0 %v1314
    %v1316 = vand.u32 %v403, 4294901760
    %1317 = vmatpush1.msra.mxu0 %v1316
    %v1318 = vand.u32 %v402, 4294901760
    %1319 = vmatprep.subr.mxu0 %v1318
    %v1320 = vand.u32 %v401, 4294901760
    %1321 = vmatpush1.msra.mxu0 %v1320
    %v1322 = vand.u32 %v400, 4294901760
    %1323 = vmatprep.subr.mxu0 %v1322
    %v1324 = vand.u32 %v399, 4294901760
    %1325 = vmatpush1.msra.mxu0 %v1324
    %v1326 = vand.u32 %v398, 4294901760
    %1327 = vmatprep.subr.mxu0 %v1326
    %v1328 = vand.u32 %v397, 4294901760
    %1329 = vmatpush1.msra.mxu0 %v1328
    %v1330 = vand.u32 %v396, 4294901760
    %1331 = vmatprep.subr.mxu0 %v1330
    %v1332 = vand.u32 %v395, 4294901760
    %1333 = vmatpush1.msra.mxu0 %v1332
    %v1334 = vand.u32 %v394, 4294901760
    %1335 = vmatprep.subr.mxu0 %v1334
    %v1336 = vand.u32 %v393, 4294901760
    %1337 = vmatpush1.msra.mxu0 %v1336
    %v1338 = vand.u32 %v456, 4294901760
    %1339 = vmatprep.subr.mxu0 %v1338
    %v1340 = vand.u32 %v455, 4294901760
    %1341 = vmatpush2.msra.mxu0 %v1340
    %v1342 = vand.u32 %v454, 4294901760
    %1343 = vmatprep.subr.mxu0 %v1342
    %v1344 = vand.u32 %v453, 4294901760
    %1345 = vmatpush2.msra.mxu0 %v1344
    %v1346 = vand.u32 %v452, 4294901760
    %1347 = vmatprep.subr.mxu0 %v1346
    %v1348 = vand.u32 %v451, 4294901760
    %1349 = vmatpush2.msra.mxu0 %v1348
    %v1350 = vand.u32 %v450, 4294901760
    %1351 = vmatprep.subr.mxu0 %v1350
    %v1352 = vand.u32 %v449, 4294901760
    %1353 = vmatpush2.msra.mxu0 %v1352
    %v1354 = vand.u32 %v448, 4294901760
    %1355 = vmatprep.subr.mxu0 %v1354
    %v1356 = vand.u32 %v447, 4294901760
    %1357 = vmatpush2.msra.mxu0 %v1356
    %v1358 = vand.u32 %v446, 4294901760
    %1359 = vmatprep.subr.mxu0 %v1358
    %v1360 = vand.u32 %v445, 4294901760
    %1361 = vmatpush2.msra.mxu0 %v1360
    %v1362 = vand.u32 %v444, 4294901760
    %1363 = vmatprep.subr.mxu0 %v1362
    %v1364 = vand.u32 %v443, 4294901760
    %1365 = vmatpush2.msra.mxu0 %v1364
    %v1366 = vand.u32 %v442, 4294901760
    %1367 = vmatprep.subr.mxu0 %v1366
    %v1368 = vand.u32 %v441, 4294901760
    %1369 = vmatpush2.msra.mxu0 %v1368
    %v1370 = vand.u32 %v440, 4294901760
    %1371 = vmatprep.subr.mxu0 %v1370
    %v1372 = vand.u32 %v439, 4294901760
    %1373 = vmatpush2.msra.mxu0 %v1372
    %v1374 = vand.u32 %v438, 4294901760
    %1375 = vmatprep.subr.mxu0 %v1374
    %v1376 = vand.u32 %v437, 4294901760
    %1377 = vmatpush2.msra.mxu0 %v1376
    %v1378 = vand.u32 %v436, 4294901760
    %1379 = vmatprep.subr.mxu0 %v1378
    %v1380 = vand.u32 %v435, 4294901760
    %1381 = vmatpush2.msra.mxu0 %v1380
    %v1382 = vand.u32 %v434, 4294901760
    %1383 = vmatprep.subr.mxu0 %v1382
    %v1384 = vand.u32 %v433, 4294901760
    %1385 = vmatpush2.msra.mxu0 %v1384
    %v1386 = vand.u32 %v432, 4294901760
    %1387 = vmatprep.subr.mxu0 %v1386
    %v1388 = vand.u32 %v431, 4294901760
    %1389 = vmatpush2.msra.mxu0 %v1388
    %v1390 = vand.u32 %v430, 4294901760
    %1391 = vmatprep.subr.mxu0 %v1390
    %v1392 = vand.u32 %v429, 4294901760
    %1393 = vmatpush2.msra.mxu0 %v1392
    %v1394 = vand.u32 %v428, 4294901760
    %1395 = vmatprep.subr.mxu0 %v1394
    %v1396 = vand.u32 %v427, 4294901760
    %1397 = vmatpush2.msra.mxu0 %v1396
    %v1398 = vand.u32 %v426, 4294901760
    %1399 = vmatprep.subr.mxu0 %v1398
    %v1400 = vand.u32 %v425, 4294901760
    %1401 = vmatpush2.msra.mxu0 %v1400
    %v1402 = vand.u32 %v390, 4294901760
    %v1403 = vsub.f32 %v390, %v1402
    %v1404 = vand.u32 %v1403, 4294901760
    %1405 = vmatprep.mubr.f32.mxu0 %v1404
    %v1406 = vand.u32 %v389, 4294901760
    %v1407 = vsub.f32 %v389, %v1406
    %v1408 = vand.u32 %v1407, 4294901760
    %1409 = vmatmul.mubr.f32.gmra.mxu0 %v1408
    %v1410 = vpop.f32.mrf.mxu0
    %v1411 = vadd.f32 %v1270, %v1410
    %v1412 = vpop.f32.mrf.mxu0
    %v1413 = vadd.f32 %v1272, %v1412
    %1414 = vdwg.mxu0
    %v1415 = vand.u32 %v424, 4294901760
    %v1416 = vsub.f32 %v424, %v1415
    %v1417 = vand.u32 %v1416, 4294901760
    %1418 = vmatprep.subr.mxu0 %v1417
    %v1419 = vand.u32 %v423, 4294901760
    %v1420 = vsub.f32 %v423, %v1419
    %v1421 = vand.u32 %v1420, 4294901760
    %1422 = vmatpush1.msra.mxu0 %v1421
    %v1423 = vand.u32 %v422, 4294901760
    %v1424 = vsub.f32 %v422, %v1423
    %v1425 = vand.u32 %v1424, 4294901760
    %1426 = vmatprep.subr.mxu0 %v1425
    %v1427 = vand.u32 %v421, 4294901760
    %v1428 = vsub.f32 %v421, %v1427
    %v1429 = vand.u32 %v1428, 4294901760
    %1430 = vmatpush1.msra.mxu0 %v1429
    %v1431 = vand.u32 %v420, 4294901760
    %v1432 = vsub.f32 %v420, %v1431
    %v1433 = vand.u32 %v1432, 4294901760
    %1434 = vmatprep.subr.mxu0 %v1433
    %v1435 = vand.u32 %v419, 4294901760
    %v1436 = vsub.f32 %v419, %v1435
    %v1437 = vand.u32 %v1436, 4294901760
    %1438 = vmatpush1.msra.mxu0 %v1437
    %v1439 = vand.u32 %v418, 4294901760
    %v1440 = vsub.f32 %v418, %v1439
    %v1441 = vand.u32 %v1440, 4294901760
    %1442 = vmatprep.subr.mxu0 %v1441
    %v1443 = vand.u32 %v417, 4294901760
    %v1444 = vsub.f32 %v417, %v1443
    %v1445 = vand.u32 %v1444, 4294901760
    %1446 = vmatpush1.msra.mxu0 %v1445
    %v1447 = vand.u32 %v416, 4294901760
    %v1448 = vsub.f32 %v416, %v1447
    %v1449 = vand.u32 %v1448, 4294901760
    %1450 = vmatprep.subr.mxu0 %v1449
    %v1451 = vand.u32 %v415, 4294901760
    %v1452 = vsub.f32 %v415, %v1451
    %v1453 = vand.u32 %v1452, 4294901760
    %1454 = vmatpush1.msra.mxu0 %v1453
    %v1455 = vand.u32 %v414, 4294901760
    %v1456 = vsub.f32 %v414, %v1455
    %v1457 = vand.u32 %v1456, 4294901760
    %1458 = vmatprep.subr.mxu0 %v1457
    %v1459 = vand.u32 %v413, 4294901760
    %v1460 = vsub.f32 %v413, %v1459
    %v1461 = vand.u32 %v1460, 4294901760
    %1462 = vmatpush1.msra.mxu0 %v1461
    %v1463 = vand.u32 %v412, 4294901760
    %v1464 = vsub.f32 %v412, %v1463
    %v1465 = vand.u32 %v1464, 4294901760
    %1466 = vmatprep.subr.mxu0 %v1465
    %v1467 = vand.u32 %v411, 4294901760
    %v1468 = vsub.f32 %v411, %v1467
    %v1469 = vand.u32 %v1468, 4294901760
    %1470 = vmatpush1.msra.mxu0 %v1469
    %v1471 = vand.u32 %v410, 4294901760
    %v1472 = vsub.f32 %v410, %v1471
    %v1473 = vand.u32 %v1472, 4294901760
    %1474 = vmatprep.subr.mxu0 %v1473
    %v1475 = vand.u32 %v409, 4294901760
    %v1476 = vsub.f32 %v409, %v1475
    %v1477 = vand.u32 %v1476, 4294901760
    %1478 = vmatpush1.msra.mxu0 %v1477
    %v1479 = vand.u32 %v408, 4294901760
    %v1480 = vsub.f32 %v408, %v1479
    %v1481 = vand.u32 %v1480, 4294901760
    %1482 = vmatprep.subr.mxu0 %v1481
    %v1483 = vand.u32 %v407, 4294901760
    %v1484 = vsub.f32 %v407, %v1483
    %v1485 = vand.u32 %v1484, 4294901760
    %1486 = vmatpush1.msra.mxu0 %v1485
    %v1487 = vand.u32 %v406, 4294901760
    %v1488 = vsub.f32 %v406, %v1487
    %v1489 = vand.u32 %v1488, 4294901760
    %1490 = vmatprep.subr.mxu0 %v1489
    %v1491 = vand.u32 %v405, 4294901760
    %v1492 = vsub.f32 %v405, %v1491
    %v1493 = vand.u32 %v1492, 4294901760
    %1494 = vmatpush1.msra.mxu0 %v1493
    %v1495 = vand.u32 %v404, 4294901760
    %v1496 = vsub.f32 %v404, %v1495
    %v1497 = vand.u32 %v1496, 4294901760
    %1498 = vmatprep.subr.mxu0 %v1497
    %v1499 = vand.u32 %v403, 4294901760
    %v1500 = vsub.f32 %v403, %v1499
    %v1501 = vand.u32 %v1500, 4294901760
    %1502 = vmatpush1.msra.mxu0 %v1501
    %v1503 = vand.u32 %v402, 4294901760
    %v1504 = vsub.f32 %v402, %v1503
    %v1505 = vand.u32 %v1504, 4294901760
    %1506 = vmatprep.subr.mxu0 %v1505
    %v1507 = vand.u32 %v401, 4294901760
    %v1508 = vsub.f32 %v401, %v1507
    %v1509 = vand.u32 %v1508, 4294901760
    %1510 = vmatpush1.msra.mxu0 %v1509
    %v1511 = vand.u32 %v400, 4294901760
    %v1512 = vsub.f32 %v400, %v1511
    %v1513 = vand.u32 %v1512, 4294901760
    %1514 = vmatprep.subr.mxu0 %v1513
    %v1515 = vand.u32 %v399, 4294901760
    %v1516 = vsub.f32 %v399, %v1515
    %v1517 = vand.u32 %v1516, 4294901760
    %1518 = vmatpush1.msra.mxu0 %v1517
    %v1519 = vand.u32 %v398, 4294901760
    %v1520 = vsub.f32 %v398, %v1519
    %v1521 = vand.u32 %v1520, 4294901760
    %1522 = vmatprep.subr.mxu0 %v1521
    %v1523 = vand.u32 %v397, 4294901760
    %v1524 = vsub.f32 %v397, %v1523
    %v1525 = vand.u32 %v1524, 4294901760
    %1526 = vmatpush1.msra.mxu0 %v1525
    %v1527 = vand.u32 %v396, 4294901760
    %v1528 = vsub.f32 %v396, %v1527
    %v1529 = vand.u32 %v1528, 4294901760
    %1530 = vmatprep.subr.mxu0 %v1529
    %v1531 = vand.u32 %v395, 4294901760
    %v1532 = vsub.f32 %v395, %v1531
    %v1533 = vand.u32 %v1532, 4294901760
    %1534 = vmatpush1.msra.mxu0 %v1533
    %v1535 = vand.u32 %v394, 4294901760
    %v1536 = vsub.f32 %v394, %v1535
    %v1537 = vand.u32 %v1536, 4294901760
    %1538 = vmatprep.subr.mxu0 %v1537
    %v1539 = vand.u32 %v393, 4294901760
    %v1540 = vsub.f32 %v393, %v1539
    %v1541 = vand.u32 %v1540, 4294901760
    %1542 = vmatpush1.msra.mxu0 %v1541
    %v1543 = vand.u32 %v456, 4294901760
    %v1544 = vsub.f32 %v456, %v1543
    %v1545 = vand.u32 %v1544, 4294901760
    %1546 = vmatprep.subr.mxu0 %v1545
    %v1547 = vand.u32 %v455, 4294901760
    %v1548 = vsub.f32 %v455, %v1547
    %v1549 = vand.u32 %v1548, 4294901760
    %1550 = vmatpush2.msra.mxu0 %v1549
    %v1551 = vand.u32 %v454, 4294901760
    %v1552 = vsub.f32 %v454, %v1551
    %v1553 = vand.u32 %v1552, 4294901760
    %1554 = vmatprep.subr.mxu0 %v1553
    %v1555 = vand.u32 %v453, 4294901760
    %v1556 = vsub.f32 %v453, %v1555
    %v1557 = vand.u32 %v1556, 4294901760
    %1558 = vmatpush2.msra.mxu0 %v1557
    %v1559 = vand.u32 %v452, 4294901760
    %v1560 = vsub.f32 %v452, %v1559
    %v1561 = vand.u32 %v1560, 4294901760
    %1562 = vmatprep.subr.mxu0 %v1561
    %v1563 = vand.u32 %v451, 4294901760
    %v1564 = vsub.f32 %v451, %v1563
    %v1565 = vand.u32 %v1564, 4294901760
    %1566 = vmatpush2.msra.mxu0 %v1565
    %v1567 = vand.u32 %v450, 4294901760
    %v1568 = vsub.f32 %v450, %v1567
    %v1569 = vand.u32 %v1568, 4294901760
    %1570 = vmatprep.subr.mxu0 %v1569
    %v1571 = vand.u32 %v449, 4294901760
    %v1572 = vsub.f32 %v449, %v1571
    %v1573 = vand.u32 %v1572, 4294901760
    %1574 = vmatpush2.msra.mxu0 %v1573
    %v1575 = vand.u32 %v448, 4294901760
    %v1576 = vsub.f32 %v448, %v1575
    %v1577 = vand.u32 %v1576, 4294901760
    %1578 = vmatprep.subr.mxu0 %v1577
    %v1579 = vand.u32 %v447, 4294901760
    %v1580 = vsub.f32 %v447, %v1579
    %v1581 = vand.u32 %v1580, 4294901760
    %1582 = vmatpush2.msra.mxu0 %v1581
    %v1583 = vand.u32 %v446, 4294901760
    %v1584 = vsub.f32 %v446, %v1583
    %v1585 = vand.u32 %v1584, 4294901760
    %1586 = vmatprep.subr.mxu0 %v1585
    %v1587 = vand.u32 %v445, 4294901760
    %v1588 = vsub.f32 %v445, %v1587
    %v1589 = vand.u32 %v1588, 4294901760
    %1590 = vmatpush2.msra.mxu0 %v1589
    %v1591 = vand.u32 %v444, 4294901760
    %v1592 = vsub.f32 %v444, %v1591
    %v1593 = vand.u32 %v1592, 4294901760
    %1594 = vmatprep.subr.mxu0 %v1593
    %v1595 = vand.u32 %v443, 4294901760
    %v1596 = vsub.f32 %v443, %v1595
    %v1597 = vand.u32 %v1596, 4294901760
    %1598 = vmatpush2.msra.mxu0 %v1597
    %v1599 = vand.u32 %v442, 4294901760
    %v1600 = vsub.f32 %v442, %v1599
    %v1601 = vand.u32 %v1600, 4294901760
    %1602 = vmatprep.subr.mxu0 %v1601
    %v1603 = vand.u32 %v441, 4294901760
    %v1604 = vsub.f32 %v441, %v1603
    %v1605 = vand.u32 %v1604, 4294901760
    %1606 = vmatpush2.msra.mxu0 %v1605
    %v1607 = vand.u32 %v440, 4294901760
    %v1608 = vsub.f32 %v440, %v1607
    %v1609 = vand.u32 %v1608, 4294901760
    %1610 = vmatprep.subr.mxu0 %v1609
    %v1611 = vand.u32 %v439, 4294901760
    %v1612 = vsub.f32 %v439, %v1611
    %v1613 = vand.u32 %v1612, 4294901760
    %1614 = vmatpush2.msra.mxu0 %v1613
    %v1615 = vand.u32 %v438, 4294901760
    %v1616 = vsub.f32 %v438, %v1615
    %v1617 = vand.u32 %v1616, 4294901760
    %1618 = vmatprep.subr.mxu0 %v1617
    %v1619 = vand.u32 %v437, 4294901760
    %v1620 = vsub.f32 %v437, %v1619
    %v1621 = vand.u32 %v1620, 4294901760
    %1622 = vmatpush2.msra.mxu0 %v1621
    %v1623 = vand.u32 %v436, 4294901760
    %v1624 = vsub.f32 %v436, %v1623
    %v1625 = vand.u32 %v1624, 4294901760
    %1626 = vmatprep.subr.mxu0 %v1625
    %v1627 = vand.u32 %v435, 4294901760
    %v1628 = vsub.f32 %v435, %v1627
    %v1629 = vand.u32 %v1628, 4294901760
    %1630 = vmatpush2.msra.mxu0 %v1629
    %v1631 = vand.u32 %v434, 4294901760
    %v1632 = vsub.f32 %v434, %v1631
    %v1633 = vand.u32 %v1632, 4294901760
    %1634 = vmatprep.subr.mxu0 %v1633
    %v1635 = vand.u32 %v433, 4294901760
    %v1636 = vsub.f32 %v433, %v1635
    %v1637 = vand.u32 %v1636, 4294901760
    %1638 = vmatpush2.msra.mxu0 %v1637
    %v1639 = vand.u32 %v432, 4294901760
    %v1640 = vsub.f32 %v432, %v1639
    %v1641 = vand.u32 %v1640, 4294901760
    %1642 = vmatprep.subr.mxu0 %v1641
    %v1643 = vand.u32 %v431, 4294901760
    %v1644 = vsub.f32 %v431, %v1643
    %v1645 = vand.u32 %v1644, 4294901760
    %1646 = vmatpush2.msra.mxu0 %v1645
    %v1647 = vand.u32 %v430, 4294901760
    %v1648 = vsub.f32 %v430, %v1647
    %v1649 = vand.u32 %v1648, 4294901760
    %1650 = vmatprep.subr.mxu0 %v1649
    %v1651 = vand.u32 %v429, 4294901760
    %v1652 = vsub.f32 %v429, %v1651
    %v1653 = vand.u32 %v1652, 4294901760
    %1654 = vmatpush2.msra.mxu0 %v1653
    %v1655 = vand.u32 %v428, 4294901760
    %v1656 = vsub.f32 %v428, %v1655
    %v1657 = vand.u32 %v1656, 4294901760
    %1658 = vmatprep.subr.mxu0 %v1657
    %v1659 = vand.u32 %v427, 4294901760
    %v1660 = vsub.f32 %v427, %v1659
    %v1661 = vand.u32 %v1660, 4294901760
    %1662 = vmatpush2.msra.mxu0 %v1661
    %v1663 = vand.u32 %v426, 4294901760
    %v1664 = vsub.f32 %v426, %v1663
    %v1665 = vand.u32 %v1664, 4294901760
    %1666 = vmatprep.subr.mxu0 %v1665
    %v1667 = vand.u32 %v425, 4294901760
    %v1668 = vsub.f32 %v425, %v1667
    %v1669 = vand.u32 %v1668, 4294901760
    %1670 = vmatpush2.msra.mxu0 %v1669
    %v1671 = vand.u32 %v390, 4294901760
    %1672 = vmatprep.mubr.f32.mxu0 %v1671
    %v1673 = vand.u32 %v389, 4294901760
    %1674 = vmatmul.mubr.f32.gmra.mxu0 %v1673
    %v1675 = vpop.f32.mrf.mxu0
    %v1676 = vadd.f32 %v1411, %v1675
    %v1677 = vpop.f32.mrf.mxu0
    %v1678 = vadd.f32 %v1413, %v1677
    %1679 = vdwg.mxu0
    %v1680 = vand.u32 %v424, 4294901760
    %1681 = vmatprep.subr.mxu0 %v1680
    %v1682 = vand.u32 %v423, 4294901760
    %1683 = vmatpush1.msra.mxu0 %v1682
    %v1684 = vand.u32 %v422, 4294901760
    %1685 = vmatprep.subr.mxu0 %v1684
    %v1686 = vand.u32 %v421, 4294901760
    %1687 = vmatpush1.msra.mxu0 %v1686
    %v1688 = vand.u32 %v420, 4294901760
    %1689 = vmatprep.subr.mxu0 %v1688
    %v1690 = vand.u32 %v419, 4294901760
    %1691 = vmatpush1.msra.mxu0 %v1690
    %v1692 = vand.u32 %v418, 4294901760
    %1693 = vmatprep.subr.mxu0 %v1692
    %v1694 = vand.u32 %v417, 4294901760
    %1695 = vmatpush1.msra.mxu0 %v1694
    %v1696 = vand.u32 %v416, 4294901760
    %1697 = vmatprep.subr.mxu0 %v1696
    %v1698 = vand.u32 %v415, 4294901760
    %1699 = vmatpush1.msra.mxu0 %v1698
    %v1700 = vand.u32 %v414, 4294901760
    %1701 = vmatprep.subr.mxu0 %v1700
    %v1702 = vand.u32 %v413, 4294901760
    %1703 = vmatpush1.msra.mxu0 %v1702
    %v1704 = vand.u32 %v412, 4294901760
    %1705 = vmatprep.subr.mxu0 %v1704
    %v1706 = vand.u32 %v411, 4294901760
    %1707 = vmatpush1.msra.mxu0 %v1706
    %v1708 = vand.u32 %v410, 4294901760
    %1709 = vmatprep.subr.mxu0 %v1708
    %v1710 = vand.u32 %v409, 4294901760
    %1711 = vmatpush1.msra.mxu0 %v1710
    %v1712 = vand.u32 %v408, 4294901760
    %1713 = vmatprep.subr.mxu0 %v1712
    %v1714 = vand.u32 %v407, 4294901760
    %1715 = vmatpush1.msra.mxu0 %v1714
    %v1716 = vand.u32 %v406, 4294901760
    %1717 = vmatprep.subr.mxu0 %v1716
    %v1718 = vand.u32 %v405, 4294901760
    %1719 = vmatpush1.msra.mxu0 %v1718
    %v1720 = vand.u32 %v404, 4294901760
    %1721 = vmatprep.subr.mxu0 %v1720
    %v1722 = vand.u32 %v403, 4294901760
    %1723 = vmatpush1.msra.mxu0 %v1722
    %v1724 = vand.u32 %v402, 4294901760
    %1725 = vmatprep.subr.mxu0 %v1724
    %v1726 = vand.u32 %v401, 4294901760
    %1727 = vmatpush1.msra.mxu0 %v1726
    %v1728 = vand.u32 %v400, 4294901760
    %1729 = vmatprep.subr.mxu0 %v1728
    %v1730 = vand.u32 %v399, 4294901760
    %1731 = vmatpush1.msra.mxu0 %v1730
    %v1732 = vand.u32 %v398, 4294901760
    %1733 = vmatprep.subr.mxu0 %v1732
    %v1734 = vand.u32 %v397, 4294901760
    %1735 = vmatpush1.msra.mxu0 %v1734
    %v1736 = vand.u32 %v396, 4294901760
    %1737 = vmatprep.subr.mxu0 %v1736
    %v1738 = vand.u32 %v395, 4294901760
    %1739 = vmatpush1.msra.mxu0 %v1738
    %v1740 = vand.u32 %v394, 4294901760
    %1741 = vmatprep.subr.mxu0 %v1740
    %v1742 = vand.u32 %v393, 4294901760
    %1743 = vmatpush1.msra.mxu0 %v1742
    %v1744 = vand.u32 %v456, 4294901760
    %1745 = vmatprep.subr.mxu0 %v1744
    %v1746 = vand.u32 %v455, 4294901760
    %1747 = vmatpush2.msra.mxu0 %v1746
    %v1748 = vand.u32 %v454, 4294901760
    %1749 = vmatprep.subr.mxu0 %v1748
    %v1750 = vand.u32 %v453, 4294901760
    %1751 = vmatpush2.msra.mxu0 %v1750
    %v1752 = vand.u32 %v452, 4294901760
    %1753 = vmatprep.subr.mxu0 %v1752
    %v1754 = vand.u32 %v451, 4294901760
    %1755 = vmatpush2.msra.mxu0 %v1754
    %v1756 = vand.u32 %v450, 4294901760
    %1757 = vmatprep.subr.mxu0 %v1756
    %v1758 = vand.u32 %v449, 4294901760
    %1759 = vmatpush2.msra.mxu0 %v1758
    %v1760 = vand.u32 %v448, 4294901760
    %1761 = vmatprep.subr.mxu0 %v1760
    %v1762 = vand.u32 %v447, 4294901760
    %1763 = vmatpush2.msra.mxu0 %v1762
    %v1764 = vand.u32 %v446, 4294901760
    %1765 = vmatprep.subr.mxu0 %v1764
    %v1766 = vand.u32 %v445, 4294901760
    %1767 = vmatpush2.msra.mxu0 %v1766
    %v1768 = vand.u32 %v444, 4294901760
    %1769 = vmatprep.subr.mxu0 %v1768
    %v1770 = vand.u32 %v443, 4294901760
    %1771 = vmatpush2.msra.mxu0 %v1770
    %v1772 = vand.u32 %v442, 4294901760
    %1773 = vmatprep.subr.mxu0 %v1772
    %v1774 = vand.u32 %v441, 4294901760
    %1775 = vmatpush2.msra.mxu0 %v1774
    %v1776 = vand.u32 %v440, 4294901760
    %1777 = vmatprep.subr.mxu0 %v1776
    %v1778 = vand.u32 %v439, 4294901760
    %1779 = vmatpush2.msra.mxu0 %v1778
    %v1780 = vand.u32 %v438, 4294901760
    %1781 = vmatprep.subr.mxu0 %v1780
    %v1782 = vand.u32 %v437, 4294901760
    %1783 = vmatpush2.msra.mxu0 %v1782
    %v1784 = vand.u32 %v436, 4294901760
    %1785 = vmatprep.subr.mxu0 %v1784
    %v1786 = vand.u32 %v435, 4294901760
    %1787 = vmatpush2.msra.mxu0 %v1786
    %v1788 = vand.u32 %v434, 4294901760
    %1789 = vmatprep.subr.mxu0 %v1788
    %v1790 = vand.u32 %v433, 4294901760
    %1791 = vmatpush2.msra.mxu0 %v1790
    %v1792 = vand.u32 %v432, 4294901760
    %1793 = vmatprep.subr.mxu0 %v1792
    %v1794 = vand.u32 %v431, 4294901760
    %1795 = vmatpush2.msra.mxu0 %v1794
    %v1796 = vand.u32 %v430, 4294901760
    %1797 = vmatprep.subr.mxu0 %v1796
    %v1798 = vand.u32 %v429, 4294901760
    %1799 = vmatpush2.msra.mxu0 %v1798
    %v1800 = vand.u32 %v428, 4294901760
    %1801 = vmatprep.subr.mxu0 %v1800
    %v1802 = vand.u32 %v427, 4294901760
    %1803 = vmatpush2.msra.mxu0 %v1802
    %v1804 = vand.u32 %v426, 4294901760
    %1805 = vmatprep.subr.mxu0 %v1804
    %v1806 = vand.u32 %v425, 4294901760
    %1807 = vmatpush2.msra.mxu0 %v1806
    %v1808 = vand.u32 %v390, 4294901760
    %1809 = vmatprep.mubr.f32.mxu0 %v1808
    %v1810 = vand.u32 %v389, 4294901760
    %1811 = vmatmul.mubr.f32.gmra.mxu0 %v1810
    %v1812 = vpop.f32.mrf.mxu0
    %v1813 = vadd.f32 %v1676, %v1812
    %v1814 = vpop.f32.mrf.mxu0
    %v1815 = vadd.f32 %v1678, %v1814
    %1816 = vdwg.mxu0
    %v1817 = vand.u32 %v488, 4294901760
    %1818 = vmatprep.subr.mxu0 %v1817
    %v1819 = vand.u32 %v487, 4294901760
    %1820 = vmatpush1.msra.mxu0 %v1819
    %v1821 = vand.u32 %v486, 4294901760
    %1822 = vmatprep.subr.mxu0 %v1821
    %v1823 = vand.u32 %v485, 4294901760
    %1824 = vmatpush1.msra.mxu0 %v1823
    %v1825 = vand.u32 %v484, 4294901760
    %1826 = vmatprep.subr.mxu0 %v1825
    %v1827 = vand.u32 %v483, 4294901760
    %1828 = vmatpush1.msra.mxu0 %v1827
    %v1829 = vand.u32 %v482, 4294901760
    %1830 = vmatprep.subr.mxu0 %v1829
    %v1831 = vand.u32 %v481, 4294901760
    %1832 = vmatpush1.msra.mxu0 %v1831
    %v1833 = vand.u32 %v480, 4294901760
    %1834 = vmatprep.subr.mxu0 %v1833
    %v1835 = vand.u32 %v479, 4294901760
    %1836 = vmatpush1.msra.mxu0 %v1835
    %v1837 = vand.u32 %v478, 4294901760
    %1838 = vmatprep.subr.mxu0 %v1837
    %v1839 = vand.u32 %v477, 4294901760
    %1840 = vmatpush1.msra.mxu0 %v1839
    %v1841 = vand.u32 %v476, 4294901760
    %1842 = vmatprep.subr.mxu0 %v1841
    %v1843 = vand.u32 %v475, 4294901760
    %1844 = vmatpush1.msra.mxu0 %v1843
    %v1845 = vand.u32 %v474, 4294901760
    %1846 = vmatprep.subr.mxu0 %v1845
    %v1847 = vand.u32 %v473, 4294901760
    %1848 = vmatpush1.msra.mxu0 %v1847
    %v1849 = vand.u32 %v472, 4294901760
    %1850 = vmatprep.subr.mxu0 %v1849
    %v1851 = vand.u32 %v471, 4294901760
    %1852 = vmatpush1.msra.mxu0 %v1851
    %v1853 = vand.u32 %v470, 4294901760
    %1854 = vmatprep.subr.mxu0 %v1853
    %v1855 = vand.u32 %v469, 4294901760
    %1856 = vmatpush1.msra.mxu0 %v1855
    %v1857 = vand.u32 %v468, 4294901760
    %1858 = vmatprep.subr.mxu0 %v1857
    %v1859 = vand.u32 %v467, 4294901760
    %1860 = vmatpush1.msra.mxu0 %v1859
    %v1861 = vand.u32 %v466, 4294901760
    %1862 = vmatprep.subr.mxu0 %v1861
    %v1863 = vand.u32 %v465, 4294901760
    %1864 = vmatpush1.msra.mxu0 %v1863
    %v1865 = vand.u32 %v464, 4294901760
    %1866 = vmatprep.subr.mxu0 %v1865
    %v1867 = vand.u32 %v463, 4294901760
    %1868 = vmatpush1.msra.mxu0 %v1867
    %v1869 = vand.u32 %v462, 4294901760
    %1870 = vmatprep.subr.mxu0 %v1869
    %v1871 = vand.u32 %v461, 4294901760
    %1872 = vmatpush1.msra.mxu0 %v1871
    %v1873 = vand.u32 %v460, 4294901760
    %1874 = vmatprep.subr.mxu0 %v1873
    %v1875 = vand.u32 %v459, 4294901760
    %1876 = vmatpush1.msra.mxu0 %v1875
    %v1877 = vand.u32 %v458, 4294901760
    %1878 = vmatprep.subr.mxu0 %v1877
    %v1879 = vand.u32 %v457, 4294901760
    %1880 = vmatpush1.msra.mxu0 %v1879
    %v1881 = vand.u32 %v520, 4294901760
    %1882 = vmatprep.subr.mxu0 %v1881
    %v1883 = vand.u32 %v519, 4294901760
    %1884 = vmatpush2.msra.mxu0 %v1883
    %v1885 = vand.u32 %v518, 4294901760
    %1886 = vmatprep.subr.mxu0 %v1885
    %v1887 = vand.u32 %v517, 4294901760
    %1888 = vmatpush2.msra.mxu0 %v1887
    %v1889 = vand.u32 %v516, 4294901760
    %1890 = vmatprep.subr.mxu0 %v1889
    %v1891 = vand.u32 %v515, 4294901760
    %1892 = vmatpush2.msra.mxu0 %v1891
    %v1893 = vand.u32 %v514, 4294901760
    %1894 = vmatprep.subr.mxu0 %v1893
    %v1895 = vand.u32 %v513, 4294901760
    %1896 = vmatpush2.msra.mxu0 %v1895
    %v1897 = vand.u32 %v512, 4294901760
    %1898 = vmatprep.subr.mxu0 %v1897
    %v1899 = vand.u32 %v511, 4294901760
    %1900 = vmatpush2.msra.mxu0 %v1899
    %v1901 = vand.u32 %v510, 4294901760
    %1902 = vmatprep.subr.mxu0 %v1901
    %v1903 = vand.u32 %v509, 4294901760
    %1904 = vmatpush2.msra.mxu0 %v1903
    %v1905 = vand.u32 %v508, 4294901760
    %1906 = vmatprep.subr.mxu0 %v1905
    %v1907 = vand.u32 %v507, 4294901760
    %1908 = vmatpush2.msra.mxu0 %v1907
    %v1909 = vand.u32 %v506, 4294901760
    %1910 = vmatprep.subr.mxu0 %v1909
    %v1911 = vand.u32 %v505, 4294901760
    %1912 = vmatpush2.msra.mxu0 %v1911
    %v1913 = vand.u32 %v504, 4294901760
    %1914 = vmatprep.subr.mxu0 %v1913
    %v1915 = vand.u32 %v503, 4294901760
    %1916 = vmatpush2.msra.mxu0 %v1915
    %v1917 = vand.u32 %v502, 4294901760
    %1918 = vmatprep.subr.mxu0 %v1917
    %v1919 = vand.u32 %v501, 4294901760
    %1920 = vmatpush2.msra.mxu0 %v1919
    %v1921 = vand.u32 %v500, 4294901760
    %1922 = vmatprep.subr.mxu0 %v1921
    %v1923 = vand.u32 %v499, 4294901760
    %1924 = vmatpush2.msra.mxu0 %v1923
    %v1925 = vand.u32 %v498, 4294901760
    %1926 = vmatprep.subr.mxu0 %v1925
    %v1927 = vand.u32 %v497, 4294901760
    %1928 = vmatpush2.msra.mxu0 %v1927
    %v1929 = vand.u32 %v496, 4294901760
    %1930 = vmatprep.subr.mxu0 %v1929
    %v1931 = vand.u32 %v495, 4294901760
    %1932 = vmatpush2.msra.mxu0 %v1931
    %v1933 = vand.u32 %v494, 4294901760
    %1934 = vmatprep.subr.mxu0 %v1933
    %v1935 = vand.u32 %v493, 4294901760
    %1936 = vmatpush2.msra.mxu0 %v1935
    %v1937 = vand.u32 %v492, 4294901760
    %1938 = vmatprep.subr.mxu0 %v1937
    %v1939 = vand.u32 %v491, 4294901760
    %1940 = vmatpush2.msra.mxu0 %v1939
    %v1941 = vand.u32 %v490, 4294901760
    %1942 = vmatprep.subr.mxu0 %v1941
    %v1943 = vand.u32 %v489, 4294901760
    %1944 = vmatpush2.msra.mxu0 %v1943
    %v1945 = vand.u32 %v392, 4294901760
    %v1946 = vsub.f32 %v392, %v1945
    %v1947 = vand.u32 %v1946, 4294901760
    %v1948 = vsub.f32 %v1946, %v1947
    %v1949 = vand.u32 %v1948, 4294901760
    %1950 = vmatprep.mubr.f32.mxu0 %v1949
    %v1951 = vand.u32 %v391, 4294901760
    %v1952 = vsub.f32 %v391, %v1951
    %v1953 = vand.u32 %v1952, 4294901760
    %v1954 = vsub.f32 %v1952, %v1953
    %v1955 = vand.u32 %v1954, 4294901760
    %1956 = vmatmul.mubr.f32.gmra.mxu0 %v1955
    %v1957 = vpop.f32.mrf.mxu0
    %v1958 = vadd.f32 %v1813, %v1957
    %v1959 = vpop.f32.mrf.mxu0
    %v1960 = vadd.f32 %v1815, %v1959
    %1961 = vdwg.mxu0
    %v1962 = vand.u32 %v488, 4294901760
    %v1963 = vsub.f32 %v488, %v1962
    %v1964 = vand.u32 %v1963, 4294901760
    %v1965 = vsub.f32 %v1963, %v1964
    %v1966 = vand.u32 %v1965, 4294901760
    %1967 = vmatprep.subr.mxu0 %v1966
    %v1968 = vand.u32 %v487, 4294901760
    %v1969 = vsub.f32 %v487, %v1968
    %v1970 = vand.u32 %v1969, 4294901760
    %v1971 = vsub.f32 %v1969, %v1970
    %v1972 = vand.u32 %v1971, 4294901760
    %1973 = vmatpush1.msra.mxu0 %v1972
    %v1974 = vand.u32 %v486, 4294901760
    %v1975 = vsub.f32 %v486, %v1974
    %v1976 = vand.u32 %v1975, 4294901760
    %v1977 = vsub.f32 %v1975, %v1976
    %v1978 = vand.u32 %v1977, 4294901760
    %1979 = vmatprep.subr.mxu0 %v1978
    %v1980 = vand.u32 %v485, 4294901760
    %v1981 = vsub.f32 %v485, %v1980
    %v1982 = vand.u32 %v1981, 4294901760
    %v1983 = vsub.f32 %v1981, %v1982
    %v1984 = vand.u32 %v1983, 4294901760
    %1985 = vmatpush1.msra.mxu0 %v1984
    %v1986 = vand.u32 %v484, 4294901760
    %v1987 = vsub.f32 %v484, %v1986
    %v1988 = vand.u32 %v1987, 4294901760
    %v1989 = vsub.f32 %v1987, %v1988
    %v1990 = vand.u32 %v1989, 4294901760
    %1991 = vmatprep.subr.mxu0 %v1990
    %v1992 = vand.u32 %v483, 4294901760
    %v1993 = vsub.f32 %v483, %v1992
    %v1994 = vand.u32 %v1993, 4294901760
    %v1995 = vsub.f32 %v1993, %v1994
    %v1996 = vand.u32 %v1995, 4294901760
    %1997 = vmatpush1.msra.mxu0 %v1996
    %v1998 = vand.u32 %v482, 4294901760
    %v1999 = vsub.f32 %v482, %v1998
    %v2000 = vand.u32 %v1999, 4294901760
    %v2001 = vsub.f32 %v1999, %v2000
    %v2002 = vand.u32 %v2001, 4294901760
    %2003 = vmatprep.subr.mxu0 %v2002
    %v2004 = vand.u32 %v481, 4294901760
    %v2005 = vsub.f32 %v481, %v2004
    %v2006 = vand.u32 %v2005, 4294901760
    %v2007 = vsub.f32 %v2005, %v2006
    %v2008 = vand.u32 %v2007, 4294901760
    %2009 = vmatpush1.msra.mxu0 %v2008
    %v2010 = vand.u32 %v480, 4294901760
    %v2011 = vsub.f32 %v480, %v2010
    %v2012 = vand.u32 %v2011, 4294901760
    %v2013 = vsub.f32 %v2011, %v2012
    %v2014 = vand.u32 %v2013, 4294901760
    %2015 = vmatprep.subr.mxu0 %v2014
    %v2016 = vand.u32 %v479, 4294901760
    %v2017 = vsub.f32 %v479, %v2016
    %v2018 = vand.u32 %v2017, 4294901760
    %v2019 = vsub.f32 %v2017, %v2018
    %v2020 = vand.u32 %v2019, 4294901760
    %2021 = vmatpush1.msra.mxu0 %v2020
    %v2022 = vand.u32 %v478, 4294901760
    %v2023 = vsub.f32 %v478, %v2022
    %v2024 = vand.u32 %v2023, 4294901760
    %v2025 = vsub.f32 %v2023, %v2024
    %v2026 = vand.u32 %v2025, 4294901760
    %2027 = vmatprep.subr.mxu0 %v2026
    %v2028 = vand.u32 %v477, 4294901760
    %v2029 = vsub.f32 %v477, %v2028
    %v2030 = vand.u32 %v2029, 4294901760
    %v2031 = vsub.f32 %v2029, %v2030
    %v2032 = vand.u32 %v2031, 4294901760
    %2033 = vmatpush1.msra.mxu0 %v2032
    %v2034 = vand.u32 %v476, 4294901760
    %v2035 = vsub.f32 %v476, %v2034
    %v2036 = vand.u32 %v2035, 4294901760
    %v2037 = vsub.f32 %v2035, %v2036
    %v2038 = vand.u32 %v2037, 4294901760
    %2039 = vmatprep.subr.mxu0 %v2038
    %v2040 = vand.u32 %v475, 4294901760
    %v2041 = vsub.f32 %v475, %v2040
    %v2042 = vand.u32 %v2041, 4294901760
    %v2043 = vsub.f32 %v2041, %v2042
    %v2044 = vand.u32 %v2043, 4294901760
    %2045 = vmatpush1.msra.mxu0 %v2044
    %v2046 = vand.u32 %v474, 4294901760
    %v2047 = vsub.f32 %v474, %v2046
    %v2048 = vand.u32 %v2047, 4294901760
    %v2049 = vsub.f32 %v2047, %v2048
    %v2050 = vand.u32 %v2049, 4294901760
    %2051 = vmatprep.subr.mxu0 %v2050
    %v2052 = vand.u32 %v473, 4294901760
    %v2053 = vsub.f32 %v473, %v2052
    %v2054 = vand.u32 %v2053, 4294901760
    %v2055 = vsub.f32 %v2053, %v2054
    %v2056 = vand.u32 %v2055, 4294901760
    %2057 = vmatpush1.msra.mxu0 %v2056
    %v2058 = vand.u32 %v472, 4294901760
    %v2059 = vsub.f32 %v472, %v2058
    %v2060 = vand.u32 %v2059, 4294901760
    %v2061 = vsub.f32 %v2059, %v2060
    %v2062 = vand.u32 %v2061, 4294901760
    %2063 = vmatprep.subr.mxu0 %v2062
    %v2064 = vand.u32 %v471, 4294901760
    %v2065 = vsub.f32 %v471, %v2064
    %v2066 = vand.u32 %v2065, 4294901760
    %v2067 = vsub.f32 %v2065, %v2066
    %v2068 = vand.u32 %v2067, 4294901760
    %2069 = vmatpush1.msra.mxu0 %v2068
    %v2070 = vand.u32 %v470, 4294901760
    %v2071 = vsub.f32 %v470, %v2070
    %v2072 = vand.u32 %v2071, 4294901760
    %v2073 = vsub.f32 %v2071, %v2072
    %v2074 = vand.u32 %v2073, 4294901760
    %2075 = vmatprep.subr.mxu0 %v2074
    %v2076 = vand.u32 %v469, 4294901760
    %v2077 = vsub.f32 %v469, %v2076
    %v2078 = vand.u32 %v2077, 4294901760
    %v2079 = vsub.f32 %v2077, %v2078
    %v2080 = vand.u32 %v2079, 4294901760
    %2081 = vmatpush1.msra.mxu0 %v2080
    %v2082 = vand.u32 %v468, 4294901760
    %v2083 = vsub.f32 %v468, %v2082
    %v2084 = vand.u32 %v2083, 4294901760
    %v2085 = vsub.f32 %v2083, %v2084
    %v2086 = vand.u32 %v2085, 4294901760
    %2087 = vmatprep.subr.mxu0 %v2086
    %v2088 = vand.u32 %v467, 4294901760
    %v2089 = vsub.f32 %v467, %v2088
    %v2090 = vand.u32 %v2089, 4294901760
    %v2091 = vsub.f32 %v2089, %v2090
    %v2092 = vand.u32 %v2091, 4294901760
    %2093 = vmatpush1.msra.mxu0 %v2092
    %v2094 = vand.u32 %v466, 4294901760
    %v2095 = vsub.f32 %v466, %v2094
    %v2096 = vand.u32 %v2095, 4294901760
    %v2097 = vsub.f32 %v2095, %v2096
    %v2098 = vand.u32 %v2097, 4294901760
    %2099 = vmatprep.subr.mxu0 %v2098
    %v2100 = vand.u32 %v465, 4294901760
    %v2101 = vsub.f32 %v465, %v2100
    %v2102 = vand.u32 %v2101, 4294901760
    %v2103 = vsub.f32 %v2101, %v2102
    %v2104 = vand.u32 %v2103, 4294901760
    %2105 = vmatpush1.msra.mxu0 %v2104
    %v2106 = vand.u32 %v464, 4294901760
    %v2107 = vsub.f32 %v464, %v2106
    %v2108 = vand.u32 %v2107, 4294901760
    %v2109 = vsub.f32 %v2107, %v2108
    %v2110 = vand.u32 %v2109, 4294901760
    %2111 = vmatprep.subr.mxu0 %v2110
    %v2112 = vand.u32 %v463, 4294901760
    %v2113 = vsub.f32 %v463, %v2112
    %v2114 = vand.u32 %v2113, 4294901760
    %v2115 = vsub.f32 %v2113, %v2114
    %v2116 = vand.u32 %v2115, 4294901760
    %2117 = vmatpush1.msra.mxu0 %v2116
    %v2118 = vand.u32 %v462, 4294901760
    %v2119 = vsub.f32 %v462, %v2118
    %v2120 = vand.u32 %v2119, 4294901760
    %v2121 = vsub.f32 %v2119, %v2120
    %v2122 = vand.u32 %v2121, 4294901760
    %2123 = vmatprep.subr.mxu0 %v2122
    %v2124 = vand.u32 %v461, 4294901760
    %v2125 = vsub.f32 %v461, %v2124
    %v2126 = vand.u32 %v2125, 4294901760
    %v2127 = vsub.f32 %v2125, %v2126
    %v2128 = vand.u32 %v2127, 4294901760
    %2129 = vmatpush1.msra.mxu0 %v2128
    %v2130 = vand.u32 %v460, 4294901760
    %v2131 = vsub.f32 %v460, %v2130
    %v2132 = vand.u32 %v2131, 4294901760
    %v2133 = vsub.f32 %v2131, %v2132
    %v2134 = vand.u32 %v2133, 4294901760
    %2135 = vmatprep.subr.mxu0 %v2134
    %v2136 = vand.u32 %v459, 4294901760
    %v2137 = vsub.f32 %v459, %v2136
    %v2138 = vand.u32 %v2137, 4294901760
    %v2139 = vsub.f32 %v2137, %v2138
    %v2140 = vand.u32 %v2139, 4294901760
    %2141 = vmatpush1.msra.mxu0 %v2140
    %v2142 = vand.u32 %v458, 4294901760
    %v2143 = vsub.f32 %v458, %v2142
    %v2144 = vand.u32 %v2143, 4294901760
    %v2145 = vsub.f32 %v2143, %v2144
    %v2146 = vand.u32 %v2145, 4294901760
    %2147 = vmatprep.subr.mxu0 %v2146
    %v2148 = vand.u32 %v457, 4294901760
    %v2149 = vsub.f32 %v457, %v2148
    %v2150 = vand.u32 %v2149, 4294901760
    %v2151 = vsub.f32 %v2149, %v2150
    %v2152 = vand.u32 %v2151, 4294901760
    %2153 = vmatpush1.msra.mxu0 %v2152
    %v2154 = vand.u32 %v520, 4294901760
    %v2155 = vsub.f32 %v520, %v2154
    %v2156 = vand.u32 %v2155, 4294901760
    %v2157 = vsub.f32 %v2155, %v2156
    %v2158 = vand.u32 %v2157, 4294901760
    %2159 = vmatprep.subr.mxu0 %v2158
    %v2160 = vand.u32 %v519, 4294901760
    %v2161 = vsub.f32 %v519, %v2160
    %v2162 = vand.u32 %v2161, 4294901760
    %v2163 = vsub.f32 %v2161, %v2162
    %v2164 = vand.u32 %v2163, 4294901760
    %2165 = vmatpush2.msra.mxu0 %v2164
    %v2166 = vand.u32 %v518, 4294901760
    %v2167 = vsub.f32 %v518, %v2166
    %v2168 = vand.u32 %v2167, 4294901760
    %v2169 = vsub.f32 %v2167, %v2168
    %v2170 = vand.u32 %v2169, 4294901760
    %2171 = vmatprep.subr.mxu0 %v2170
    %v2172 = vand.u32 %v517, 4294901760
    %v2173 = vsub.f32 %v517, %v2172
    %v2174 = vand.u32 %v2173, 4294901760
    %v2175 = vsub.f32 %v2173, %v2174
    %v2176 = vand.u32 %v2175, 4294901760
    %2177 = vmatpush2.msra.mxu0 %v2176
    %v2178 = vand.u32 %v516, 4294901760
    %v2179 = vsub.f32 %v516, %v2178
    %v2180 = vand.u32 %v2179, 4294901760
    %v2181 = vsub.f32 %v2179, %v2180
    %v2182 = vand.u32 %v2181, 4294901760
    %2183 = vmatprep.subr.mxu0 %v2182
    %v2184 = vand.u32 %v515, 4294901760
    %v2185 = vsub.f32 %v515, %v2184
    %v2186 = vand.u32 %v2185, 4294901760
    %v2187 = vsub.f32 %v2185, %v2186
    %v2188 = vand.u32 %v2187, 4294901760
    %2189 = vmatpush2.msra.mxu0 %v2188
    %v2190 = vand.u32 %v514, 4294901760
    %v2191 = vsub.f32 %v514, %v2190
    %v2192 = vand.u32 %v2191, 4294901760
    %v2193 = vsub.f32 %v2191, %v2192
    %v2194 = vand.u32 %v2193, 4294901760
    %2195 = vmatprep.subr.mxu0 %v2194
    %v2196 = vand.u32 %v513, 4294901760
    %v2197 = vsub.f32 %v513, %v2196
    %v2198 = vand.u32 %v2197, 4294901760
    %v2199 = vsub.f32 %v2197, %v2198
    %v2200 = vand.u32 %v2199, 4294901760
    %2201 = vmatpush2.msra.mxu0 %v2200
    %v2202 = vand.u32 %v512, 4294901760
    %v2203 = vsub.f32 %v512, %v2202
    %v2204 = vand.u32 %v2203, 4294901760
    %v2205 = vsub.f32 %v2203, %v2204
    %v2206 = vand.u32 %v2205, 4294901760
    %2207 = vmatprep.subr.mxu0 %v2206
    %v2208 = vand.u32 %v511, 4294901760
    %v2209 = vsub.f32 %v511, %v2208
    %v2210 = vand.u32 %v2209, 4294901760
    %v2211 = vsub.f32 %v2209, %v2210
    %v2212 = vand.u32 %v2211, 4294901760
    %2213 = vmatpush2.msra.mxu0 %v2212
    %v2214 = vand.u32 %v510, 4294901760
    %v2215 = vsub.f32 %v510, %v2214
    %v2216 = vand.u32 %v2215, 4294901760
    %v2217 = vsub.f32 %v2215, %v2216
    %v2218 = vand.u32 %v2217, 4294901760
    %2219 = vmatprep.subr.mxu0 %v2218
    %v2220 = vand.u32 %v509, 4294901760
    %v2221 = vsub.f32 %v509, %v2220
    %v2222 = vand.u32 %v2221, 4294901760
    %v2223 = vsub.f32 %v2221, %v2222
    %v2224 = vand.u32 %v2223, 4294901760
    %2225 = vmatpush2.msra.mxu0 %v2224
    %v2226 = vand.u32 %v508, 4294901760
    %v2227 = vsub.f32 %v508, %v2226
    %v2228 = vand.u32 %v2227, 4294901760
    %v2229 = vsub.f32 %v2227, %v2228
    %v2230 = vand.u32 %v2229, 4294901760
    %2231 = vmatprep.subr.mxu0 %v2230
    %v2232 = vand.u32 %v507, 4294901760
    %v2233 = vsub.f32 %v507, %v2232
    %v2234 = vand.u32 %v2233, 4294901760
    %v2235 = vsub.f32 %v2233, %v2234
    %v2236 = vand.u32 %v2235, 4294901760
    %2237 = vmatpush2.msra.mxu0 %v2236
    %v2238 = vand.u32 %v506, 4294901760
    %v2239 = vsub.f32 %v506, %v2238
    %v2240 = vand.u32 %v2239, 4294901760
    %v2241 = vsub.f32 %v2239, %v2240
    %v2242 = vand.u32 %v2241, 4294901760
    %2243 = vmatprep.subr.mxu0 %v2242
    %v2244 = vand.u32 %v505, 4294901760
    %v2245 = vsub.f32 %v505, %v2244
    %v2246 = vand.u32 %v2245, 4294901760
    %v2247 = vsub.f32 %v2245, %v2246
    %v2248 = vand.u32 %v2247, 4294901760
    %2249 = vmatpush2.msra.mxu0 %v2248
    %v2250 = vand.u32 %v504, 4294901760
    %v2251 = vsub.f32 %v504, %v2250
    %v2252 = vand.u32 %v2251, 4294901760
    %v2253 = vsub.f32 %v2251, %v2252
    %v2254 = vand.u32 %v2253, 4294901760
    %2255 = vmatprep.subr.mxu0 %v2254
    %v2256 = vand.u32 %v503, 4294901760
    %v2257 = vsub.f32 %v503, %v2256
    %v2258 = vand.u32 %v2257, 4294901760
    %v2259 = vsub.f32 %v2257, %v2258
    %v2260 = vand.u32 %v2259, 4294901760
    %2261 = vmatpush2.msra.mxu0 %v2260
    %v2262 = vand.u32 %v502, 4294901760
    %v2263 = vsub.f32 %v502, %v2262
    %v2264 = vand.u32 %v2263, 4294901760
    %v2265 = vsub.f32 %v2263, %v2264
    %v2266 = vand.u32 %v2265, 4294901760
    %2267 = vmatprep.subr.mxu0 %v2266
    %v2268 = vand.u32 %v501, 4294901760
    %v2269 = vsub.f32 %v501, %v2268
    %v2270 = vand.u32 %v2269, 4294901760
    %v2271 = vsub.f32 %v2269, %v2270
    %v2272 = vand.u32 %v2271, 4294901760
    %2273 = vmatpush2.msra.mxu0 %v2272
    %v2274 = vand.u32 %v500, 4294901760
    %v2275 = vsub.f32 %v500, %v2274
    %v2276 = vand.u32 %v2275, 4294901760
    %v2277 = vsub.f32 %v2275, %v2276
    %v2278 = vand.u32 %v2277, 4294901760
    %2279 = vmatprep.subr.mxu0 %v2278
    %v2280 = vand.u32 %v499, 4294901760
    %v2281 = vsub.f32 %v499, %v2280
    %v2282 = vand.u32 %v2281, 4294901760
    %v2283 = vsub.f32 %v2281, %v2282
    %v2284 = vand.u32 %v2283, 4294901760
    %2285 = vmatpush2.msra.mxu0 %v2284
    %v2286 = vand.u32 %v498, 4294901760
    %v2287 = vsub.f32 %v498, %v2286
    %v2288 = vand.u32 %v2287, 4294901760
    %v2289 = vsub.f32 %v2287, %v2288
    %v2290 = vand.u32 %v2289, 4294901760
    %2291 = vmatprep.subr.mxu0 %v2290
    %v2292 = vand.u32 %v497, 4294901760
    %v2293 = vsub.f32 %v497, %v2292
    %v2294 = vand.u32 %v2293, 4294901760
    %v2295 = vsub.f32 %v2293, %v2294
    %v2296 = vand.u32 %v2295, 4294901760
    %2297 = vmatpush2.msra.mxu0 %v2296
    %v2298 = vand.u32 %v496, 4294901760
    %v2299 = vsub.f32 %v496, %v2298
    %v2300 = vand.u32 %v2299, 4294901760
    %v2301 = vsub.f32 %v2299, %v2300
    %v2302 = vand.u32 %v2301, 4294901760
    %2303 = vmatprep.subr.mxu0 %v2302
    %v2304 = vand.u32 %v495, 4294901760
    %v2305 = vsub.f32 %v495, %v2304
    %v2306 = vand.u32 %v2305, 4294901760
    %v2307 = vsub.f32 %v2305, %v2306
    %v2308 = vand.u32 %v2307, 4294901760
    %2309 = vmatpush2.msra.mxu0 %v2308
    %v2310 = vand.u32 %v494, 4294901760
    %v2311 = vsub.f32 %v494, %v2310
    %v2312 = vand.u32 %v2311, 4294901760
    %v2313 = vsub.f32 %v2311, %v2312
    %v2314 = vand.u32 %v2313, 4294901760
    %2315 = vmatprep.subr.mxu0 %v2314
    %v2316 = vand.u32 %v493, 4294901760
    %v2317 = vsub.f32 %v493, %v2316
    %v2318 = vand.u32 %v2317, 4294901760
    %v2319 = vsub.f32 %v2317, %v2318
    %v2320 = vand.u32 %v2319, 4294901760
    %2321 = vmatpush2.msra.mxu0 %v2320
    %v2322 = vand.u32 %v492, 4294901760
    %v2323 = vsub.f32 %v492, %v2322
    %v2324 = vand.u32 %v2323, 4294901760
    %v2325 = vsub.f32 %v2323, %v2324
    %v2326 = vand.u32 %v2325, 4294901760
    %2327 = vmatprep.subr.mxu0 %v2326
    %v2328 = vand.u32 %v491, 4294901760
    %v2329 = vsub.f32 %v491, %v2328
    %v2330 = vand.u32 %v2329, 4294901760
    %v2331 = vsub.f32 %v2329, %v2330
    %v2332 = vand.u32 %v2331, 4294901760
    %2333 = vmatpush2.msra.mxu0 %v2332
    %v2334 = vand.u32 %v490, 4294901760
    %v2335 = vsub.f32 %v490, %v2334
    %v2336 = vand.u32 %v2335, 4294901760
    %v2337 = vsub.f32 %v2335, %v2336
    %v2338 = vand.u32 %v2337, 4294901760
    %2339 = vmatprep.subr.mxu0 %v2338
    %v2340 = vand.u32 %v489, 4294901760
    %v2341 = vsub.f32 %v489, %v2340
    %v2342 = vand.u32 %v2341, 4294901760
    %v2343 = vsub.f32 %v2341, %v2342
    %v2344 = vand.u32 %v2343, 4294901760
    %2345 = vmatpush2.msra.mxu0 %v2344
    %v2346 = vand.u32 %v392, 4294901760
    %2347 = vmatprep.mubr.f32.mxu0 %v2346
    %v2348 = vand.u32 %v391, 4294901760
    %2349 = vmatmul.mubr.f32.gmra.mxu0 %v2348
    %v2350 = vpop.f32.mrf.mxu0
    %v2351 = vadd.f32 %v1958, %v2350
    %v2352 = vpop.f32.mrf.mxu0
    %v2353 = vadd.f32 %v1960, %v2352
    %2354 = vdwg.mxu0
    %v2355 = vand.u32 %v488, 4294901760
    %v2356 = vsub.f32 %v488, %v2355
    %2357 = vmatprep.subr.mxu0 %v2356
    %v2358 = vand.u32 %v487, 4294901760
    %v2359 = vsub.f32 %v487, %v2358
    %2360 = vmatpush1.msra.mxu0 %v2359
    %v2361 = vand.u32 %v486, 4294901760
    %v2362 = vsub.f32 %v486, %v2361
    %2363 = vmatprep.subr.mxu0 %v2362
    %v2364 = vand.u32 %v485, 4294901760
    %v2365 = vsub.f32 %v485, %v2364
    %2366 = vmatpush1.msra.mxu0 %v2365
    %v2367 = vand.u32 %v484, 4294901760
    %v2368 = vsub.f32 %v484, %v2367
    %2369 = vmatprep.subr.mxu0 %v2368
    %v2370 = vand.u32 %v483, 4294901760
    %v2371 = vsub.f32 %v483, %v2370
    %2372 = vmatpush1.msra.mxu0 %v2371
    %v2373 = vand.u32 %v482, 4294901760
    %v2374 = vsub.f32 %v482, %v2373
    %2375 = vmatprep.subr.mxu0 %v2374
    %v2376 = vand.u32 %v481, 4294901760
    %v2377 = vsub.f32 %v481, %v2376
    %2378 = vmatpush1.msra.mxu0 %v2377
    %v2379 = vand.u32 %v480, 4294901760
    %v2380 = vsub.f32 %v480, %v2379
    %2381 = vmatprep.subr.mxu0 %v2380
    %v2382 = vand.u32 %v479, 4294901760
    %v2383 = vsub.f32 %v479, %v2382
    %2384 = vmatpush1.msra.mxu0 %v2383
    %v2385 = vand.u32 %v478, 4294901760
    %v2386 = vsub.f32 %v478, %v2385
    %2387 = vmatprep.subr.mxu0 %v2386
    %v2388 = vand.u32 %v477, 4294901760
    %v2389 = vsub.f32 %v477, %v2388
    %2390 = vmatpush1.msra.mxu0 %v2389
    %v2391 = vand.u32 %v476, 4294901760
    %v2392 = vsub.f32 %v476, %v2391
    %2393 = vmatprep.subr.mxu0 %v2392
    %v2394 = vand.u32 %v475, 4294901760
    %v2395 = vsub.f32 %v475, %v2394
    %2396 = vmatpush1.msra.mxu0 %v2395
    %v2397 = vand.u32 %v474, 4294901760
    %v2398 = vsub.f32 %v474, %v2397
    %2399 = vmatprep.subr.mxu0 %v2398
    %v2400 = vand.u32 %v473, 4294901760
    %v2401 = vsub.f32 %v473, %v2400
    %2402 = vmatpush1.msra.mxu0 %v2401
    %v2403 = vand.u32 %v472, 4294901760
    %v2404 = vsub.f32 %v472, %v2403
    %2405 = vmatprep.subr.mxu0 %v2404
    %v2406 = vand.u32 %v471, 4294901760
    %v2407 = vsub.f32 %v471, %v2406
    %2408 = vmatpush1.msra.mxu0 %v2407
    %v2409 = vand.u32 %v470, 4294901760
    %v2410 = vsub.f32 %v470, %v2409
    %2411 = vmatprep.subr.mxu0 %v2410
    %v2412 = vand.u32 %v469, 4294901760
    %v2413 = vsub.f32 %v469, %v2412
    %2414 = vmatpush1.msra.mxu0 %v2413
    %v2415 = vand.u32 %v468, 4294901760
    %v2416 = vsub.f32 %v468, %v2415
    %2417 = vmatprep.subr.mxu0 %v2416
    %v2418 = vand.u32 %v467, 4294901760
    %v2419 = vsub.f32 %v467, %v2418
    %2420 = vmatpush1.msra.mxu0 %v2419
    %v2421 = vand.u32 %v466, 4294901760
    %v2422 = vsub.f32 %v466, %v2421
    %2423 = vmatprep.subr.mxu0 %v2422
    %v2424 = vand.u32 %v465, 4294901760
    %v2425 = vsub.f32 %v465, %v2424
    %2426 = vmatpush1.msra.mxu0 %v2425
    %v2427 = vand.u32 %v464, 4294901760
    %v2428 = vsub.f32 %v464, %v2427
    %2429 = vmatprep.subr.mxu0 %v2428
    %v2430 = vand.u32 %v463, 4294901760
    %v2431 = vsub.f32 %v463, %v2430
    %2432 = vmatpush1.msra.mxu0 %v2431
    %v2433 = vand.u32 %v462, 4294901760
    %v2434 = vsub.f32 %v462, %v2433
    %2435 = vmatprep.subr.mxu0 %v2434
    %v2436 = vand.u32 %v461, 4294901760
    %v2437 = vsub.f32 %v461, %v2436
    %2438 = vmatpush1.msra.mxu0 %v2437
    %v2439 = vand.u32 %v460, 4294901760
    %v2440 = vsub.f32 %v460, %v2439
    %2441 = vmatprep.subr.mxu0 %v2440
    %v2442 = vand.u32 %v459, 4294901760
    %v2443 = vsub.f32 %v459, %v2442
    %2444 = vmatpush1.msra.mxu0 %v2443
    %v2445 = vand.u32 %v458, 4294901760
    %v2446 = vsub.f32 %v458, %v2445
    %2447 = vmatprep.subr.mxu0 %v2446
    %v2448 = vand.u32 %v457, 4294901760
    %v2449 = vsub.f32 %v457, %v2448
    %2450 = vmatpush1.msra.mxu0 %v2449
    %v2451 = vand.u32 %v520, 4294901760
    %v2452 = vsub.f32 %v520, %v2451
    %2453 = vmatprep.subr.mxu0 %v2452
    %v2454 = vand.u32 %v519, 4294901760
    %v2455 = vsub.f32 %v519, %v2454
    %2456 = vmatpush2.msra.mxu0 %v2455
    %v2457 = vand.u32 %v518, 4294901760
    %v2458 = vsub.f32 %v518, %v2457
    %2459 = vmatprep.subr.mxu0 %v2458
    %v2460 = vand.u32 %v517, 4294901760
    %v2461 = vsub.f32 %v517, %v2460
    %2462 = vmatpush2.msra.mxu0 %v2461
    %v2463 = vand.u32 %v516, 4294901760
    %v2464 = vsub.f32 %v516, %v2463
    %2465 = vmatprep.subr.mxu0 %v2464
    %v2466 = vand.u32 %v515, 4294901760
    %v2467 = vsub.f32 %v515, %v2466
    %2468 = vmatpush2.msra.mxu0 %v2467
    %v2469 = vand.u32 %v514, 4294901760
    %v2470 = vsub.f32 %v514, %v2469
    %2471 = vmatprep.subr.mxu0 %v2470
    %v2472 = vand.u32 %v513, 4294901760
    %v2473 = vsub.f32 %v513, %v2472
    %2474 = vmatpush2.msra.mxu0 %v2473
    %v2475 = vand.u32 %v512, 4294901760
    %v2476 = vsub.f32 %v512, %v2475
    %2477 = vmatprep.subr.mxu0 %v2476
    %v2478 = vand.u32 %v511, 4294901760
    %v2479 = vsub.f32 %v511, %v2478
    %2480 = vmatpush2.msra.mxu0 %v2479
    %v2481 = vand.u32 %v510, 4294901760
    %v2482 = vsub.f32 %v510, %v2481
    %2483 = vmatprep.subr.mxu0 %v2482
    %v2484 = vand.u32 %v509, 4294901760
    %v2485 = vsub.f32 %v509, %v2484
    %2486 = vmatpush2.msra.mxu0 %v2485
    %v2487 = vand.u32 %v508, 4294901760
    %v2488 = vsub.f32 %v508, %v2487
    %2489 = vmatprep.subr.mxu0 %v2488
    %v2490 = vand.u32 %v507, 4294901760
    %v2491 = vsub.f32 %v507, %v2490
    %2492 = vmatpush2.msra.mxu0 %v2491
    %v2493 = vand.u32 %v506, 4294901760
    %v2494 = vsub.f32 %v506, %v2493
    %2495 = vmatprep.subr.mxu0 %v2494
    %v2496 = vand.u32 %v505, 4294901760
    %v2497 = vsub.f32 %v505, %v2496
    %2498 = vmatpush2.msra.mxu0 %v2497
    %v2499 = vand.u32 %v504, 4294901760
    %v2500 = vsub.f32 %v504, %v2499
    %2501 = vmatprep.subr.mxu0 %v2500
    %v2502 = vand.u32 %v503, 4294901760
    %v2503 = vsub.f32 %v503, %v2502
    %2504 = vmatpush2.msra.mxu0 %v2503
    %v2505 = vand.u32 %v502, 4294901760
    %v2506 = vsub.f32 %v502, %v2505
    %2507 = vmatprep.subr.mxu0 %v2506
    %v2508 = vand.u32 %v501, 4294901760
    %v2509 = vsub.f32 %v501, %v2508
    %2510 = vmatpush2.msra.mxu0 %v2509
    %v2511 = vand.u32 %v500, 4294901760
    %v2512 = vsub.f32 %v500, %v2511
    %2513 = vmatprep.subr.mxu0 %v2512
    %v2514 = vand.u32 %v499, 4294901760
    %v2515 = vsub.f32 %v499, %v2514
    %2516 = vmatpush2.msra.mxu0 %v2515
    %v2517 = vand.u32 %v498, 4294901760
    %v2518 = vsub.f32 %v498, %v2517
    %2519 = vmatprep.subr.mxu0 %v2518
    %v2520 = vand.u32 %v497, 4294901760
    %v2521 = vsub.f32 %v497, %v2520
    %2522 = vmatpush2.msra.mxu0 %v2521
    %v2523 = vand.u32 %v496, 4294901760
    %v2524 = vsub.f32 %v496, %v2523
    %2525 = vmatprep.subr.mxu0 %v2524
    %v2526 = vand.u32 %v495, 4294901760
    %v2527 = vsub.f32 %v495, %v2526
    %2528 = vmatpush2.msra.mxu0 %v2527
    %v2529 = vand.u32 %v494, 4294901760
    %v2530 = vsub.f32 %v494, %v2529
    %2531 = vmatprep.subr.mxu0 %v2530
    %v2532 = vand.u32 %v493, 4294901760
    %v2533 = vsub.f32 %v493, %v2532
    %2534 = vmatpush2.msra.mxu0 %v2533
    %v2535 = vand.u32 %v492, 4294901760
    %v2536 = vsub.f32 %v492, %v2535
    %2537 = vmatprep.subr.mxu0 %v2536
    %v2538 = vand.u32 %v491, 4294901760
    %v2539 = vsub.f32 %v491, %v2538
    %2540 = vmatpush2.msra.mxu0 %v2539
    %v2541 = vand.u32 %v490, 4294901760
    %v2542 = vsub.f32 %v490, %v2541
    %2543 = vmatprep.subr.mxu0 %v2542
    %v2544 = vand.u32 %v489, 4294901760
    %v2545 = vsub.f32 %v489, %v2544
    %2546 = vmatpush2.msra.mxu0 %v2545
    %v2547 = vand.u32 %v392, 4294901760
    %v2548 = vsub.f32 %v392, %v2547
    %2549 = vmatprep.mubr.f32.mxu0 %v2548
    %v2550 = vand.u32 %v391, 4294901760
    %v2551 = vsub.f32 %v391, %v2550
    %2552 = vmatmul.mubr.f32.gmra.mxu0 %v2551
    %v2553 = vpop.f32.mrf.mxu0
    %v2554 = vadd.f32 %v2351, %v2553
    %v2555 = vpop.f32.mrf.mxu0
    %v2556 = vadd.f32 %v2353, %v2555
    %2557 = vdwg.mxu0
    %v2558 = vand.u32 %v488, 4294901760
    %2559 = vmatprep.subr.mxu0 %v2558
    %v2560 = vand.u32 %v487, 4294901760
    %2561 = vmatpush1.msra.mxu0 %v2560
    %v2562 = vand.u32 %v486, 4294901760
    %2563 = vmatprep.subr.mxu0 %v2562
    %v2564 = vand.u32 %v485, 4294901760
    %2565 = vmatpush1.msra.mxu0 %v2564
    %v2566 = vand.u32 %v484, 4294901760
    %2567 = vmatprep.subr.mxu0 %v2566
    %v2568 = vand.u32 %v483, 4294901760
    %2569 = vmatpush1.msra.mxu0 %v2568
    %v2570 = vand.u32 %v482, 4294901760
    %2571 = vmatprep.subr.mxu0 %v2570
    %v2572 = vand.u32 %v481, 4294901760
    %2573 = vmatpush1.msra.mxu0 %v2572
    %v2574 = vand.u32 %v480, 4294901760
    %2575 = vmatprep.subr.mxu0 %v2574
    %v2576 = vand.u32 %v479, 4294901760
    %2577 = vmatpush1.msra.mxu0 %v2576
    %v2578 = vand.u32 %v478, 4294901760
    %2579 = vmatprep.subr.mxu0 %v2578
    %v2580 = vand.u32 %v477, 4294901760
    %2581 = vmatpush1.msra.mxu0 %v2580
    %v2582 = vand.u32 %v476, 4294901760
    %2583 = vmatprep.subr.mxu0 %v2582
    %v2584 = vand.u32 %v475, 4294901760
    %2585 = vmatpush1.msra.mxu0 %v2584
    %v2586 = vand.u32 %v474, 4294901760
    %2587 = vmatprep.subr.mxu0 %v2586
    %v2588 = vand.u32 %v473, 4294901760
    %2589 = vmatpush1.msra.mxu0 %v2588
    %v2590 = vand.u32 %v472, 4294901760
    %2591 = vmatprep.subr.mxu0 %v2590
    %v2592 = vand.u32 %v471, 4294901760
    %2593 = vmatpush1.msra.mxu0 %v2592
    %v2594 = vand.u32 %v470, 4294901760
    %2595 = vmatprep.subr.mxu0 %v2594
    %v2596 = vand.u32 %v469, 4294901760
    %2597 = vmatpush1.msra.mxu0 %v2596
    %v2598 = vand.u32 %v468, 4294901760
    %2599 = vmatprep.subr.mxu0 %v2598
    %v2600 = vand.u32 %v467, 4294901760
    %2601 = vmatpush1.msra.mxu0 %v2600
    %v2602 = vand.u32 %v466, 4294901760
    %2603 = vmatprep.subr.mxu0 %v2602
    %v2604 = vand.u32 %v465, 4294901760
    %2605 = vmatpush1.msra.mxu0 %v2604
    %v2606 = vand.u32 %v464, 4294901760
    %2607 = vmatprep.subr.mxu0 %v2606
    %v2608 = vand.u32 %v463, 4294901760
    %2609 = vmatpush1.msra.mxu0 %v2608
    %v2610 = vand.u32 %v462, 4294901760
    %2611 = vmatprep.subr.mxu0 %v2610
    %v2612 = vand.u32 %v461, 4294901760
    %2613 = vmatpush1.msra.mxu0 %v2612
    %v2614 = vand.u32 %v460, 4294901760
    %2615 = vmatprep.subr.mxu0 %v2614
    %v2616 = vand.u32 %v459, 4294901760
    %2617 = vmatpush1.msra.mxu0 %v2616
    %v2618 = vand.u32 %v458, 4294901760
    %2619 = vmatprep.subr.mxu0 %v2618
    %v2620 = vand.u32 %v457, 4294901760
    %2621 = vmatpush1.msra.mxu0 %v2620
    %v2622 = vand.u32 %v520, 4294901760
    %2623 = vmatprep.subr.mxu0 %v2622
    %v2624 = vand.u32 %v519, 4294901760
    %2625 = vmatpush2.msra.mxu0 %v2624
    %v2626 = vand.u32 %v518, 4294901760
    %2627 = vmatprep.subr.mxu0 %v2626
    %v2628 = vand.u32 %v517, 4294901760
    %2629 = vmatpush2.msra.mxu0 %v2628
    %v2630 = vand.u32 %v516, 4294901760
    %2631 = vmatprep.subr.mxu0 %v2630
    %v2632 = vand.u32 %v515, 4294901760
    %2633 = vmatpush2.msra.mxu0 %v2632
    %v2634 = vand.u32 %v514, 4294901760
    %2635 = vmatprep.subr.mxu0 %v2634
    %v2636 = vand.u32 %v513, 4294901760
    %2637 = vmatpush2.msra.mxu0 %v2636
    %v2638 = vand.u32 %v512, 4294901760
    %2639 = vmatprep.subr.mxu0 %v2638
    %v2640 = vand.u32 %v511, 4294901760
    %2641 = vmatpush2.msra.mxu0 %v2640
    %v2642 = vand.u32 %v510, 4294901760
    %2643 = vmatprep.subr.mxu0 %v2642
    %v2644 = vand.u32 %v509, 4294901760
    %2645 = vmatpush2.msra.mxu0 %v2644
    %v2646 = vand.u32 %v508, 4294901760
    %2647 = vmatprep.subr.mxu0 %v2646
    %v2648 = vand.u32 %v507, 4294901760
    %2649 = vmatpush2.msra.mxu0 %v2648
    %v2650 = vand.u32 %v506, 4294901760
    %2651 = vmatprep.subr.mxu0 %v2650
    %v2652 = vand.u32 %v505, 4294901760
    %2653 = vmatpush2.msra.mxu0 %v2652
    %v2654 = vand.u32 %v504, 4294901760
    %2655 = vmatprep.subr.mxu0 %v2654
    %v2656 = vand.u32 %v503, 4294901760
    %2657 = vmatpush2.msra.mxu0 %v2656
    %v2658 = vand.u32 %v502, 4294901760
    %2659 = vmatprep.subr.mxu0 %v2658
    %v2660 = vand.u32 %v501, 4294901760
    %2661 = vmatpush2.msra.mxu0 %v2660
    %v2662 = vand.u32 %v500, 4294901760
    %2663 = vmatprep.subr.mxu0 %v2662
    %v2664 = vand.u32 %v499, 4294901760
    %2665 = vmatpush2.msra.mxu0 %v2664
    %v2666 = vand.u32 %v498, 4294901760
    %2667 = vmatprep.subr.mxu0 %v2666
    %v2668 = vand.u32 %v497, 4294901760
    %2669 = vmatpush2.msra.mxu0 %v2668
    %v2670 = vand.u32 %v496, 4294901760
    %2671 = vmatprep.subr.mxu0 %v2670
    %v2672 = vand.u32 %v495, 4294901760
    %2673 = vmatpush2.msra.mxu0 %v2672
    %v2674 = vand.u32 %v494, 4294901760
    %2675 = vmatprep.subr.mxu0 %v2674
    %v2676 = vand.u32 %v493, 4294901760
    %2677 = vmatpush2.msra.mxu0 %v2676
    %v2678 = vand.u32 %v492, 4294901760
    %2679 = vmatprep.subr.mxu0 %v2678
    %v2680 = vand.u32 %v491, 4294901760
    %2681 = vmatpush2.msra.mxu0 %v2680
    %v2682 = vand.u32 %v490, 4294901760
    %2683 = vmatprep.subr.mxu0 %v2682
    %v2684 = vand.u32 %v489, 4294901760
    %2685 = vmatpush2.msra.mxu0 %v2684
    %v2686 = vand.u32 %v392, 4294901760
    %v2687 = vsub.f32 %v392, %v2686
    %v2688 = vand.u32 %v2687, 4294901760
    %2689 = vmatprep.mubr.f32.mxu0 %v2688
    %v2690 = vand.u32 %v391, 4294901760
    %v2691 = vsub.f32 %v391, %v2690
    %v2692 = vand.u32 %v2691, 4294901760
    %2693 = vmatmul.mubr.f32.gmra.mxu0 %v2692
    %v2694 = vpop.f32.mrf.mxu0
    %v2695 = vadd.f32 %v2554, %v2694
    %v2696 = vpop.f32.mrf.mxu0
    %v2697 = vadd.f32 %v2556, %v2696
    %2698 = vdwg.mxu0
    %v2699 = vand.u32 %v488, 4294901760
    %v2700 = vsub.f32 %v488, %v2699
    %v2701 = vand.u32 %v2700, 4294901760
    %2702 = vmatprep.subr.mxu0 %v2701
    %v2703 = vand.u32 %v487, 4294901760
    %v2704 = vsub.f32 %v487, %v2703
    %v2705 = vand.u32 %v2704, 4294901760
    %2706 = vmatpush1.msra.mxu0 %v2705
    %v2707 = vand.u32 %v486, 4294901760
    %v2708 = vsub.f32 %v486, %v2707
    %v2709 = vand.u32 %v2708, 4294901760
    %2710 = vmatprep.subr.mxu0 %v2709
    %v2711 = vand.u32 %v485, 4294901760
    %v2712 = vsub.f32 %v485, %v2711
    %v2713 = vand.u32 %v2712, 4294901760
    %2714 = vmatpush1.msra.mxu0 %v2713
    %v2715 = vand.u32 %v484, 4294901760
    %v2716 = vsub.f32 %v484, %v2715
    %v2717 = vand.u32 %v2716, 4294901760
    %2718 = vmatprep.subr.mxu0 %v2717
    %v2719 = vand.u32 %v483, 4294901760
    %v2720 = vsub.f32 %v483, %v2719
    %v2721 = vand.u32 %v2720, 4294901760
    %2722 = vmatpush1.msra.mxu0 %v2721
    %v2723 = vand.u32 %v482, 4294901760
    %v2724 = vsub.f32 %v482, %v2723
    %v2725 = vand.u32 %v2724, 4294901760
    %2726 = vmatprep.subr.mxu0 %v2725
    %v2727 = vand.u32 %v481, 4294901760
    %v2728 = vsub.f32 %v481, %v2727
    %v2729 = vand.u32 %v2728, 4294901760
    %2730 = vmatpush1.msra.mxu0 %v2729
    %v2731 = vand.u32 %v480, 4294901760
    %v2732 = vsub.f32 %v480, %v2731
    %v2733 = vand.u32 %v2732, 4294901760
    %2734 = vmatprep.subr.mxu0 %v2733
    %v2735 = vand.u32 %v479, 4294901760
    %v2736 = vsub.f32 %v479, %v2735
    %v2737 = vand.u32 %v2736, 4294901760
    %2738 = vmatpush1.msra.mxu0 %v2737
    %v2739 = vand.u32 %v478, 4294901760
    %v2740 = vsub.f32 %v478, %v2739
    %v2741 = vand.u32 %v2740, 4294901760
    %2742 = vmatprep.subr.mxu0 %v2741
    %v2743 = vand.u32 %v477, 4294901760
    %v2744 = vsub.f32 %v477, %v2743
    %v2745 = vand.u32 %v2744, 4294901760
    %2746 = vmatpush1.msra.mxu0 %v2745
    %v2747 = vand.u32 %v476, 4294901760
    %v2748 = vsub.f32 %v476, %v2747
    %v2749 = vand.u32 %v2748, 4294901760
    %2750 = vmatprep.subr.mxu0 %v2749
    %v2751 = vand.u32 %v475, 4294901760
    %v2752 = vsub.f32 %v475, %v2751
    %v2753 = vand.u32 %v2752, 4294901760
    %2754 = vmatpush1.msra.mxu0 %v2753
    %v2755 = vand.u32 %v474, 4294901760
    %v2756 = vsub.f32 %v474, %v2755
    %v2757 = vand.u32 %v2756, 4294901760
    %2758 = vmatprep.subr.mxu0 %v2757
    %v2759 = vand.u32 %v473, 4294901760
    %v2760 = vsub.f32 %v473, %v2759
    %v2761 = vand.u32 %v2760, 4294901760
    %2762 = vmatpush1.msra.mxu0 %v2761
    %v2763 = vand.u32 %v472, 4294901760
    %v2764 = vsub.f32 %v472, %v2763
    %v2765 = vand.u32 %v2764, 4294901760
    %2766 = vmatprep.subr.mxu0 %v2765
    %v2767 = vand.u32 %v471, 4294901760
    %v2768 = vsub.f32 %v471, %v2767
    %v2769 = vand.u32 %v2768, 4294901760
    %2770 = vmatpush1.msra.mxu0 %v2769
    %v2771 = vand.u32 %v470, 4294901760
    %v2772 = vsub.f32 %v470, %v2771
    %v2773 = vand.u32 %v2772, 4294901760
    %2774 = vmatprep.subr.mxu0 %v2773
    %v2775 = vand.u32 %v469, 4294901760
    %v2776 = vsub.f32 %v469, %v2775
    %v2777 = vand.u32 %v2776, 4294901760
    %2778 = vmatpush1.msra.mxu0 %v2777
    %v2779 = vand.u32 %v468, 4294901760
    %v2780 = vsub.f32 %v468, %v2779
    %v2781 = vand.u32 %v2780, 4294901760
    %2782 = vmatprep.subr.mxu0 %v2781
    %v2783 = vand.u32 %v467, 4294901760
    %v2784 = vsub.f32 %v467, %v2783
    %v2785 = vand.u32 %v2784, 4294901760
    %2786 = vmatpush1.msra.mxu0 %v2785
    %v2787 = vand.u32 %v466, 4294901760
    %v2788 = vsub.f32 %v466, %v2787
    %v2789 = vand.u32 %v2788, 4294901760
    %2790 = vmatprep.subr.mxu0 %v2789
    %v2791 = vand.u32 %v465, 4294901760
    %v2792 = vsub.f32 %v465, %v2791
    %v2793 = vand.u32 %v2792, 4294901760
    %2794 = vmatpush1.msra.mxu0 %v2793
    %v2795 = vand.u32 %v464, 4294901760
    %v2796 = vsub.f32 %v464, %v2795
    %v2797 = vand.u32 %v2796, 4294901760
    %2798 = vmatprep.subr.mxu0 %v2797
    %v2799 = vand.u32 %v463, 4294901760
    %v2800 = vsub.f32 %v463, %v2799
    %v2801 = vand.u32 %v2800, 4294901760
    %2802 = vmatpush1.msra.mxu0 %v2801
    %v2803 = vand.u32 %v462, 4294901760
    %v2804 = vsub.f32 %v462, %v2803
    %v2805 = vand.u32 %v2804, 4294901760
    %2806 = vmatprep.subr.mxu0 %v2805
    %v2807 = vand.u32 %v461, 4294901760
    %v2808 = vsub.f32 %v461, %v2807
    %v2809 = vand.u32 %v2808, 4294901760
    %2810 = vmatpush1.msra.mxu0 %v2809
    %v2811 = vand.u32 %v460, 4294901760
    %v2812 = vsub.f32 %v460, %v2811
    %v2813 = vand.u32 %v2812, 4294901760
    %2814 = vmatprep.subr.mxu0 %v2813
    %v2815 = vand.u32 %v459, 4294901760
    %v2816 = vsub.f32 %v459, %v2815
    %v2817 = vand.u32 %v2816, 4294901760
    %2818 = vmatpush1.msra.mxu0 %v2817
    %v2819 = vand.u32 %v458, 4294901760
    %v2820 = vsub.f32 %v458, %v2819
    %v2821 = vand.u32 %v2820, 4294901760
    %2822 = vmatprep.subr.mxu0 %v2821
    %v2823 = vand.u32 %v457, 4294901760
    %v2824 = vsub.f32 %v457, %v2823
    %v2825 = vand.u32 %v2824, 4294901760
    %2826 = vmatpush1.msra.mxu0 %v2825
    %v2827 = vand.u32 %v520, 4294901760
    %v2828 = vsub.f32 %v520, %v2827
    %v2829 = vand.u32 %v2828, 4294901760
    %2830 = vmatprep.subr.mxu0 %v2829
    %v2831 = vand.u32 %v519, 4294901760
    %v2832 = vsub.f32 %v519, %v2831
    %v2833 = vand.u32 %v2832, 4294901760
    %2834 = vmatpush2.msra.mxu0 %v2833
    %v2835 = vand.u32 %v518, 4294901760
    %v2836 = vsub.f32 %v518, %v2835
    %v2837 = vand.u32 %v2836, 4294901760
    %2838 = vmatprep.subr.mxu0 %v2837
    %v2839 = vand.u32 %v517, 4294901760
    %v2840 = vsub.f32 %v517, %v2839
    %v2841 = vand.u32 %v2840, 4294901760
    %2842 = vmatpush2.msra.mxu0 %v2841
    %v2843 = vand.u32 %v516, 4294901760
    %v2844 = vsub.f32 %v516, %v2843
    %v2845 = vand.u32 %v2844, 4294901760
    %2846 = vmatprep.subr.mxu0 %v2845
    %v2847 = vand.u32 %v515, 4294901760
    %v2848 = vsub.f32 %v515, %v2847
    %v2849 = vand.u32 %v2848, 4294901760
    %2850 = vmatpush2.msra.mxu0 %v2849
    %v2851 = vand.u32 %v514, 4294901760
    %v2852 = vsub.f32 %v514, %v2851
    %v2853 = vand.u32 %v2852, 4294901760
    %2854 = vmatprep.subr.mxu0 %v2853
    %v2855 = vand.u32 %v513, 4294901760
    %v2856 = vsub.f32 %v513, %v2855
    %v2857 = vand.u32 %v2856, 4294901760
    %2858 = vmatpush2.msra.mxu0 %v2857
    %v2859 = vand.u32 %v512, 4294901760
    %v2860 = vsub.f32 %v512, %v2859
    %v2861 = vand.u32 %v2860, 4294901760
    %2862 = vmatprep.subr.mxu0 %v2861
    %v2863 = vand.u32 %v511, 4294901760
    %v2864 = vsub.f32 %v511, %v2863
    %v2865 = vand.u32 %v2864, 4294901760
    %2866 = vmatpush2.msra.mxu0 %v2865
    %v2867 = vand.u32 %v510, 4294901760
    %v2868 = vsub.f32 %v510, %v2867
    %v2869 = vand.u32 %v2868, 4294901760
    %2870 = vmatprep.subr.mxu0 %v2869
    %v2871 = vand.u32 %v509, 4294901760
    %v2872 = vsub.f32 %v509, %v2871
    %v2873 = vand.u32 %v2872, 4294901760
    %2874 = vmatpush2.msra.mxu0 %v2873
    %v2875 = vand.u32 %v508, 4294901760
    %v2876 = vsub.f32 %v508, %v2875
    %v2877 = vand.u32 %v2876, 4294901760
    %2878 = vmatprep.subr.mxu0 %v2877
    %v2879 = vand.u32 %v507, 4294901760
    %v2880 = vsub.f32 %v507, %v2879
    %v2881 = vand.u32 %v2880, 4294901760
    %2882 = vmatpush2.msra.mxu0 %v2881
    %v2883 = vand.u32 %v506, 4294901760
    %v2884 = vsub.f32 %v506, %v2883
    %v2885 = vand.u32 %v2884, 4294901760
    %2886 = vmatprep.subr.mxu0 %v2885
    %v2887 = vand.u32 %v505, 4294901760
    %v2888 = vsub.f32 %v505, %v2887
    %v2889 = vand.u32 %v2888, 4294901760
    %2890 = vmatpush2.msra.mxu0 %v2889
    %v2891 = vand.u32 %v504, 4294901760
    %v2892 = vsub.f32 %v504, %v2891
    %v2893 = vand.u32 %v2892, 4294901760
    %2894 = vmatprep.subr.mxu0 %v2893
    %v2895 = vand.u32 %v503, 4294901760
    %v2896 = vsub.f32 %v503, %v2895
    %v2897 = vand.u32 %v2896, 4294901760
    %2898 = vmatpush2.msra.mxu0 %v2897
    %v2899 = vand.u32 %v502, 4294901760
    %v2900 = vsub.f32 %v502, %v2899
    %v2901 = vand.u32 %v2900, 4294901760
    %2902 = vmatprep.subr.mxu0 %v2901
    %v2903 = vand.u32 %v501, 4294901760
    %v2904 = vsub.f32 %v501, %v2903
    %v2905 = vand.u32 %v2904, 4294901760
    %2906 = vmatpush2.msra.mxu0 %v2905
    %v2907 = vand.u32 %v500, 4294901760
    %v2908 = vsub.f32 %v500, %v2907
    %v2909 = vand.u32 %v2908, 4294901760
    %2910 = vmatprep.subr.mxu0 %v2909
    %v2911 = vand.u32 %v499, 4294901760
    %v2912 = vsub.f32 %v499, %v2911
    %v2913 = vand.u32 %v2912, 4294901760
    %2914 = vmatpush2.msra.mxu0 %v2913
    %v2915 = vand.u32 %v498, 4294901760
    %v2916 = vsub.f32 %v498, %v2915
    %v2917 = vand.u32 %v2916, 4294901760
    %2918 = vmatprep.subr.mxu0 %v2917
    %v2919 = vand.u32 %v497, 4294901760
    %v2920 = vsub.f32 %v497, %v2919
    %v2921 = vand.u32 %v2920, 4294901760
    %2922 = vmatpush2.msra.mxu0 %v2921
    %v2923 = vand.u32 %v496, 4294901760
    %v2924 = vsub.f32 %v496, %v2923
    %v2925 = vand.u32 %v2924, 4294901760
    %2926 = vmatprep.subr.mxu0 %v2925
    %v2927 = vand.u32 %v495, 4294901760
    %v2928 = vsub.f32 %v495, %v2927
    %v2929 = vand.u32 %v2928, 4294901760
    %2930 = vmatpush2.msra.mxu0 %v2929
    %v2931 = vand.u32 %v494, 4294901760
    %v2932 = vsub.f32 %v494, %v2931
    %v2933 = vand.u32 %v2932, 4294901760
    %2934 = vmatprep.subr.mxu0 %v2933
    %v2935 = vand.u32 %v493, 4294901760
    %v2936 = vsub.f32 %v493, %v2935
    %v2937 = vand.u32 %v2936, 4294901760
    %2938 = vmatpush2.msra.mxu0 %v2937
    %v2939 = vand.u32 %v492, 4294901760
    %v2940 = vsub.f32 %v492, %v2939
    %v2941 = vand.u32 %v2940, 4294901760
    %2942 = vmatprep.subr.mxu0 %v2941
    %v2943 = vand.u32 %v491, 4294901760
    %v2944 = vsub.f32 %v491, %v2943
    %v2945 = vand.u32 %v2944, 4294901760
    %2946 = vmatpush2.msra.mxu0 %v2945
    %v2947 = vand.u32 %v490, 4294901760
    %v2948 = vsub.f32 %v490, %v2947
    %v2949 = vand.u32 %v2948, 4294901760
    %2950 = vmatprep.subr.mxu0 %v2949
    %v2951 = vand.u32 %v489, 4294901760
    %v2952 = vsub.f32 %v489, %v2951
    %v2953 = vand.u32 %v2952, 4294901760
    %2954 = vmatpush2.msra.mxu0 %v2953
    %v2955 = vand.u32 %v392, 4294901760
    %2956 = vmatprep.mubr.f32.mxu0 %v2955
    %v2957 = vand.u32 %v391, 4294901760
    %2958 = vmatmul.mubr.f32.gmra.mxu0 %v2957
    %v2959 = vpop.f32.mrf.mxu0
    %v2960 = vadd.f32 %v2695, %v2959
    %v2961 = vpop.f32.mrf.mxu0
    %v2962 = vadd.f32 %v2697, %v2961
    %2963 = vdwg.mxu0
    %v2964 = vand.u32 %v488, 4294901760
    %2965 = vmatprep.subr.mxu0 %v2964
    %v2966 = vand.u32 %v487, 4294901760
    %2967 = vmatpush1.msra.mxu0 %v2966
    %v2968 = vand.u32 %v486, 4294901760
    %2969 = vmatprep.subr.mxu0 %v2968
    %v2970 = vand.u32 %v485, 4294901760
    %2971 = vmatpush1.msra.mxu0 %v2970
    %v2972 = vand.u32 %v484, 4294901760
    %2973 = vmatprep.subr.mxu0 %v2972
    %v2974 = vand.u32 %v483, 4294901760
    %2975 = vmatpush1.msra.mxu0 %v2974
    %v2976 = vand.u32 %v482, 4294901760
    %2977 = vmatprep.subr.mxu0 %v2976
    %v2978 = vand.u32 %v481, 4294901760
    %2979 = vmatpush1.msra.mxu0 %v2978
    %v2980 = vand.u32 %v480, 4294901760
    %2981 = vmatprep.subr.mxu0 %v2980
    %v2982 = vand.u32 %v479, 4294901760
    %2983 = vmatpush1.msra.mxu0 %v2982
    %v2984 = vand.u32 %v478, 4294901760
    %2985 = vmatprep.subr.mxu0 %v2984
    %v2986 = vand.u32 %v477, 4294901760
    %2987 = vmatpush1.msra.mxu0 %v2986
    %v2988 = vand.u32 %v476, 4294901760
    %2989 = vmatprep.subr.mxu0 %v2988
    %v2990 = vand.u32 %v475, 4294901760
    %2991 = vmatpush1.msra.mxu0 %v2990
    %v2992 = vand.u32 %v474, 4294901760
    %2993 = vmatprep.subr.mxu0 %v2992
    %v2994 = vand.u32 %v473, 4294901760
    %2995 = vmatpush1.msra.mxu0 %v2994
    %v2996 = vand.u32 %v472, 4294901760
    %2997 = vmatprep.subr.mxu0 %v2996
    %v2998 = vand.u32 %v471, 4294901760
    %2999 = vmatpush1.msra.mxu0 %v2998
    %v3000 = vand.u32 %v470, 4294901760
    %3001 = vmatprep.subr.mxu0 %v3000
    %v3002 = vand.u32 %v469, 4294901760
    %3003 = vmatpush1.msra.mxu0 %v3002
    %v3004 = vand.u32 %v468, 4294901760
    %3005 = vmatprep.subr.mxu0 %v3004
    %v3006 = vand.u32 %v467, 4294901760
    %3007 = vmatpush1.msra.mxu0 %v3006
    %v3008 = vand.u32 %v466, 4294901760
    %3009 = vmatprep.subr.mxu0 %v3008
    %v3010 = vand.u32 %v465, 4294901760
    %3011 = vmatpush1.msra.mxu0 %v3010
    %v3012 = vand.u32 %v464, 4294901760
    %3013 = vmatprep.subr.mxu0 %v3012
    %v3014 = vand.u32 %v463, 4294901760
    %3015 = vmatpush1.msra.mxu0 %v3014
    %v3016 = vand.u32 %v462, 4294901760
    %3017 = vmatprep.subr.mxu0 %v3016
    %v3018 = vand.u32 %v461, 4294901760
    %3019 = vmatpush1.msra.mxu0 %v3018
    %v3020 = vand.u32 %v460, 4294901760
    %3021 = vmatprep.subr.mxu0 %v3020
    %v3022 = vand.u32 %v459, 4294901760
    %3023 = vmatpush1.msra.mxu0 %v3022
    %v3024 = vand.u32 %v458, 4294901760
    %3025 = vmatprep.subr.mxu0 %v3024
    %v3026 = vand.u32 %v457, 4294901760
    %3027 = vmatpush1.msra.mxu0 %v3026
    %v3028 = vand.u32 %v520, 4294901760
    %3029 = vmatprep.subr.mxu0 %v3028
    %v3030 = vand.u32 %v519, 4294901760
    %3031 = vmatpush2.msra.mxu0 %v3030
    %v3032 = vand.u32 %v518, 4294901760
    %3033 = vmatprep.subr.mxu0 %v3032
    %v3034 = vand.u32 %v517, 4294901760
    %3035 = vmatpush2.msra.mxu0 %v3034
    %v3036 = vand.u32 %v516, 4294901760
    %3037 = vmatprep.subr.mxu0 %v3036
    %v3038 = vand.u32 %v515, 4294901760
    %3039 = vmatpush2.msra.mxu0 %v3038
    %v3040 = vand.u32 %v514, 4294901760
    %3041 = vmatprep.subr.mxu0 %v3040
    %v3042 = vand.u32 %v513, 4294901760
    %3043 = vmatpush2.msra.mxu0 %v3042
    %v3044 = vand.u32 %v512, 4294901760
    %3045 = vmatprep.subr.mxu0 %v3044
    %v3046 = vand.u32 %v511, 4294901760
    %3047 = vmatpush2.msra.mxu0 %v3046
    %v3048 = vand.u32 %v510, 4294901760
    %3049 = vmatprep.subr.mxu0 %v3048
    %v3050 = vand.u32 %v509, 4294901760
    %3051 = vmatpush2.msra.mxu0 %v3050
    %v3052 = vand.u32 %v508, 4294901760
    %3053 = vmatprep.subr.mxu0 %v3052
    %v3054 = vand.u32 %v507, 4294901760
    %3055 = vmatpush2.msra.mxu0 %v3054
    %v3056 = vand.u32 %v506, 4294901760
    %3057 = vmatprep.subr.mxu0 %v3056
    %v3058 = vand.u32 %v505, 4294901760
    %3059 = vmatpush2.msra.mxu0 %v3058
    %v3060 = vand.u32 %v504, 4294901760
    %3061 = vmatprep.subr.mxu0 %v3060
    %v3062 = vand.u32 %v503, 4294901760
    %3063 = vmatpush2.msra.mxu0 %v3062
    %v3064 = vand.u32 %v502, 4294901760
    %3065 = vmatprep.subr.mxu0 %v3064
    %v3066 = vand.u32 %v501, 4294901760
    %3067 = vmatpush2.msra.mxu0 %v3066
    %v3068 = vand.u32 %v500, 4294901760
    %3069 = vmatprep.subr.mxu0 %v3068
    %v3070 = vand.u32 %v499, 4294901760
    %3071 = vmatpush2.msra.mxu0 %v3070
    %v3072 = vand.u32 %v498, 4294901760
    %3073 = vmatprep.subr.mxu0 %v3072
    %v3074 = vand.u32 %v497, 4294901760
    %3075 = vmatpush2.msra.mxu0 %v3074
    %v3076 = vand.u32 %v496, 4294901760
    %3077 = vmatprep.subr.mxu0 %v3076
    %v3078 = vand.u32 %v495, 4294901760
    %3079 = vmatpush2.msra.mxu0 %v3078
    %v3080 = vand.u32 %v494, 4294901760
    %3081 = vmatprep.subr.mxu0 %v3080
    %v3082 = vand.u32 %v493, 4294901760
    %3083 = vmatpush2.msra.mxu0 %v3082
    %v3084 = vand.u32 %v492, 4294901760
    %3085 = vmatprep.subr.mxu0 %v3084
    %v3086 = vand.u32 %v491, 4294901760
    %3087 = vmatpush2.msra.mxu0 %v3086
    %v3088 = vand.u32 %v490, 4294901760
    %3089 = vmatprep.subr.mxu0 %v3088
    %v3090 = vand.u32 %v489, 4294901760
    %3091 = vmatpush2.msra.mxu0 %v3090
    %v3092 = vand.u32 %v392, 4294901760
    %3093 = vmatprep.mubr.f32.mxu0 %v3092
    %v3094 = vand.u32 %v391, 4294901760
    %3095 = vmatmul.mubr.f32.gmra.mxu0 %v3094
    %v3096 = vpop.f32.mrf.mxu0
    %v3097 = vadd.f32 %v2960, %v3096
    %v3098 = vpop.f32.mrf.mxu0
    %v3099 = vadd.f32 %v2962, %v3098
    %3100 = vdwg.mxu0
    %3101 = vst [vmem:[#allocation15] sm:$0xff] %v3097
    %3102 = vst [vmem:[#allocation15 + $0x8] sm:$0xff] %v3099
    %v3103 = vld [vmem:[#allocation10] sm:$0xff]
    %v3104 = vld [vmem:[#allocation10 + $0x8] sm:$0xff]
    %v3105 = vld [vmem:[#allocation10 + $0x10] sm:$0xff]
    %v3106 = vld [vmem:[#allocation10 + $0x18] sm:$0xff]
    %v3107 = vld [vmem:[#allocation10 + $0x20] sm:$0xff]
    %v3108 = vld [vmem:[#allocation10 + $0x28] sm:$0xff]
    %v3109 = vld [vmem:[#allocation10 + $0x30] sm:$0xff]
    %v3110 = vld [vmem:[#allocation10 + $0x38] sm:$0xff]
    %v3111 = vld [vmem:[#allocation10 + $0x40] sm:$0xff]
    %v3112 = vld [vmem:[#allocation10 + $0x48] sm:$0xff]
    %v3113 = vld [vmem:[#allocation10 + $0x50] sm:$0xff]
    %v3114 = vld [vmem:[#allocation10 + $0x58] sm:$0xff]
    %v3115 = vld [vmem:[#allocation10 + $0x60] sm:$0xff]
    %v3116 = vld [vmem:[#allocation10 + $0x68] sm:$0xff]
    %v3117 = vld [vmem:[#allocation10 + $0x70] sm:$0xff]
    %v3118 = vld [vmem:[#allocation10 + $0x78] sm:$0xff]
    %v3119 = vld [vmem:[#allocation10 + $0x80] sm:$0xff]
    %v3120 = vld [vmem:[#allocation10 + $0x88] sm:$0xff]
    %v3121 = vld [vmem:[#allocation10 + $0x90] sm:$0xff]
    %v3122 = vld [vmem:[#allocation10 + $0x98] sm:$0xff]
    %v3123 = vld [vmem:[#allocation10 + $0xa0] sm:$0xff]
    %v3124 = vld [vmem:[#allocation10 + $0xa8] sm:$0xff]
    %v3125 = vld [vmem:[#allocation10 + $0xb0] sm:$0xff]
    %v3126 = vld [vmem:[#allocation10 + $0xb8] sm:$0xff]
    %v3127 = vld [vmem:[#allocation10 + $0xc0] sm:$0xff]
    %v3128 = vld [vmem:[#allocation10 + $0xc8] sm:$0xff]
    %v3129 = vld [vmem:[#allocation10 + $0xd0] sm:$0xff]
    %v3130 = vld [vmem:[#allocation10 + $0xd8] sm:$0xff]
    %v3131 = vld [vmem:[#allocation10 + $0xe0] sm:$0xff]
    %v3132 = vld [vmem:[#allocation10 + $0xe8] sm:$0xff]
    %v3133 = vld [vmem:[#allocation10 + $0xf0] sm:$0xff]
    %v3134 = vld [vmem:[#allocation10 + $0xf8] sm:$0xff]
    %v3135 = vld [vmem:[%s10] sm:$0x1]
    %v3137 = vlaneseq
    %v3138 = vshrl.u32 %v3137, 7
    %v3139 = vsub.s32 0, %v3138
    %v3140 = vrot.slane %v3135, %v3139
    %3142 = vmatprep.subr.mxu0 0.0
    %v3143 = vand.u32 %v3118, 4294901760
    %3144 = vmatpush1.msra.mxu0 %v3143
    %3145 = vmatprep.subr.mxu0 0.0
    %v3146 = vand.u32 %v3117, 4294901760
    %3147 = vmatpush1.msra.mxu0 %v3146
    %3148 = vmatprep.subr.mxu0 0.0
    %v3149 = vand.u32 %v3116, 4294901760
    %3150 = vmatpush1.msra.mxu0 %v3149
    %3151 = vmatprep.subr.mxu0 0.0
    %v3152 = vand.u32 %v3115, 4294901760
    %3153 = vmatpush1.msra.mxu0 %v3152
    %3154 = vmatprep.subr.mxu0 0.0
    %v3155 = vand.u32 %v3114, 4294901760
    %3156 = vmatpush1.msra.mxu0 %v3155
    %3157 = vmatprep.subr.mxu0 0.0
    %v3158 = vand.u32 %v3113, 4294901760
    %3159 = vmatpush1.msra.mxu0 %v3158
    %3160 = vmatprep.subr.mxu0 0.0
    %v3161 = vand.u32 %v3112, 4294901760
    %3162 = vmatpush1.msra.mxu0 %v3161
    %3163 = vmatprep.subr.mxu0 0.0
    %v3164 = vand.u32 %v3111, 4294901760
    %3165 = vmatpush1.msra.mxu0 %v3164
    %3166 = vmatprep.subr.mxu0 0.0
    %v3167 = vand.u32 %v3110, 4294901760
    %3168 = vmatpush1.msra.mxu0 %v3167
    %3169 = vmatprep.subr.mxu0 0.0
    %v3170 = vand.u32 %v3109, 4294901760
    %3171 = vmatpush1.msra.mxu0 %v3170
    %3172 = vmatprep.subr.mxu0 0.0
    %v3173 = vand.u32 %v3108, 4294901760
    %3174 = vmatpush1.msra.mxu0 %v3173
    %3175 = vmatprep.subr.mxu0 0.0
    %v3176 = vand.u32 %v3107, 4294901760
    %3177 = vmatpush1.msra.mxu0 %v3176
    %3178 = vmatprep.subr.mxu0 0.0
    %v3179 = vand.u32 %v3106, 4294901760
    %3180 = vmatpush1.msra.mxu0 %v3179
    %3181 = vmatprep.subr.mxu0 0.0
    %v3182 = vand.u32 %v3105, 4294901760
    %3183 = vmatpush1.msra.mxu0 %v3182
    %3184 = vmatprep.subr.mxu0 0.0
    %v3185 = vand.u32 %v3104, 4294901760
    %3186 = vmatpush1.msra.mxu0 %v3185
    %3187 = vmatprep.subr.mxu0 0.0
    %v3188 = vand.u32 %v3103, 4294901760
    %3189 = vmatpush1.msra.mxu0 %v3188
    %3190 = vmatprep.subr.mxu0 0.0
    %v3191 = vand.u32 %v3134, 4294901760
    %3192 = vmatpush2.msra.mxu0 %v3191
    %3193 = vmatprep.subr.mxu0 0.0
    %v3194 = vand.u32 %v3133, 4294901760
    %3195 = vmatpush2.msra.mxu0 %v3194
    %3196 = vmatprep.subr.mxu0 0.0
    %v3197 = vand.u32 %v3132, 4294901760
    %3198 = vmatpush2.msra.mxu0 %v3197
    %3199 = vmatprep.subr.mxu0 0.0
    %v3200 = vand.u32 %v3131, 4294901760
    %3201 = vmatpush2.msra.mxu0 %v3200
    %3202 = vmatprep.subr.mxu0 0.0
    %v3203 = vand.u32 %v3130, 4294901760
    %3204 = vmatpush2.msra.mxu0 %v3203
    %3205 = vmatprep.subr.mxu0 0.0
    %v3206 = vand.u32 %v3129, 4294901760
    %3207 = vmatpush2.msra.mxu0 %v3206
    %3208 = vmatprep.subr.mxu0 0.0
    %v3209 = vand.u32 %v3128, 4294901760
    %3210 = vmatpush2.msra.mxu0 %v3209
    %3211 = vmatprep.subr.mxu0 0.0
    %v3212 = vand.u32 %v3127, 4294901760
    %3213 = vmatpush2.msra.mxu0 %v3212
    %3214 = vmatprep.subr.mxu0 0.0
    %v3215 = vand.u32 %v3126, 4294901760
    %3216 = vmatpush2.msra.mxu0 %v3215
    %3217 = vmatprep.subr.mxu0 0.0
    %v3218 = vand.u32 %v3125, 4294901760
    %3219 = vmatpush2.msra.mxu0 %v3218
    %3220 = vmatprep.subr.mxu0 0.0
    %v3221 = vand.u32 %v3124, 4294901760
    %3222 = vmatpush2.msra.mxu0 %v3221
    %3223 = vmatprep.subr.mxu0 0.0
    %v3224 = vand.u32 %v3123, 4294901760
    %3225 = vmatpush2.msra.mxu0 %v3224
    %3226 = vmatprep.subr.mxu0 0.0
    %v3227 = vand.u32 %v3122, 4294901760
    %3228 = vmatpush2.msra.mxu0 %v3227
    %3229 = vmatprep.subr.mxu0 0.0
    %v3230 = vand.u32 %v3121, 4294901760
    %3231 = vmatpush2.msra.mxu0 %v3230
    %3232 = vmatprep.subr.mxu0 0.0
    %v3233 = vand.u32 %v3120, 4294901760
    %3234 = vmatpush2.msra.mxu0 %v3233
    %3235 = vmatprep.subr.mxu0 0.0
    %v3236 = vand.u32 %v3119, 4294901760
    %3237 = vmatpush2.msra.mxu0 %v3236
    %v3238 = vand.u32 %v3099, 4294901760
    %v3239 = vsub.f32 %v3099, %v3238
    %v3240 = vand.u32 %v3239, 4294901760
    %v3241 = vsub.f32 %v3239, %v3240
    %v3242 = vand.u32 %v3241, 4294901760
    %3243 = vmatprep.mubr.f32.mxu0 %v3242
    %v3244 = vand.u32 %v3097, 4294901760
    %v3245 = vsub.f32 %v3097, %v3244
    %v3246 = vand.u32 %v3245, 4294901760
    %v3247 = vsub.f32 %v3245, %v3246
    %v3248 = vand.u32 %v3247, 4294901760
    %3249 = vmatmul.mubr.f32.gmra.mxu0 %v3248
    %v3250 = vpop.f32.mrf.mxu0
    %v3251 = vadd.f32 %v3140, %v3250
    %v3252 = vpop.f32.mrf.mxu0
    %3253 = vdwg.mxu0
    %3254 = vmatprep.subr.mxu0 0.0
    %v3255 = vand.u32 %v3118, 4294901760
    %v3256 = vsub.f32 %v3118, %v3255
    %v3257 = vand.u32 %v3256, 4294901760
    %v3258 = vsub.f32 %v3256, %v3257
    %v3259 = vand.u32 %v3258, 4294901760
    %3260 = vmatpush1.msra.mxu0 %v3259
    %3261 = vmatprep.subr.mxu0 0.0
    %v3262 = vand.u32 %v3117, 4294901760
    %v3263 = vsub.f32 %v3117, %v3262
    %v3264 = vand.u32 %v3263, 4294901760
    %v3265 = vsub.f32 %v3263, %v3264
    %v3266 = vand.u32 %v3265, 4294901760
    %3267 = vmatpush1.msra.mxu0 %v3266
    %3268 = vmatprep.subr.mxu0 0.0
    %v3269 = vand.u32 %v3116, 4294901760
    %v3270 = vsub.f32 %v3116, %v3269
    %v3271 = vand.u32 %v3270, 4294901760
    %v3272 = vsub.f32 %v3270, %v3271
    %v3273 = vand.u32 %v3272, 4294901760
    %3274 = vmatpush1.msra.mxu0 %v3273
    %3275 = vmatprep.subr.mxu0 0.0
    %v3276 = vand.u32 %v3115, 4294901760
    %v3277 = vsub.f32 %v3115, %v3276
    %v3278 = vand.u32 %v3277, 4294901760
    %v3279 = vsub.f32 %v3277, %v3278
    %v3280 = vand.u32 %v3279, 4294901760
    %3281 = vmatpush1.msra.mxu0 %v3280
    %3282 = vmatprep.subr.mxu0 0.0
    %v3283 = vand.u32 %v3114, 4294901760
    %v3284 = vsub.f32 %v3114, %v3283
    %v3285 = vand.u32 %v3284, 4294901760
    %v3286 = vsub.f32 %v3284, %v3285
    %v3287 = vand.u32 %v3286, 4294901760
    %3288 = vmatpush1.msra.mxu0 %v3287
    %3289 = vmatprep.subr.mxu0 0.0
    %v3290 = vand.u32 %v3113, 4294901760
    %v3291 = vsub.f32 %v3113, %v3290
    %v3292 = vand.u32 %v3291, 4294901760
    %v3293 = vsub.f32 %v3291, %v3292
    %v3294 = vand.u32 %v3293, 4294901760
    %3295 = vmatpush1.msra.mxu0 %v3294
    %3296 = vmatprep.subr.mxu0 0.0
    %v3297 = vand.u32 %v3112, 4294901760
    %v3298 = vsub.f32 %v3112, %v3297
    %v3299 = vand.u32 %v3298, 4294901760
    %v3300 = vsub.f32 %v3298, %v3299
    %v3301 = vand.u32 %v3300, 4294901760
    %3302 = vmatpush1.msra.mxu0 %v3301
    %3303 = vmatprep.subr.mxu0 0.0
    %v3304 = vand.u32 %v3111, 4294901760
    %v3305 = vsub.f32 %v3111, %v3304
    %v3306 = vand.u32 %v3305, 4294901760
    %v3307 = vsub.f32 %v3305, %v3306
    %v3308 = vand.u32 %v3307, 4294901760
    %3309 = vmatpush1.msra.mxu0 %v3308
    %3310 = vmatprep.subr.mxu0 0.0
    %v3311 = vand.u32 %v3110, 4294901760
    %v3312 = vsub.f32 %v3110, %v3311
    %v3313 = vand.u32 %v3312, 4294901760
    %v3314 = vsub.f32 %v3312, %v3313
    %v3315 = vand.u32 %v3314, 4294901760
    %3316 = vmatpush1.msra.mxu0 %v3315
    %3317 = vmatprep.subr.mxu0 0.0
    %v3318 = vand.u32 %v3109, 4294901760
    %v3319 = vsub.f32 %v3109, %v3318
    %v3320 = vand.u32 %v3319, 4294901760
    %v3321 = vsub.f32 %v3319, %v3320
    %v3322 = vand.u32 %v3321, 4294901760
    %3323 = vmatpush1.msra.mxu0 %v3322
    %3324 = vmatprep.subr.mxu0 0.0
    %v3325 = vand.u32 %v3108, 4294901760
    %v3326 = vsub.f32 %v3108, %v3325
    %v3327 = vand.u32 %v3326, 4294901760
    %v3328 = vsub.f32 %v3326, %v3327
    %v3329 = vand.u32 %v3328, 4294901760
    %3330 = vmatpush1.msra.mxu0 %v3329
    %3331 = vmatprep.subr.mxu0 0.0
    %v3332 = vand.u32 %v3107, 4294901760
    %v3333 = vsub.f32 %v3107, %v3332
    %v3334 = vand.u32 %v3333, 4294901760
    %v3335 = vsub.f32 %v3333, %v3334
    %v3336 = vand.u32 %v3335, 4294901760
    %3337 = vmatpush1.msra.mxu0 %v3336
    %3338 = vmatprep.subr.mxu0 0.0
    %v3339 = vand.u32 %v3106, 4294901760
    %v3340 = vsub.f32 %v3106, %v3339
    %v3341 = vand.u32 %v3340, 4294901760
    %v3342 = vsub.f32 %v3340, %v3341
    %v3343 = vand.u32 %v3342, 4294901760
    %3344 = vmatpush1.msra.mxu0 %v3343
    %3345 = vmatprep.subr.mxu0 0.0
    %v3346 = vand.u32 %v3105, 4294901760
    %v3347 = vsub.f32 %v3105, %v3346
    %v3348 = vand.u32 %v3347, 4294901760
    %v3349 = vsub.f32 %v3347, %v3348
    %v3350 = vand.u32 %v3349, 4294901760
    %3351 = vmatpush1.msra.mxu0 %v3350
    %3352 = vmatprep.subr.mxu0 0.0
    %v3353 = vand.u32 %v3104, 4294901760
    %v3354 = vsub.f32 %v3104, %v3353
    %v3355 = vand.u32 %v3354, 4294901760
    %v3356 = vsub.f32 %v3354, %v3355
    %v3357 = vand.u32 %v3356, 4294901760
    %3358 = vmatpush1.msra.mxu0 %v3357
    %3359 = vmatprep.subr.mxu0 0.0
    %v3360 = vand.u32 %v3103, 4294901760
    %v3361 = vsub.f32 %v3103, %v3360
    %v3362 = vand.u32 %v3361, 4294901760
    %v3363 = vsub.f32 %v3361, %v3362
    %v3364 = vand.u32 %v3363, 4294901760
    %3365 = vmatpush1.msra.mxu0 %v3364
    %3366 = vmatprep.subr.mxu0 0.0
    %v3367 = vand.u32 %v3134, 4294901760
    %v3368 = vsub.f32 %v3134, %v3367
    %v3369 = vand.u32 %v3368, 4294901760
    %v3370 = vsub.f32 %v3368, %v3369
    %v3371 = vand.u32 %v3370, 4294901760
    %3372 = vmatpush2.msra.mxu0 %v3371
    %3373 = vmatprep.subr.mxu0 0.0
    %v3374 = vand.u32 %v3133, 4294901760
    %v3375 = vsub.f32 %v3133, %v3374
    %v3376 = vand.u32 %v3375, 4294901760
    %v3377 = vsub.f32 %v3375, %v3376
    %v3378 = vand.u32 %v3377, 4294901760
    %3379 = vmatpush2.msra.mxu0 %v3378
    %3380 = vmatprep.subr.mxu0 0.0
    %v3381 = vand.u32 %v3132, 4294901760
    %v3382 = vsub.f32 %v3132, %v3381
    %v3383 = vand.u32 %v3382, 4294901760
    %v3384 = vsub.f32 %v3382, %v3383
    %v3385 = vand.u32 %v3384, 4294901760
    %3386 = vmatpush2.msra.mxu0 %v3385
    %3387 = vmatprep.subr.mxu0 0.0
    %v3388 = vand.u32 %v3131, 4294901760
    %v3389 = vsub.f32 %v3131, %v3388
    %v3390 = vand.u32 %v3389, 4294901760
    %v3391 = vsub.f32 %v3389, %v3390
    %v3392 = vand.u32 %v3391, 4294901760
    %3393 = vmatpush2.msra.mxu0 %v3392
    %3394 = vmatprep.subr.mxu0 0.0
    %v3395 = vand.u32 %v3130, 4294901760
    %v3396 = vsub.f32 %v3130, %v3395
    %v3397 = vand.u32 %v3396, 4294901760
    %v3398 = vsub.f32 %v3396, %v3397
    %v3399 = vand.u32 %v3398, 4294901760
    %3400 = vmatpush2.msra.mxu0 %v3399
    %3401 = vmatprep.subr.mxu0 0.0
    %v3402 = vand.u32 %v3129, 4294901760
    %v3403 = vsub.f32 %v3129, %v3402
    %v3404 = vand.u32 %v3403, 4294901760
    %v3405 = vsub.f32 %v3403, %v3404
    %v3406 = vand.u32 %v3405, 4294901760
    %3407 = vmatpush2.msra.mxu0 %v3406
    %3408 = vmatprep.subr.mxu0 0.0
    %v3409 = vand.u32 %v3128, 4294901760
    %v3410 = vsub.f32 %v3128, %v3409
    %v3411 = vand.u32 %v3410, 4294901760
    %v3412 = vsub.f32 %v3410, %v3411
    %v3413 = vand.u32 %v3412, 4294901760
    %3414 = vmatpush2.msra.mxu0 %v3413
    %3415 = vmatprep.subr.mxu0 0.0
    %v3416 = vand.u32 %v3127, 4294901760
    %v3417 = vsub.f32 %v3127, %v3416
    %v3418 = vand.u32 %v3417, 4294901760
    %v3419 = vsub.f32 %v3417, %v3418
    %v3420 = vand.u32 %v3419, 4294901760
    %3421 = vmatpush2.msra.mxu0 %v3420
    %3422 = vmatprep.subr.mxu0 0.0
    %v3423 = vand.u32 %v3126, 4294901760
    %v3424 = vsub.f32 %v3126, %v3423
    %v3425 = vand.u32 %v3424, 4294901760
    %v3426 = vsub.f32 %v3424, %v3425
    %v3427 = vand.u32 %v3426, 4294901760
    %3428 = vmatpush2.msra.mxu0 %v3427
    %3429 = vmatprep.subr.mxu0 0.0
    %v3430 = vand.u32 %v3125, 4294901760
    %v3431 = vsub.f32 %v3125, %v3430
    %v3432 = vand.u32 %v3431, 4294901760
    %v3433 = vsub.f32 %v3431, %v3432
    %v3434 = vand.u32 %v3433, 4294901760
    %3435 = vmatpush2.msra.mxu0 %v3434
    %3436 = vmatprep.subr.mxu0 0.0
    %v3437 = vand.u32 %v3124, 4294901760
    %v3438 = vsub.f32 %v3124, %v3437
    %v3439 = vand.u32 %v3438, 4294901760
    %v3440 = vsub.f32 %v3438, %v3439
    %v3441 = vand.u32 %v3440, 4294901760
    %3442 = vmatpush2.msra.mxu0 %v3441
    %3443 = vmatprep.subr.mxu0 0.0
    %v3444 = vand.u32 %v3123, 4294901760
    %v3445 = vsub.f32 %v3123, %v3444
    %v3446 = vand.u32 %v3445, 4294901760
    %v3447 = vsub.f32 %v3445, %v3446
    %v3448 = vand.u32 %v3447, 4294901760
    %3449 = vmatpush2.msra.mxu0 %v3448
    %3450 = vmatprep.subr.mxu0 0.0
    %v3451 = vand.u32 %v3122, 4294901760
    %v3452 = vsub.f32 %v3122, %v3451
    %v3453 = vand.u32 %v3452, 4294901760
    %v3454 = vsub.f32 %v3452, %v3453
    %v3455 = vand.u32 %v3454, 4294901760
    %3456 = vmatpush2.msra.mxu0 %v3455
    %3457 = vmatprep.subr.mxu0 0.0
    %v3458 = vand.u32 %v3121, 4294901760
    %v3459 = vsub.f32 %v3121, %v3458
    %v3460 = vand.u32 %v3459, 4294901760
    %v3461 = vsub.f32 %v3459, %v3460
    %v3462 = vand.u32 %v3461, 4294901760
    %3463 = vmatpush2.msra.mxu0 %v3462
    %3464 = vmatprep.subr.mxu0 0.0
    %v3465 = vand.u32 %v3120, 4294901760
    %v3466 = vsub.f32 %v3120, %v3465
    %v3467 = vand.u32 %v3466, 4294901760
    %v3468 = vsub.f32 %v3466, %v3467
    %v3469 = vand.u32 %v3468, 4294901760
    %3470 = vmatpush2.msra.mxu0 %v3469
    %3471 = vmatprep.subr.mxu0 0.0
    %v3472 = vand.u32 %v3119, 4294901760
    %v3473 = vsub.f32 %v3119, %v3472
    %v3474 = vand.u32 %v3473, 4294901760
    %v3475 = vsub.f32 %v3473, %v3474
    %v3476 = vand.u32 %v3475, 4294901760
    %3477 = vmatpush2.msra.mxu0 %v3476
    %v3478 = vand.u32 %v3099, 4294901760
    %3479 = vmatprep.mubr.f32.mxu0 %v3478
    %v3480 = vand.u32 %v3097, 4294901760
    %3481 = vmatmul.mubr.f32.gmra.mxu0 %v3480
    %v3482 = vpop.f32.mrf.mxu0
    %v3483 = vadd.f32 %v3251, %v3482
    %v3484 = vpop.f32.mrf.mxu0
    %3485 = vdwg.mxu0
    %3486 = vmatprep.subr.mxu0 0.0
    %v3487 = vand.u32 %v3118, 4294901760
    %v3488 = vsub.f32 %v3118, %v3487
    %3489 = vmatpush1.msra.mxu0 %v3488
    %3490 = vmatprep.subr.mxu0 0.0
    %v3491 = vand.u32 %v3117, 4294901760
    %v3492 = vsub.f32 %v3117, %v3491
    %3493 = vmatpush1.msra.mxu0 %v3492
    %3494 = vmatprep.subr.mxu0 0.0
    %v3495 = vand.u32 %v3116, 4294901760
    %v3496 = vsub.f32 %v3116, %v3495
    %3497 = vmatpush1.msra.mxu0 %v3496
    %3498 = vmatprep.subr.mxu0 0.0
    %v3499 = vand.u32 %v3115, 4294901760
    %v3500 = vsub.f32 %v3115, %v3499
    %3501 = vmatpush1.msra.mxu0 %v3500
    %3502 = vmatprep.subr.mxu0 0.0
    %v3503 = vand.u32 %v3114, 4294901760
    %v3504 = vsub.f32 %v3114, %v3503
    %3505 = vmatpush1.msra.mxu0 %v3504
    %3506 = vmatprep.subr.mxu0 0.0
    %v3507 = vand.u32 %v3113, 4294901760
    %v3508 = vsub.f32 %v3113, %v3507
    %3509 = vmatpush1.msra.mxu0 %v3508
    %3510 = vmatprep.subr.mxu0 0.0
    %v3511 = vand.u32 %v3112, 4294901760
    %v3512 = vsub.f32 %v3112, %v3511
    %3513 = vmatpush1.msra.mxu0 %v3512
    %3514 = vmatprep.subr.mxu0 0.0
    %v3515 = vand.u32 %v3111, 4294901760
    %v3516 = vsub.f32 %v3111, %v3515
    %3517 = vmatpush1.msra.mxu0 %v3516
    %3518 = vmatprep.subr.mxu0 0.0
    %v3519 = vand.u32 %v3110, 4294901760
    %v3520 = vsub.f32 %v3110, %v3519
    %3521 = vmatpush1.msra.mxu0 %v3520
    %3522 = vmatprep.subr.mxu0 0.0
    %v3523 = vand.u32 %v3109, 4294901760
    %v3524 = vsub.f32 %v3109, %v3523
    %3525 = vmatpush1.msra.mxu0 %v3524
    %3526 = vmatprep.subr.mxu0 0.0
    %v3527 = vand.u32 %v3108, 4294901760
    %v3528 = vsub.f32 %v3108, %v3527
    %3529 = vmatpush1.msra.mxu0 %v3528
    %3530 = vmatprep.subr.mxu0 0.0
    %v3531 = vand.u32 %v3107, 4294901760
    %v3532 = vsub.f32 %v3107, %v3531
    %3533 = vmatpush1.msra.mxu0 %v3532
    %3534 = vmatprep.subr.mxu0 0.0
    %v3535 = vand.u32 %v3106, 4294901760
    %v3536 = vsub.f32 %v3106, %v3535
    %3537 = vmatpush1.msra.mxu0 %v3536
    %3538 = vmatprep.subr.mxu0 0.0
    %v3539 = vand.u32 %v3105, 4294901760
    %v3540 = vsub.f32 %v3105, %v3539
    %3541 = vmatpush1.msra.mxu0 %v3540
    %3542 = vmatprep.subr.mxu0 0.0
    %v3543 = vand.u32 %v3104, 4294901760
    %v3544 = vsub.f32 %v3104, %v3543
    %3545 = vmatpush1.msra.mxu0 %v3544
    %3546 = vmatprep.subr.mxu0 0.0
    %v3547 = vand.u32 %v3103, 4294901760
    %v3548 = vsub.f32 %v3103, %v3547
    %3549 = vmatpush1.msra.mxu0 %v3548
    %3550 = vmatprep.subr.mxu0 0.0
    %v3551 = vand.u32 %v3134, 4294901760
    %v3552 = vsub.f32 %v3134, %v3551
    %3553 = vmatpush2.msra.mxu0 %v3552
    %3554 = vmatprep.subr.mxu0 0.0
    %v3555 = vand.u32 %v3133, 4294901760
    %v3556 = vsub.f32 %v3133, %v3555
    %3557 = vmatpush2.msra.mxu0 %v3556
    %3558 = vmatprep.subr.mxu0 0.0
    %v3559 = vand.u32 %v3132, 4294901760
    %v3560 = vsub.f32 %v3132, %v3559
    %3561 = vmatpush2.msra.mxu0 %v3560
    %3562 = vmatprep.subr.mxu0 0.0
    %v3563 = vand.u32 %v3131, 4294901760
    %v3564 = vsub.f32 %v3131, %v3563
    %3565 = vmatpush2.msra.mxu0 %v3564
    %3566 = vmatprep.subr.mxu0 0.0
    %v3567 = vand.u32 %v3130, 4294901760
    %v3568 = vsub.f32 %v3130, %v3567
    %3569 = vmatpush2.msra.mxu0 %v3568
    %3570 = vmatprep.subr.mxu0 0.0
    %v3571 = vand.u32 %v3129, 4294901760
    %v3572 = vsub.f32 %v3129, %v3571
    %3573 = vmatpush2.msra.mxu0 %v3572
    %3574 = vmatprep.subr.mxu0 0.0
    %v3575 = vand.u32 %v3128, 4294901760
    %v3576 = vsub.f32 %v3128, %v3575
    %3577 = vmatpush2.msra.mxu0 %v3576
    %3578 = vmatprep.subr.mxu0 0.0
    %v3579 = vand.u32 %v3127, 4294901760
    %v3580 = vsub.f32 %v3127, %v3579
    %3581 = vmatpush2.msra.mxu0 %v3580
    %3582 = vmatprep.subr.mxu0 0.0
    %v3583 = vand.u32 %v3126, 4294901760
    %v3584 = vsub.f32 %v3126, %v3583
    %3585 = vmatpush2.msra.mxu0 %v3584
    %3586 = vmatprep.subr.mxu0 0.0
    %v3587 = vand.u32 %v3125, 4294901760
    %v3588 = vsub.f32 %v3125, %v3587
    %3589 = vmatpush2.msra.mxu0 %v3588
    %3590 = vmatprep.subr.mxu0 0.0
    %v3591 = vand.u32 %v3124, 4294901760
    %v3592 = vsub.f32 %v3124, %v3591
    %3593 = vmatpush2.msra.mxu0 %v3592
    %3594 = vmatprep.subr.mxu0 0.0
    %v3595 = vand.u32 %v3123, 4294901760
    %v3596 = vsub.f32 %v3123, %v3595
    %3597 = vmatpush2.msra.mxu0 %v3596
    %3598 = vmatprep.subr.mxu0 0.0
    %v3599 = vand.u32 %v3122, 4294901760
    %v3600 = vsub.f32 %v3122, %v3599
    %3601 = vmatpush2.msra.mxu0 %v3600
    %3602 = vmatprep.subr.mxu0 0.0
    %v3603 = vand.u32 %v3121, 4294901760
    %v3604 = vsub.f32 %v3121, %v3603
    %3605 = vmatpush2.msra.mxu0 %v3604
    %3606 = vmatprep.subr.mxu0 0.0
    %v3607 = vand.u32 %v3120, 4294901760
    %v3608 = vsub.f32 %v3120, %v3607
    %3609 = vmatpush2.msra.mxu0 %v3608
    %3610 = vmatprep.subr.mxu0 0.0
    %v3611 = vand.u32 %v3119, 4294901760
    %v3612 = vsub.f32 %v3119, %v3611
    %3613 = vmatpush2.msra.mxu0 %v3612
    %v3614 = vand.u32 %v3099, 4294901760
    %v3615 = vsub.f32 %v3099, %v3614
    %3616 = vmatprep.mubr.f32.mxu0 %v3615
    %v3617 = vand.u32 %v3097, 4294901760
    %v3618 = vsub.f32 %v3097, %v3617
    %3619 = vmatmul.mubr.f32.gmra.mxu0 %v3618
    %v3620 = vpop.f32.mrf.mxu0
    %v3621 = vadd.f32 %v3483, %v3620
    %v3622 = vpop.f32.mrf.mxu0
    %3623 = vdwg.mxu0
    %3624 = vmatprep.subr.mxu0 0.0
    %v3625 = vand.u32 %v3118, 4294901760
    %3626 = vmatpush1.msra.mxu0 %v3625
    %3627 = vmatprep.subr.mxu0 0.0
    %v3628 = vand.u32 %v3117, 4294901760
    %3629 = vmatpush1.msra.mxu0 %v3628
    %3630 = vmatprep.subr.mxu0 0.0
    %v3631 = vand.u32 %v3116, 4294901760
    %3632 = vmatpush1.msra.mxu0 %v3631
    %3633 = vmatprep.subr.mxu0 0.0
    %v3634 = vand.u32 %v3115, 4294901760
    %3635 = vmatpush1.msra.mxu0 %v3634
    %3636 = vmatprep.subr.mxu0 0.0
    %v3637 = vand.u32 %v3114, 4294901760
    %3638 = vmatpush1.msra.mxu0 %v3637
    %3639 = vmatprep.subr.mxu0 0.0
    %v3640 = vand.u32 %v3113, 4294901760
    %3641 = vmatpush1.msra.mxu0 %v3640
    %3642 = vmatprep.subr.mxu0 0.0
    %v3643 = vand.u32 %v3112, 4294901760
    %3644 = vmatpush1.msra.mxu0 %v3643
    %3645 = vmatprep.subr.mxu0 0.0
    %v3646 = vand.u32 %v3111, 4294901760
    %3647 = vmatpush1.msra.mxu0 %v3646
    %3648 = vmatprep.subr.mxu0 0.0
    %v3649 = vand.u32 %v3110, 4294901760
    %3650 = vmatpush1.msra.mxu0 %v3649
    %3651 = vmatprep.subr.mxu0 0.0
    %v3652 = vand.u32 %v3109, 4294901760
    %3653 = vmatpush1.msra.mxu0 %v3652
    %3654 = vmatprep.subr.mxu0 0.0
    %v3655 = vand.u32 %v3108, 4294901760
    %3656 = vmatpush1.msra.mxu0 %v3655
    %3657 = vmatprep.subr.mxu0 0.0
    %v3658 = vand.u32 %v3107, 4294901760
    %3659 = vmatpush1.msra.mxu0 %v3658
    %3660 = vmatprep.subr.mxu0 0.0
    %v3661 = vand.u32 %v3106, 4294901760
    %3662 = vmatpush1.msra.mxu0 %v3661
    %3663 = vmatprep.subr.mxu0 0.0
    %v3664 = vand.u32 %v3105, 4294901760
    %3665 = vmatpush1.msra.mxu0 %v3664
    %3666 = vmatprep.subr.mxu0 0.0
    %v3667 = vand.u32 %v3104, 4294901760
    %3668 = vmatpush1.msra.mxu0 %v3667
    %3669 = vmatprep.subr.mxu0 0.0
    %v3670 = vand.u32 %v3103, 4294901760
    %3671 = vmatpush1.msra.mxu0 %v3670
    %3672 = vmatprep.subr.mxu0 0.0
    %v3673 = vand.u32 %v3134, 4294901760
    %3674 = vmatpush2.msra.mxu0 %v3673
    %3675 = vmatprep.subr.mxu0 0.0
    %v3676 = vand.u32 %v3133, 4294901760
    %3677 = vmatpush2.msra.mxu0 %v3676
    %3678 = vmatprep.subr.mxu0 0.0
    %v3679 = vand.u32 %v3132, 4294901760
    %3680 = vmatpush2.msra.mxu0 %v3679
    %3681 = vmatprep.subr.mxu0 0.0
    %v3682 = vand.u32 %v3131, 4294901760
    %3683 = vmatpush2.msra.mxu0 %v3682
    %3684 = vmatprep.subr.mxu0 0.0
    %v3685 = vand.u32 %v3130, 4294901760
    %3686 = vmatpush2.msra.mxu0 %v3685
    %3687 = vmatprep.subr.mxu0 0.0
    %v3688 = vand.u32 %v3129, 4294901760
    %3689 = vmatpush2.msra.mxu0 %v3688
    %3690 = vmatprep.subr.mxu0 0.0
    %v3691 = vand.u32 %v3128, 4294901760
    %3692 = vmatpush2.msra.mxu0 %v3691
    %3693 = vmatprep.subr.mxu0 0.0
    %v3694 = vand.u32 %v3127, 4294901760
    %3695 = vmatpush2.msra.mxu0 %v3694
    %3696 = vmatprep.subr.mxu0 0.0
    %v3697 = vand.u32 %v3126, 4294901760
    %3698 = vmatpush2.msra.mxu0 %v3697
    %3699 = vmatprep.subr.mxu0 0.0
    %v3700 = vand.u32 %v3125, 4294901760
    %3701 = vmatpush2.msra.mxu0 %v3700
    %3702 = vmatprep.subr.mxu0 0.0
    %v3703 = vand.u32 %v3124, 4294901760
    %3704 = vmatpush2.msra.mxu0 %v3703
    %3705 = vmatprep.subr.mxu0 0.0
    %v3706 = vand.u32 %v3123, 4294901760
    %3707 = vmatpush2.msra.mxu0 %v3706
    %3708 = vmatprep.subr.mxu0 0.0
    %v3709 = vand.u32 %v3122, 4294901760
    %3710 = vmatpush2.msra.mxu0 %v3709
    %3711 = vmatprep.subr.mxu0 0.0
    %v3712 = vand.u32 %v3121, 4294901760
    %3713 = vmatpush2.msra.mxu0 %v3712
    %3714 = vmatprep.subr.mxu0 0.0
    %v3715 = vand.u32 %v3120, 4294901760
    %3716 = vmatpush2.msra.mxu0 %v3715
    %3717 = vmatprep.subr.mxu0 0.0
    %v3718 = vand.u32 %v3119, 4294901760
    %3719 = vmatpush2.msra.mxu0 %v3718
    %v3720 = vand.u32 %v3099, 4294901760
    %v3721 = vsub.f32 %v3099, %v3720
    %v3722 = vand.u32 %v3721, 4294901760
    %3723 = vmatprep.mubr.f32.mxu0 %v3722
    %v3724 = vand.u32 %v3097, 4294901760
    %v3725 = vsub.f32 %v3097, %v3724
    %v3726 = vand.u32 %v3725, 4294901760
    %3727 = vmatmul.mubr.f32.gmra.mxu0 %v3726
    %v3728 = vpop.f32.mrf.mxu0
    %v3729 = vadd.f32 %v3621, %v3728
    %v3730 = vpop.f32.mrf.mxu0
    %3731 = vdwg.mxu0
    %3732 = vmatprep.subr.mxu0 0.0
    %v3733 = vand.u32 %v3118, 4294901760
    %v3734 = vsub.f32 %v3118, %v3733
    %v3735 = vand.u32 %v3734, 4294901760
    %3736 = vmatpush1.msra.mxu0 %v3735
    %3737 = vmatprep.subr.mxu0 0.0
    %v3738 = vand.u32 %v3117, 4294901760
    %v3739 = vsub.f32 %v3117, %v3738
    %v3740 = vand.u32 %v3739, 4294901760
    %3741 = vmatpush1.msra.mxu0 %v3740
    %3742 = vmatprep.subr.mxu0 0.0
    %v3743 = vand.u32 %v3116, 4294901760
    %v3744 = vsub.f32 %v3116, %v3743
    %v3745 = vand.u32 %v3744, 4294901760
    %3746 = vmatpush1.msra.mxu0 %v3745
    %3747 = vmatprep.subr.mxu0 0.0
    %v3748 = vand.u32 %v3115, 4294901760
    %v3749 = vsub.f32 %v3115, %v3748
    %v3750 = vand.u32 %v3749, 4294901760
    %3751 = vmatpush1.msra.mxu0 %v3750
    %3752 = vmatprep.subr.mxu0 0.0
    %v3753 = vand.u32 %v3114, 4294901760
    %v3754 = vsub.f32 %v3114, %v3753
    %v3755 = vand.u32 %v3754, 4294901760
    %3756 = vmatpush1.msra.mxu0 %v3755
    %3757 = vmatprep.subr.mxu0 0.0
    %v3758 = vand.u32 %v3113, 4294901760
    %v3759 = vsub.f32 %v3113, %v3758
    %v3760 = vand.u32 %v3759, 4294901760
    %3761 = vmatpush1.msra.mxu0 %v3760
    %3762 = vmatprep.subr.mxu0 0.0
    %v3763 = vand.u32 %v3112, 4294901760
    %v3764 = vsub.f32 %v3112, %v3763
    %v3765 = vand.u32 %v3764, 4294901760
    %3766 = vmatpush1.msra.mxu0 %v3765
    %3767 = vmatprep.subr.mxu0 0.0
    %v3768 = vand.u32 %v3111, 4294901760
    %v3769 = vsub.f32 %v3111, %v3768
    %v3770 = vand.u32 %v3769, 4294901760
    %3771 = vmatpush1.msra.mxu0 %v3770
    %3772 = vmatprep.subr.mxu0 0.0
    %v3773 = vand.u32 %v3110, 4294901760
    %v3774 = vsub.f32 %v3110, %v3773
    %v3775 = vand.u32 %v3774, 4294901760
    %3776 = vmatpush1.msra.mxu0 %v3775
    %3777 = vmatprep.subr.mxu0 0.0
    %v3778 = vand.u32 %v3109, 4294901760
    %v3779 = vsub.f32 %v3109, %v3778
    %v3780 = vand.u32 %v3779, 4294901760
    %3781 = vmatpush1.msra.mxu0 %v3780
    %3782 = vmatprep.subr.mxu0 0.0
    %v3783 = vand.u32 %v3108, 4294901760
    %v3784 = vsub.f32 %v3108, %v3783
    %v3785 = vand.u32 %v3784, 4294901760
    %3786 = vmatpush1.msra.mxu0 %v3785
    %3787 = vmatprep.subr.mxu0 0.0
    %v3788 = vand.u32 %v3107, 4294901760
    %v3789 = vsub.f32 %v3107, %v3788
    %v3790 = vand.u32 %v3789, 4294901760
    %3791 = vmatpush1.msra.mxu0 %v3790
    %3792 = vmatprep.subr.mxu0 0.0
    %v3793 = vand.u32 %v3106, 4294901760
    %v3794 = vsub.f32 %v3106, %v3793
    %v3795 = vand.u32 %v3794, 4294901760
    %3796 = vmatpush1.msra.mxu0 %v3795
    %3797 = vmatprep.subr.mxu0 0.0
    %v3798 = vand.u32 %v3105, 4294901760
    %v3799 = vsub.f32 %v3105, %v3798
    %v3800 = vand.u32 %v3799, 4294901760
    %3801 = vmatpush1.msra.mxu0 %v3800
    %3802 = vmatprep.subr.mxu0 0.0
    %v3803 = vand.u32 %v3104, 4294901760
    %v3804 = vsub.f32 %v3104, %v3803
    %v3805 = vand.u32 %v3804, 4294901760
    %3806 = vmatpush1.msra.mxu0 %v3805
    %3807 = vmatprep.subr.mxu0 0.0
    %v3808 = vand.u32 %v3103, 4294901760
    %v3809 = vsub.f32 %v3103, %v3808
    %v3810 = vand.u32 %v3809, 4294901760
    %3811 = vmatpush1.msra.mxu0 %v3810
    %3812 = vmatprep.subr.mxu0 0.0
    %v3813 = vand.u32 %v3134, 4294901760
    %v3814 = vsub.f32 %v3134, %v3813
    %v3815 = vand.u32 %v3814, 4294901760
    %3816 = vmatpush2.msra.mxu0 %v3815
    %3817 = vmatprep.subr.mxu0 0.0
    %v3818 = vand.u32 %v3133, 4294901760
    %v3819 = vsub.f32 %v3133, %v3818
    %v3820 = vand.u32 %v3819, 4294901760
    %3821 = vmatpush2.msra.mxu0 %v3820
    %3822 = vmatprep.subr.mxu0 0.0
    %v3823 = vand.u32 %v3132, 4294901760
    %v3824 = vsub.f32 %v3132, %v3823
    %v3825 = vand.u32 %v3824, 4294901760
    %3826 = vmatpush2.msra.mxu0 %v3825
    %3827 = vmatprep.subr.mxu0 0.0
    %v3828 = vand.u32 %v3131, 4294901760
    %v3829 = vsub.f32 %v3131, %v3828
    %v3830 = vand.u32 %v3829, 4294901760
    %3831 = vmatpush2.msra.mxu0 %v3830
    %3832 = vmatprep.subr.mxu0 0.0
    %v3833 = vand.u32 %v3130, 4294901760
    %v3834 = vsub.f32 %v3130, %v3833
    %v3835 = vand.u32 %v3834, 4294901760
    %3836 = vmatpush2.msra.mxu0 %v3835
    %3837 = vmatprep.subr.mxu0 0.0
    %v3838 = vand.u32 %v3129, 4294901760
    %v3839 = vsub.f32 %v3129, %v3838
    %v3840 = vand.u32 %v3839, 4294901760
    %3841 = vmatpush2.msra.mxu0 %v3840
    %3842 = vmatprep.subr.mxu0 0.0
    %v3843 = vand.u32 %v3128, 4294901760
    %v3844 = vsub.f32 %v3128, %v3843
    %v3845 = vand.u32 %v3844, 4294901760
    %3846 = vmatpush2.msra.mxu0 %v3845
    %3847 = vmatprep.subr.mxu0 0.0
    %v3848 = vand.u32 %v3127, 4294901760
    %v3849 = vsub.f32 %v3127, %v3848
    %v3850 = vand.u32 %v3849, 4294901760
    %3851 = vmatpush2.msra.mxu0 %v3850
    %3852 = vmatprep.subr.mxu0 0.0
    %v3853 = vand.u32 %v3126, 4294901760
    %v3854 = vsub.f32 %v3126, %v3853
    %v3855 = vand.u32 %v3854, 4294901760
    %3856 = vmatpush2.msra.mxu0 %v3855
    %3857 = vmatprep.subr.mxu0 0.0
    %v3858 = vand.u32 %v3125, 4294901760
    %v3859 = vsub.f32 %v3125, %v3858
    %v3860 = vand.u32 %v3859, 4294901760
    %3861 = vmatpush2.msra.mxu0 %v3860
    %3862 = vmatprep.subr.mxu0 0.0
    %v3863 = vand.u32 %v3124, 4294901760
    %v3864 = vsub.f32 %v3124, %v3863
    %v3865 = vand.u32 %v3864, 4294901760
    %3866 = vmatpush2.msra.mxu0 %v3865
    %3867 = vmatprep.subr.mxu0 0.0
    %v3868 = vand.u32 %v3123, 4294901760
    %v3869 = vsub.f32 %v3123, %v3868
    %v3870 = vand.u32 %v3869, 4294901760
    %3871 = vmatpush2.msra.mxu0 %v3870
    %3872 = vmatprep.subr.mxu0 0.0
    %v3873 = vand.u32 %v3122, 4294901760
    %v3874 = vsub.f32 %v3122, %v3873
    %v3875 = vand.u32 %v3874, 4294901760
    %3876 = vmatpush2.msra.mxu0 %v3875
    %3877 = vmatprep.subr.mxu0 0.0
    %v3878 = vand.u32 %v3121, 4294901760
    %v3879 = vsub.f32 %v3121, %v3878
    %v3880 = vand.u32 %v3879, 4294901760
    %3881 = vmatpush2.msra.mxu0 %v3880
    %3882 = vmatprep.subr.mxu0 0.0
    %v3883 = vand.u32 %v3120, 4294901760
    %v3884 = vsub.f32 %v3120, %v3883
    %v3885 = vand.u32 %v3884, 4294901760
    %3886 = vmatpush2.msra.mxu0 %v3885
    %3887 = vmatprep.subr.mxu0 0.0
    %v3888 = vand.u32 %v3119, 4294901760
    %v3889 = vsub.f32 %v3119, %v3888
    %v3890 = vand.u32 %v3889, 4294901760
    %3891 = vmatpush2.msra.mxu0 %v3890
    %v3892 = vand.u32 %v3099, 4294901760
    %3893 = vmatprep.mubr.f32.mxu0 %v3892
    %v3894 = vand.u32 %v3097, 4294901760
    %3895 = vmatmul.mubr.f32.gmra.mxu0 %v3894
    %v3896 = vpop.f32.mrf.mxu0
    %v3897 = vadd.f32 %v3729, %v3896
    %v3898 = vpop.f32.mrf.mxu0
    %3899 = vdwg.mxu0
    %3900 = vmatprep.subr.mxu0 0.0
    %v3901 = vand.u32 %v3118, 4294901760
    %3902 = vmatpush1.msra.mxu0 %v3901
    %3903 = vmatprep.subr.mxu0 0.0
    %v3904 = vand.u32 %v3117, 4294901760
    %3905 = vmatpush1.msra.mxu0 %v3904
    %3906 = vmatprep.subr.mxu0 0.0
    %v3907 = vand.u32 %v3116, 4294901760
    %3908 = vmatpush1.msra.mxu0 %v3907
    %3909 = vmatprep.subr.mxu0 0.0
    %v3910 = vand.u32 %v3115, 4294901760
    %3911 = vmatpush1.msra.mxu0 %v3910
    %3912 = vmatprep.subr.mxu0 0.0
    %v3913 = vand.u32 %v3114, 4294901760
    %3914 = vmatpush1.msra.mxu0 %v3913
    %3915 = vmatprep.subr.mxu0 0.0
    %v3916 = vand.u32 %v3113, 4294901760
    %3917 = vmatpush1.msra.mxu0 %v3916
    %3918 = vmatprep.subr.mxu0 0.0
    %v3919 = vand.u32 %v3112, 4294901760
    %3920 = vmatpush1.msra.mxu0 %v3919
    %3921 = vmatprep.subr.mxu0 0.0
    %v3922 = vand.u32 %v3111, 4294901760
    %3923 = vmatpush1.msra.mxu0 %v3922
    %3924 = vmatprep.subr.mxu0 0.0
    %v3925 = vand.u32 %v3110, 4294901760
    %3926 = vmatpush1.msra.mxu0 %v3925
    %3927 = vmatprep.subr.mxu0 0.0
    %v3928 = vand.u32 %v3109, 4294901760
    %3929 = vmatpush1.msra.mxu0 %v3928
    %3930 = vmatprep.subr.mxu0 0.0
    %v3931 = vand.u32 %v3108, 4294901760
    %3932 = vmatpush1.msra.mxu0 %v3931
    %3933 = vmatprep.subr.mxu0 0.0
    %v3934 = vand.u32 %v3107, 4294901760
    %3935 = vmatpush1.msra.mxu0 %v3934
    %3936 = vmatprep.subr.mxu0 0.0
    %v3937 = vand.u32 %v3106, 4294901760
    %3938 = vmatpush1.msra.mxu0 %v3937
    %3939 = vmatprep.subr.mxu0 0.0
    %v3940 = vand.u32 %v3105, 4294901760
    %3941 = vmatpush1.msra.mxu0 %v3940
    %3942 = vmatprep.subr.mxu0 0.0
    %v3943 = vand.u32 %v3104, 4294901760
    %3944 = vmatpush1.msra.mxu0 %v3943
    %3945 = vmatprep.subr.mxu0 0.0
    %v3946 = vand.u32 %v3103, 4294901760
    %3947 = vmatpush1.msra.mxu0 %v3946
    %3948 = vmatprep.subr.mxu0 0.0
    %v3949 = vand.u32 %v3134, 4294901760
    %3950 = vmatpush2.msra.mxu0 %v3949
    %3951 = vmatprep.subr.mxu0 0.0
    %v3952 = vand.u32 %v3133, 4294901760
    %3953 = vmatpush2.msra.mxu0 %v3952
    %3954 = vmatprep.subr.mxu0 0.0
    %v3955 = vand.u32 %v3132, 4294901760
    %3956 = vmatpush2.msra.mxu0 %v3955
    %3957 = vmatprep.subr.mxu0 0.0
    %v3958 = vand.u32 %v3131, 4294901760
    %3959 = vmatpush2.msra.mxu0 %v3958
    %3960 = vmatprep.subr.mxu0 0.0
    %v3961 = vand.u32 %v3130, 4294901760
    %3962 = vmatpush2.msra.mxu0 %v3961
    %3963 = vmatprep.subr.mxu0 0.0
    %v3964 = vand.u32 %v3129, 4294901760
    %3965 = vmatpush2.msra.mxu0 %v3964
    %3966 = vmatprep.subr.mxu0 0.0
    %v3967 = vand.u32 %v3128, 4294901760
    %3968 = vmatpush2.msra.mxu0 %v3967
    %3969 = vmatprep.subr.mxu0 0.0
    %v3970 = vand.u32 %v3127, 4294901760
    %3971 = vmatpush2.msra.mxu0 %v3970
    %3972 = vmatprep.subr.mxu0 0.0
    %v3973 = vand.u32 %v3126, 4294901760
    %3974 = vmatpush2.msra.mxu0 %v3973
    %3975 = vmatprep.subr.mxu0 0.0
    %v3976 = vand.u32 %v3125, 4294901760
    %3977 = vmatpush2.msra.mxu0 %v3976
    %3978 = vmatprep.subr.mxu0 0.0
    %v3979 = vand.u32 %v3124, 4294901760
    %3980 = vmatpush2.msra.mxu0 %v3979
    %3981 = vmatprep.subr.mxu0 0.0
    %v3982 = vand.u32 %v3123, 4294901760
    %3983 = vmatpush2.msra.mxu0 %v3982
    %3984 = vmatprep.subr.mxu0 0.0
    %v3985 = vand.u32 %v3122, 4294901760
    %3986 = vmatpush2.msra.mxu0 %v3985
    %3987 = vmatprep.subr.mxu0 0.0
    %v3988 = vand.u32 %v3121, 4294901760
    %3989 = vmatpush2.msra.mxu0 %v3988
    %3990 = vmatprep.subr.mxu0 0.0
    %v3991 = vand.u32 %v3120, 4294901760
    %3992 = vmatpush2.msra.mxu0 %v3991
    %3993 = vmatprep.subr.mxu0 0.0
    %v3994 = vand.u32 %v3119, 4294901760
    %3995 = vmatpush2.msra.mxu0 %v3994
    %v3996 = vand.u32 %v3099, 4294901760
    %3997 = vmatprep.mubr.f32.mxu0 %v3996
    %v3998 = vand.u32 %v3097, 4294901760
    %3999 = vmatmul.mubr.f32.gmra.mxu0 %v3998
    %v4000 = vpop.f32.mrf.mxu0
    %v4001 = vadd.f32 %v3897, %v4000
    %v4002 = vpop.f32.mrf.mxu0
    %4003 = vdwg.mxu0
    %4004 = vst [vmem:[#allocation12] sm:$0xff] %v4001
    // Predicated region
    $region66: #{tpu_custom_call.1} parent=1 // pred_check
      _
    $region67: #{tpu_custom_call.1} parent=1 // pred_check_branch
      %4006 = sbr.rel (0) target = $region69
    $region68: #{tpu_custom_call.1} parent=1 // pred_region
      %s4008 = ssub.s32 128, 128
      %4009 = vsyncadd [#allocation4], %s4008
      %s4011 = sshll.u32 [#allocation11], 4
      %s4012 = int_to_ptr.vmem [resolvable:$true] %s4011
      %4014 = dma.vmem_to_hbm [thread:$0]  %s4012, 128, %s11, [#allocation4]
    $region69: #{tpu_custom_call.1} parent=1 // pred_fallthru
      _
    // Predicated region
    $region70: #{tpu_custom_call.1} parent=1 // pred_check
      _
    $region71: #{tpu_custom_call.1} parent=1 // pred_check_branch
      %4016 = sbr.rel (0) target = $region73
    $region72: #{tpu_custom_call.1} parent=1 // pred_region
      %s4018 = ssub.s32 128, 128
      %4019 = vsyncadd [#allocation13], %s4018
      %s4021 = sshll.u32 [#allocation12], 4
      %s4022 = int_to_ptr.vmem [resolvable:$true] %s4021
      %4024 = dma.vmem_to_hbm [thread:$0]  %s4022, 128, %s12, [#allocation13]
    $region73: #{tpu_custom_call.1} parent=1 // pred_fallthru
      _
    // Predicated region
    $region74: #{tpu_custom_call.1} parent=1 // pred_check
      _
    $region75: #{tpu_custom_call.1} parent=1 // pred_check_branch
      %4026 = sbr.rel (0) target = $region77
    $region76: #{tpu_custom_call.1} parent=1 // pred_region
      %s4028 = ssub.s32 1024, 1024
      %4029 = vsyncadd [#allocation13], %s4028
      %s4031 = sshll.u32 [#allocation14], 4
      %s4032 = int_to_ptr.vmem [resolvable:$true] %s4031
      %4034 = dma.vmem_to_hbm [thread:$0]  %s4032, 1024, %s13, [#allocation13]
    $region77: #{tpu_custom_call.1} parent=1 // pred_fallthru
      _
    // Predicated region
    $region78: #{tpu_custom_call.1} parent=1 // pred_check
      _
    $region79: #{tpu_custom_call.1} parent=1 // pred_check_branch
      %4036 = sbr.rel (0) target = $region81
    $region80: #{tpu_custom_call.1} parent=1 // pred_region
      %s4038 = ssub.s32 256, 256
      %4039 = vsyncadd [#allocation16], %s4038
      %s4041 = sshll.u32 [#allocation15], 4
      %s4042 = int_to_ptr.vmem [resolvable:$true] %s4041
      %4044 = dma.vmem_to_hbm [thread:$0]  %s4042, 256, %s14, [#allocation16]
    $region81: #{tpu_custom_call.1} parent=1 // pred_fallthru
      _
    // Predicated region
    $region82: #{tpu_custom_call.1} parent=1 // pred_check
      _
    $region83: #{tpu_custom_call.1} parent=1 // pred_check_branch
      %4046 = sbr.rel (0) target = $region85
    $region84: #{tpu_custom_call.1} parent=1 // pred_region
      %4047 = dma.done [#allocation4], 128
    $region85: #{tpu_custom_call.1} parent=1 // pred_fallthru
      _
    // Predicated region
    $region86: #{tpu_custom_call.1} parent=1 // pred_check
      _
    $region87: #{tpu_custom_call.1} parent=1 // pred_check_branch
      %4049 = sbr.rel (0) target = $region89
    $region88: #{tpu_custom_call.1} parent=1 // pred_region
      %4050 = dma.done [#allocation13], 128
    $region89: #{tpu_custom_call.1} parent=1 // pred_fallthru
      _
    // Predicated region
    $region90: #{tpu_custom_call.1} parent=1 // pred_check
      _
    $region91: #{tpu_custom_call.1} parent=1 // pred_check_branch
      %4052 = sbr.rel (0) target = $region93
    $region92: #{tpu_custom_call.1} parent=1 // pred_region
      %4053 = dma.done [#allocation13], 1024
    $region93: #{tpu_custom_call.1} parent=1 // pred_fallthru
      _
    // Predicated region
    $region94: #{tpu_custom_call.1} parent=1 // pred_check
      _
    $region95: #{tpu_custom_call.1} parent=1 // pred_check_branch
      %4055 = sbr.rel (0) target = $region97
    $region96: #{tpu_custom_call.1} parent=1 // pred_region
      %4056 = dma.done [#allocation16], 256
    $region97: #{tpu_custom_call.1} parent=1 // pred_fallthru
      _
    %4057 = vsyncpa [#allocation3], 1
    %4058 = vsyncpa [#allocation6], 1
    %4059 = vsyncpa [#allocation9], 1
    %4060 = vsyncpa [#allocation4], 1
    %4061 = vsyncpa [#allocation13], 1
    %4062 = vsyncpa [#allocation16], 1

</llo_original>
